<compile_context>
chip_gen: v5e
topology: v5e:2x2
jax: 0.10.0
libtpu: 0.0.40
codegen_flags: <defaults>
</compile_context>

<pallas_src>
import functools
import numpy as np
import jax
import jax.numpy as jnp
from jax.experimental import pallas as pl
from jax.experimental.pallas import tpu as pltpu


_VMEM_LIMIT = 32 * 1024 * 1024   # safe on every generation (v7x: 64 MiB/TC)


# ----------------------------------------------------------------------------
# Fused Pallas kernel: one image per grid step, everything stays in VMEM.
# ----------------------------------------------------------------------------
def _actor_critic_kernel(p1_ref, w1_ref, b1_ref,
                         s2_ref, w2_ref, b2_ref, p2_ref,
                         s3_ref, w3_ref, b3_ref, p3_ref,
                         wl1_ref, bl1_ref, wl2_ref, bl2_ref,
                         wl3_ref, bl3_ref, wv3_ref, bv3_ref,
                         means_ref, value_ref, *, n_actions):
    def mm(a, b):
        # bf16 x bf16 on the MXU, f32 accumulate.
        return jnp.dot(a.astype(jnp.bfloat16), b.astype(jnp.bfloat16),
                       preferred_element_type=jnp.float32)

    # --- conv1 (8x8, s4, p2) + ReLU; patch rows ordered (pool-tap, qy, qx) ---
    c1 = jnp.maximum(mm(p1_ref[...], w1_ref[...]) + b1_ref[...], 0.0)   # (400, 32)
    # --- maxpool1 2x2: the 4 taps are contiguous 100-row blocks --------------
    h = jnp.maximum(jnp.maximum(c1[0:100], c1[100:200]),
                    jnp.maximum(c1[200:300], c1[300:400]))              # (100, 32)

    # --- conv2 (4x4, s2, p1) + ReLU ------------------------------------------
    # im2col as a 0/1 selection matmul (zero rows == zero padding), then one
    # (25, 32) @ (32, 64) matmul per kernel tap, accumulated in f32.
    pat2 = mm(s2_ref[...], h)                                           # (400, 32)
    acc2 = mm(pat2[0:25], w2_ref[0:32, :])
    for t in range(1, 16):
        acc2 = acc2 + mm(pat2[t * 25:(t + 1) * 25],
                         w2_ref[t * 32:(t + 1) * 32, :])
    c2 = jnp.maximum(acc2 + b2_ref[...], 0.0)                           # (25, 64)
    # --- maxpool2 2x2 ceil: 5x5 -> 4 taps of 3x3 (zero rows safe, c2 >= 0) ---
    tp2 = mm(p2_ref[...], c2)                                           # (36, 64)
    h = jnp.maximum(jnp.maximum(tp2[0:9], tp2[9:18]),
                    jnp.maximum(tp2[18:27], tp2[27:36]))                # (9, 64)

    # --- conv3 (3x3, s1, p1) + ReLU ------------------------------------------
    pat3 = mm(s3_ref[...], h)                                           # (81, 64)
    acc3 = mm(pat3[0:9], w3_ref[0:64, :])
    for t in range(1, 9):
        acc3 = acc3 + mm(pat3[t * 9:(t + 1) * 9],
                         w3_ref[t * 64:(t + 1) * 64, :])
    c3 = jnp.maximum(acc3 + b3_ref[...], 0.0)                           # (9, 64)
    # --- maxpool3 2x2 ceil: 3x3 -> 4 taps of 2x2 -----------------------------
    tp3 = mm(p3_ref[...], c3)                                           # (16, 64)
    pool3 = jnp.maximum(jnp.maximum(tp3[0:4], tp3[4:8]),
                        jnp.maximum(tp3[8:12], tp3[12:16]))             # (4, 64)

    # --- heads ----------------------------------------------------------------
    # The NCHW flatten index (c*4 + s) is folded into the row permutation of
    # wl1, so the 256-wide first layer is 4 partial (1,64)@(64,128) matmuls:
    # lanes [0:64] = model1[0] (actor), lanes [64:128] = fc1 (critic, no act).
    z1 = (mm(pool3[0:1], wl1_ref[0:64, :]) +
          mm(pool3[1:2], wl1_ref[64:128, :]) +
          mm(pool3[2:3], wl1_ref[128:192, :]) +
          mm(pool3[3:4], wl1_ref[192:256, :]) + bl1_ref[...])           # (1, 128)
    lane = jax.lax.broadcasted_iota(jnp.int32, (1, 128), 1)
    h1 = jnp.where(lane < 64, jnp.tanh(z1), z1)

    # blockdiag(model1[2], model2[0]); both halves use Tanh.
    h2 = jnp.tanh(mm(h1, wl2_ref[...]) + bl2_ref[...])                  # (1, 128)

    # blockdiag(model1[4], model2[2]); actor output has no activation.
    z3 = mm(h2, wl3_ref[...]) + bl3_ref[...]                            # (1, 128)
    means_ref[...] = z3[:, 0:n_actions]
    h3 = jnp.tanh(z3[:, 64:128])                                        # critic hidden
    # model2[4]: 64 -> 1 done on the VPU (f32 multiply + lane-sum).
    value_ref[...] = (jnp.sum(h3 * wv3_ref[...], axis=1, keepdims=True)
                      + bv3_ref[...])


def _run_fused(patches, kp, n_actions):
    """One pallas_call over grid=(batch,); all weights stay VMEM-resident."""
    n = patches.shape[0]
    weight_keys = ("w1", "b1", "s2", "w2", "b2", "p2",
                   "s3", "w3", "b3", "p3",
                   "wl1", "bl1", "wl2", "bl2", "wl3", "bl3", "wv3", "bv3")

    in_specs = [pl.BlockSpec((None, 400, 64), lambda i: (i, 0, 0))]
    in_specs += [pl.BlockSpec(kp[k].shape, lambda i: (0, 0)) for k in weight_keys]

    means, value = pl.pallas_call(
        functools.partial(_actor_critic_kernel, n_actions=n_actions),
        grid=(n,),
        in_specs=in_specs,
        out_specs=(pl.BlockSpec((None, 1, n_actions), lambda i: (i, 0, 0)),
                   pl.BlockSpec((None, 1, 1), lambda i: (i, 0, 0))),
        out_shape=(jax.ShapeDtypeStruct((n, 1, n_actions), jnp.float32),
                   jax.ShapeDtypeStruct((n, 1, 1), jnp.float32)),
        compiler_params=pltpu.CompilerParams(
            dimension_semantics=("parallel",),
            vmem_limit_bytes=_VMEM_LIMIT),
    )(patches, *[kp[k] for k in weight_keys])
    return means.reshape(n, n_actions), value.reshape(n, 1)


# ----------------------------------------------------------------------------
# XLA-side glue: conv1 im2col (cin=1) with pool-tap-major row ordering.
# ----------------------------------------------------------------------------
def _conv1_patches(x):
    """(N, 80, 80) -> (N, 400, 64) bf16 patches for conv1 (8x8, s4, p2).

    Rows per image are ordered (pool1 tap, qy, qx) so the kernel can do
    maxpool1 as a max over four contiguous 100-row blocks; columns are in
    (dh, dw) order matching the packed conv1 weight matrix.
    """
    # TODO(synk): move this im2col into the kernel (strided VMEM reads) too;
    # kept in XLA because cin=1 keeps it tiny (~51 KB/image bf16).
    n = x.shape[0]
    xp = jnp.pad(x, ((0, 0), (2, 2), (2, 2)))                  # (n, 84, 84)
    cells = xp.reshape(n, 21, 4, 21, 4)                        # 4x4 stride cells
    pieces = [cells[:, cy:cy + 20, :, cx:cx + 20, :]           # (n, 20, 4, 20, 4)
              for cy in (0, 1) for cx in (0, 1)]
    pat = jnp.stack(pieces, axis=1)                            # n,(cy,cx),oy,ry,ox,rx
    pat = pat.reshape(n, 2, 2, 10, 2, 4, 10, 2, 4)             # n,cy,cx,qy,ty,ry,qx,tx,rx
    pat = pat.transpose(0, 4, 7, 3, 6, 1, 5, 2, 8)             # n,ty,tx,qy,qx,cy,ry,cx,rx
    return pat.reshape(n, 400, 64).astype(jnp.bfloat16)


# ----------------------------------------------------------------------------
# Selection matrices (built once, in numpy).
# ----------------------------------------------------------------------------
def _conv_im2col_selection(hw, k, stride, pad):
    """0/1 matrix: (hw*hw, C) feature map -> (k*k*out*out, C) patch rows,
    rows ordered (tap, oy, ox); all-zero rows implement conv zero padding."""
    out = (hw + 2 * pad - k) // stride + 1
    sel = np.zeros((k * k * out * out, hw * hw), np.float32)
    for dh in range(k):
        for dw in range(k):
            for oy in range(out):
                for ox in range(out):
                    sy = stride * oy - pad + dh
                    sx = stride * ox - pad + dw
                    if 0 <= sy < hw and 0 <= sx < hw:
                        sel[(dh * k + dw) * out * out + oy * out + ox,
                            sy * hw + sx] = 1.0
    return sel


def _pool_selection(hw):
    """0/1 matrix gathering the 4 taps of MaxPool2d(2, 2, ceil_mode=True).
    Out-of-range taps are all-zero rows (safe: pool inputs are post-ReLU)."""
    out = -(-hw // 2)
    sel = np.zeros((4 * out * out, hw * hw), np.float32)
    for dy in range(2):
        for dx in range(2):
            for oy in range(out):
                for ox in range(out):
                    sy, sx = 2 * oy + dy, 2 * ox + dx
                    if sy < hw and sx < hw:
                        sel[(dy * 2 + dx) * out * out + oy * out + ox,
                            sy * hw + sx] = 1.0
    return sel


# ----------------------------------------------------------------------------
# Deterministic synthetic parameters (PyTorch layouts) and one-time packing.
# ----------------------------------------------------------------------------
def init_actor_critic_params(key, n_actions=4):
    ks = iter(jax.random.split(key, 24))

    def conv(cout, cin, kh, kw):
        w = jax.random.normal(next(ks), (cout, cin, kh, kw), jnp.float32)
        w = w / np.sqrt(cin * kh * kw)
        b = 0.01 * jax.random.normal(next(ks), (cout,), jnp.float32)
        return w, b

    def linear(dout, din):
        w = jax.random.normal(next(ks), (dout, din), jnp.float32) / np.sqrt(din)
        b = 0.01 * jax.random.normal(next(ks), (dout,), jnp.float32)
        return w, b

    p = {}
    p["conv1_w"], p["conv1_b"] = conv(32, 1, 8, 8)      # Conv2d(1, 32, 8, 4, p=2)
    p["conv2_w"], p["conv2_b"] = conv(64, 32, 4, 4)     # Conv2d(32, 64, 4, 2, p=1)
    p["conv3_w"], p["conv3_b"] = conv(64, 64, 3, 3)     # Conv2d(64, 64, 3, 1, p=1)
    p["m1_l0_w"], p["m1_l0_b"] = linear(64, 256)        # model1[0]
    p["m1_l2_w"], p["m1_l2_b"] = linear(64, 64)         # model1[2]
    p["m1_l4_w"], p["m1_l4_b"] = linear(n_actions, 64)  # model1[4]
    p["fc1_w"], p["fc1_b"] = linear(64, 256)            # fc1 (no activation)
    p["m2_l0_w"], p["m2_l0_b"] = linear(64, 64)         # model2[0]
    p["m2_l2_w"], p["m2_l2_b"] = linear(64, 64)         # model2[2]
    p["m2_l4_w"], p["m2_l4_b"] = linear(1, 64)          # model2[4]
    p["logstds"] = jnp.full((n_actions,), 0.1, jnp.float32)
    return p


def pack_params(p):
    """One-time conversion to the bf16, kernel-resident operand set."""
    bf16, f32 = jnp.bfloat16, jnp.float32
    n_actions = p["m1_l4_w"].shape[0]
    assert n_actions <= 64

    def conv_mat(w):                      # (cout,cin,kh,kw) -> (kh*kw*cin, cout)
        cout, cin, kh, kw = w.shape
        return jnp.transpose(w, (2, 3, 1, 0)).reshape(kh * kw * cin, cout).astype(bf16)

    def row(b):
        return jnp.asarray(b, f32).reshape(1, -1)

    def perm_flatten(w_t):                # NCHW flatten index c*4+s -> row s*64+c
        out = w_t.shape[1]
        return w_t.reshape(64, 4, out).transpose(1, 0, 2).reshape(256, out)

    def blockdiag(a, b):
        za = jnp.zeros((a.shape[0], b.shape[1]), f32)
        zb = jnp.zeros((b.shape[0], a.shape[1]), f32)
        return jnp.concatenate([jnp.concatenate([a, za], axis=1),
                                jnp.concatenate([zb, b], axis=1)], axis=0)

    wl1 = perm_flatten(jnp.concatenate([p["m1_l0_w"].T, p["fc1_w"].T], axis=1))
    bl1 = jnp.concatenate([p["m1_l0_b"], p["fc1_b"]])

    wl2 = blockdiag(p["m1_l2_w"].T, p["m2_l0_w"].T)
    bl2 = jnp.concatenate([p["m1_l2_b"], p["m2_l0_b"]])

    w3a = jnp.zeros((64, 64), f32).at[:, :n_actions].set(p["m1_l4_w"].T)
    wl3 = blockdiag(w3a, p["m2_l2_w"].T)
    bl3 = jnp.concatenate(
        [jnp.zeros((64,), f32).at[:n_actions].set(p["m1_l4_b"]), p["m2_l2_b"]])

    return {
        "w1": conv_mat(p["conv1_w"]), "b1": row(p["conv1_b"]),
        "w2": conv_mat(p["conv2_w"]), "b2": row(p["conv2_b"]),
        "w3": conv_mat(p["conv3_w"]), "b3": row(p["conv3_b"]),
        "s2": jnp.asarray(_conv_im2col_selection(10, 4, 2, 1), bf16),  # (400,100)
        "p2": jnp.asarray(_pool_selection(5), bf16),                   # (36, 25)
        "s3": jnp.asarray(_conv_im2col_selection(3, 3, 1, 1), bf16),   # (81, 9)
        "p3": jnp.asarray(_pool_selection(3), bf16),                   # (16, 9)
        "wl1": wl1.astype(bf16), "bl1": row(bl1),
        "wl2": wl2.astype(bf16), "bl2": row(bl2),
        "wl3": wl3.astype(bf16), "bl3": row(bl3),
        "wv3": jnp.asarray(p["m2_l4_w"], f32),           # (1, 64), VPU path
        "bv3": row(p["m2_l4_b"]),
        # stds = clamp(exp(logstds), 1e-3, 50): batch independent -> hoisted.
        "stds": jnp.clip(jnp.exp(p["logstds"]), 0.001, 50.0).astype(f32),
    }


# ----------------------------------------------------------------------------
# Forward pass (mirrors ActorCritic.forward).
# ----------------------------------------------------------------------------
def actor_critic_forward(kp, X):
    """Returns (means, stds, value); (means, stds) parameterize the Normal."""
    x = X.reshape(-1, 1, 80, 80).astype(jnp.float32)      # X.view(-1, 1, 80, 80)
    n_actions = kp["stds"].shape[0]
    patches = _conv1_patches(x[:, 0])                     # (N, 400, 64) bf16
    means, value = _run_fused(patches, kp, n_actions)
    stds = jnp.broadcast_to(kp["stds"], means.shape)
    return means, stds, value


if __name__ == "__main__":
    key = jax.random.PRNGKey(0)
    k_params, k_x = jax.random.split(key)
    n_actions = 4

    params = init_actor_critic_params(k_params, n_actions=n_actions)
    packed = pack_params(params)
    # smallest shape consistent with the module's hard-coded view(-1, 1, 80, 80)
    x = jax.random.normal(k_x, (2, 1, 80, 80), jnp.float32)

    fwd = jax.jit(actor_critic_forward)
    means, stds, value = jax.block_until_ready(fwd(packed, x))

    assert means.shape == (2, n_actions) and means.dtype == jnp.float32
    assert stds.shape == (2, n_actions) and value.shape == (2, 1)
    assert bool(jnp.all(jnp.isfinite(means)))
    assert bool(jnp.all(jnp.isfinite(value)))
    assert bool(jnp.all(stds > 0))
    print("KERNEL_OK")
</pallas_src>

<mosaic_0001>
module attributes {stable_mosaic.version = 11 : i64} {
  func.func @_actor_critic_kernel(%arg0: i32, %arg1: memref<1x400x64xbf16, #tpu.memory_space<vmem>>, %arg2: memref<64x32xbf16, #tpu.memory_space<vmem>>, %arg3: memref<1x32xf32, #tpu.memory_space<vmem>>, %arg4: memref<400x100xbf16, #tpu.memory_space<vmem>>, %arg5: memref<512x64xbf16, #tpu.memory_space<vmem>>, %arg6: memref<1x64xf32, #tpu.memory_space<vmem>>, %arg7: memref<36x25xbf16, #tpu.memory_space<vmem>>, %arg8: memref<81x9xbf16, #tpu.memory_space<vmem>>, %arg9: memref<576x64xbf16, #tpu.memory_space<vmem>>, %arg10: memref<1x64xf32, #tpu.memory_space<vmem>>, %arg11: memref<16x9xbf16, #tpu.memory_space<vmem>>, %arg12: memref<256x128xbf16, #tpu.memory_space<vmem>>, %arg13: memref<1x128xf32, #tpu.memory_space<vmem>>, %arg14: memref<128x128xbf16, #tpu.memory_space<vmem>>, %arg15: memref<1x128xf32, #tpu.memory_space<vmem>>, %arg16: memref<128x128xbf16, #tpu.memory_space<vmem>>, %arg17: memref<1x128xf32, #tpu.memory_space<vmem>>, %arg18: memref<1x64xf32, #tpu.memory_space<vmem>>, %arg19: memref<1x1xf32, #tpu.memory_space<vmem>>, %arg20: memref<1x1x4xf32, #tpu.memory_space<vmem>>, %arg21: memref<1x1x1xf32, #tpu.memory_space<vmem>>) attributes {dimension_semantics = [#tpu.dimension_semantics<parallel>], iteration_bounds = array<i64: 2>, scalar_prefetch = 0 : i64, scratch_operands = 0 : i64, tpu.core_type = #tpu.core_type<tc>, window_params = [{transform_indices = @transform_0, window_bounds = array<i64: 1, 400, 64>}, {pipeline_mode = #tpu.pipeline_mode<synchronous>, transform_indices = @transform_1, window_bounds = array<i64: 64, 32>}, {pipeline_mode = #tpu.pipeline_mode<synchronous>, transform_indices = @transform_2, window_bounds = array<i64: 1, 32>}, {pipeline_mode = #tpu.pipeline_mode<synchronous>, transform_indices = @transform_3, window_bounds = array<i64: 400, 100>}, {pipeline_mode = #tpu.pipeline_mode<synchronous>, transform_indices = @transform_4, window_bounds = array<i64: 512, 64>}, {pipeline_mode = #tpu.pipeline_mode<synchronous>, transform_indices = @transform_5, window_bounds = array<i64: 1, 64>}, {pipeline_mode = #tpu.pipeline_mode<synchronous>, transform_indices = @transform_6, window_bounds = array<i64: 36, 25>}, {pipeline_mode = #tpu.pipeline_mode<synchronous>, transform_indices = @transform_7, window_bounds = array<i64: 81, 9>}, {pipeline_mode = #tpu.pipeline_mode<synchronous>, transform_indices = @transform_8, window_bounds = array<i64: 576, 64>}, {pipeline_mode = #tpu.pipeline_mode<synchronous>, transform_indices = @transform_9, window_bounds = array<i64: 1, 64>}, {pipeline_mode = #tpu.pipeline_mode<synchronous>, transform_indices = @transform_10, window_bounds = array<i64: 16, 9>}, {pipeline_mode = #tpu.pipeline_mode<synchronous>, transform_indices = @transform_11, window_bounds = array<i64: 256, 128>}, {pipeline_mode = #tpu.pipeline_mode<synchronous>, transform_indices = @transform_12, window_bounds = array<i64: 1, 128>}, {pipeline_mode = #tpu.pipeline_mode<synchronous>, transform_indices = @transform_13, window_bounds = array<i64: 128, 128>}, {pipeline_mode = #tpu.pipeline_mode<synchronous>, transform_indices = @transform_14, window_bounds = array<i64: 1, 128>}, {pipeline_mode = #tpu.pipeline_mode<synchronous>, transform_indices = @transform_15, window_bounds = array<i64: 128, 128>}, {pipeline_mode = #tpu.pipeline_mode<synchronous>, transform_indices = @transform_16, window_bounds = array<i64: 1, 128>}, {pipeline_mode = #tpu.pipeline_mode<synchronous>, transform_indices = @transform_17, window_bounds = array<i64: 1, 64>}, {pipeline_mode = #tpu.pipeline_mode<synchronous>, transform_indices = @transform_18, window_bounds = array<i64: 1, 1>}, {transform_indices = @transform_19, window_bounds = array<i64: 1, 1, 4>}, {transform_indices = @transform_20, window_bounds = array<i64: 1, 1, 1>}]} {
    %c0 = arith.constant 0 : index
    %c0_0 = arith.constant 0 : index
    %c0_1 = arith.constant 0 : index
    %0 = vector.load %arg1[%c0, %c0_0, %c0_1] : memref<1x400x64xbf16, #tpu.memory_space<vmem>>, vector<1x400x64xbf16>
    %1 = vector.shape_cast %0 : vector<1x400x64xbf16> to vector<400x64xbf16>
    %c0_2 = arith.constant 0 : index
    %c0_3 = arith.constant 0 : index
    %2 = vector.load %arg2[%c0_2, %c0_3] : memref<64x32xbf16, #tpu.memory_space<vmem>>, vector<64x32xbf16>
    %cst = arith.constant dense<0.000000e+00> : vector<400x32xf32>
    %3 = tpu.matmul %1, %2, %cst {dimension_numbers = #tpu.dot_dimension_numbers<[1], [0], [0], [1], [0, 0, 1, 1], [], []>} : vector<400x64xbf16>, vector<64x32xbf16>, vector<400x32xf32> -> vector<400x32xf32>
    %c0_4 = arith.constant 0 : index
    %c0_5 = arith.constant 0 : index
    %4 = vector.load %arg3[%c0_4, %c0_5] : memref<1x32xf32, #tpu.memory_space<vmem>>, vector<1x32xf32>
    %5 = vector.broadcast %4 : vector<1x32xf32> to vector<400x32xf32>
    %6 = arith.addf %3, %5 : vector<400x32xf32>
    %cst_6 = arith.constant 0.000000e+00 : f32
    %7 = vector.broadcast %cst_6 : f32 to vector<400x32xf32>
    %8 = arith.maximumf %6, %7 : vector<400x32xf32>
    %9 = vector.extract_strided_slice %8 {offsets = [0, 0], sizes = [100, 32], strides = [1, 1]} : vector<400x32xf32> to vector<100x32xf32>
    %10 = vector.extract_strided_slice %8 {offsets = [100, 0], sizes = [100, 32], strides = [1, 1]} : vector<400x32xf32> to vector<100x32xf32>
    %11 = arith.maximumf %9, %10 : vector<100x32xf32>
    %12 = vector.extract_strided_slice %8 {offsets = [200, 0], sizes = [100, 32], strides = [1, 1]} : vector<400x32xf32> to vector<100x32xf32>
    %13 = vector.extract_strided_slice %8 {offsets = [300, 0], sizes = [100, 32], strides = [1, 1]} : vector<400x32xf32> to vector<100x32xf32>
    %14 = arith.maximumf %12, %13 : vector<100x32xf32>
    %15 = arith.maximumf %11, %14 : vector<100x32xf32>
    %c0_7 = arith.constant 0 : index
    %c0_8 = arith.constant 0 : index
    %16 = vector.load %arg4[%c0_7, %c0_8] : memref<400x100xbf16, #tpu.memory_space<vmem>>, vector<400x100xbf16>
    %17 = arith.truncf %15 : vector<100x32xf32> to vector<100x32xbf16>
    %cst_9 = arith.constant dense<0.000000e+00> : vector<400x32xf32>
    %18 = tpu.matmul %16, %17, %cst_9 {dimension_numbers = #tpu.dot_dimension_numbers<[1], [0], [0], [1], [0, 0, 1, 1], [], []>} : vector<400x100xbf16>, vector<100x32xbf16>, vector<400x32xf32> -> vector<400x32xf32>
    %19 = vector.extract_strided_slice %18 {offsets = [0, 0], sizes = [25, 32], strides = [1, 1]} : vector<400x32xf32> to vector<25x32xf32>
    %c0_10 = arith.constant 0 : index
    %c0_11 = arith.constant 0 : index
    %20 = vector.load %arg5[%c0_10, %c0_11] : memref<512x64xbf16, #tpu.memory_space<vmem>>, vector<32x64xbf16>
    %21 = arith.truncf %19 : vector<25x32xf32> to vector<25x32xbf16>
    %cst_12 = arith.constant dense<0.000000e+00> : vector<25x64xf32>
    %22 = tpu.matmul %21, %20, %cst_12 {dimension_numbers = #tpu.dot_dimension_numbers<[1], [0], [0], [1], [0, 0, 1, 1], [], []>} : vector<25x32xbf16>, vector<32x64xbf16>, vector<25x64xf32> -> vector<25x64xf32>
    %23 = vector.extract_strided_slice %18 {offsets = [25, 0], sizes = [25, 32], strides = [1, 1]} : vector<400x32xf32> to vector<25x32xf32>
    %c32 = arith.constant 32 : index
    %c0_13 = arith.constant 0 : index
    %24 = vector.load %arg5[%c32, %c0_13] : memref<512x64xbf16, #tpu.memory_space<vmem>>, vector<32x64xbf16>
    %25 = arith.truncf %23 : vector<25x32xf32> to vector<25x32xbf16>
    %cst_14 = arith.constant dense<0.000000e+00> : vector<25x64xf32>
    %26 = tpu.matmul %25, %24, %cst_14 {dimension_numbers = #tpu.dot_dimension_numbers<[1], [0], [0], [1], [0, 0, 1, 1], [], []>} : vector<25x32xbf16>, vector<32x64xbf16>, vector<25x64xf32> -> vector<25x64xf32>
    %27 = arith.addf %22, %26 : vector<25x64xf32>
    %28 = vector.extract_strided_slice %18 {offsets = [50, 0], sizes = [25, 32], strides = [1, 1]} : vector<400x32xf32> to vector<25x32xf32>
    %c64 = arith.constant 64 : index
    %c0_15 = arith.constant 0 : index
    %29 = vector.load %arg5[%c64, %c0_15] : memref<512x64xbf16, #tpu.memory_space<vmem>>, vector<32x64xbf16>
    %30 = arith.truncf %28 : vector<25x32xf32> to vector<25x32xbf16>
    %cst_16 = arith.constant dense<0.000000e+00> : vector<25x64xf32>
    %31 = tpu.matmul %30, %29, %cst_16 {dimension_numbers = #tpu.dot_dimension_numbers<[1], [0], [0], [1], [0, 0, 1, 1], [], []>} : vector<25x32xbf16>, vector<32x64xbf16>, vector<25x64xf32> -> vector<25x64xf32>
    %32 = arith.addf %27, %31 : vector<25x64xf32>
    %33 = vector.extract_strided_slice %18 {offsets = [75, 0], sizes = [25, 32], strides = [1, 1]} : vector<400x32xf32> to vector<25x32xf32>
    %c96 = arith.constant 96 : index
    %c0_17 = arith.constant 0 : index
    %34 = vector.load %arg5[%c96, %c0_17] : memref<512x64xbf16, #tpu.memory_space<vmem>>, vector<32x64xbf16>
    %35 = arith.truncf %33 : vector<25x32xf32> to vector<25x32xbf16>
    %cst_18 = arith.constant dense<0.000000e+00> : vector<25x64xf32>
    %36 = tpu.matmul %35, %34, %cst_18 {dimension_numbers = #tpu.dot_dimension_numbers<[1], [0], [0], [1], [0, 0, 1, 1], [], []>} : vector<25x32xbf16>, vector<32x64xbf16>, vector<25x64xf32> -> vector<25x64xf32>
    %37 = arith.addf %32, %36 : vector<25x64xf32>
    %38 = vector.extract_strided_slice %18 {offsets = [100, 0], sizes = [25, 32], strides = [1, 1]} : vector<400x32xf32> to vector<25x32xf32>
    %c128 = arith.constant 128 : index
    %c0_19 = arith.constant 0 : index
    %39 = vector.load %arg5[%c128, %c0_19] : memref<512x64xbf16, #tpu.memory_space<vmem>>, vector<32x64xbf16>
    %40 = arith.truncf %38 : vector<25x32xf32> to vector<25x32xbf16>
    %cst_20 = arith.constant dense<0.000000e+00> : vector<25x64xf32>
    %41 = tpu.matmul %40, %39, %cst_20 {dimension_numbers = #tpu.dot_dimension_numbers<[1], [0], [0], [1], [0, 0, 1, 1], [], []>} : vector<25x32xbf16>, vector<32x64xbf16>, vector<25x64xf32> -> vector<25x64xf32>
    %42 = arith.addf %37, %41 : vector<25x64xf32>
    %43 = vector.extract_strided_slice %18 {offsets = [125, 0], sizes = [25, 32], strides = [1, 1]} : vector<400x32xf32> to vector<25x32xf32>
    %c160 = arith.constant 160 : index
    %c0_21 = arith.constant 0 : index
    %44 = vector.load %arg5[%c160, %c0_21] : memref<512x64xbf16, #tpu.memory_space<vmem>>, vector<32x64xbf16>
    %45 = arith.truncf %43 : vector<25x32xf32> to vector<25x32xbf16>
    %cst_22 = arith.constant dense<0.000000e+00> : vector<25x64xf32>
    %46 = tpu.matmul %45, %44, %cst_22 {dimension_numbers = #tpu.dot_dimension_numbers<[1], [0], [0], [1], [0, 0, 1, 1], [], []>} : vector<25x32xbf16>, vector<32x64xbf16>, vector<25x64xf32> -> vector<25x64xf32>
    %47 = arith.addf %42, %46 : vector<25x64xf32>
    %48 = vector.extract_strided_slice %18 {offsets = [150, 0], sizes = [25, 32], strides = [1, 1]} : vector<400x32xf32> to vector<25x32xf32>
    %c192 = arith.constant 192 : index
    %c0_23 = arith.constant 0 : index
    %49 = vector.load %arg5[%c192, %c0_23] : memref<512x64xbf16, #tpu.memory_space<vmem>>, vector<32x64xbf16>
    %50 = arith.truncf %48 : vector<25x32xf32> to vector<25x32xbf16>
    %cst_24 = arith.constant dense<0.000000e+00> : vector<25x64xf32>
    %51 = tpu.matmul %50, %49, %cst_24 {dimension_numbers = #tpu.dot_dimension_numbers<[1], [0], [0], [1], [0, 0, 1, 1], [], []>} : vector<25x32xbf16>, vector<32x64xbf16>, vector<25x64xf32> -> vector<25x64xf32>
    %52 = arith.addf %47, %51 : vector<25x64xf32>
    %53 = vector.extract_strided_slice %18 {offsets = [175, 0], sizes = [25, 32], strides = [1, 1]} : vector<400x32xf32> to vector<25x32xf32>
    %c224 = arith.constant 224 : index
    %c0_25 = arith.constant 0 : index
    %54 = vector.load %arg5[%c224, %c0_25] : memref<512x64xbf16, #tpu.memory_space<vmem>>, vector<32x64xbf16>
    %55 = arith.truncf %53 : vector<25x32xf32> to vector<25x32xbf16>
    %cst_26 = arith.constant dense<0.000000e+00> : vector<25x64xf32>
    %56 = tpu.matmul %55, %54, %cst_26 {dimension_numbers = #tpu.dot_dimension_numbers<[1], [0], [0], [1], [0, 0, 1, 1], [], []>} : vector<25x32xbf16>, vector<32x64xbf16>, vector<25x64xf32> -> vector<25x64xf32>
    %57 = arith.addf %52, %56 : vector<25x64xf32>
    %58 = vector.extract_strided_slice %18 {offsets = [200, 0], sizes = [25, 32], strides = [1, 1]} : vector<400x32xf32> to vector<25x32xf32>
    %c256 = arith.constant 256 : index
    %c0_27 = arith.constant 0 : index
    %59 = vector.load %arg5[%c256, %c0_27] : memref<512x64xbf16, #tpu.memory_space<vmem>>, vector<32x64xbf16>
    %60 = arith.truncf %58 : vector<25x32xf32> to vector<25x32xbf16>
    %cst_28 = arith.constant dense<0.000000e+00> : vector<25x64xf32>
    %61 = tpu.matmul %60, %59, %cst_28 {dimension_numbers = #tpu.dot_dimension_numbers<[1], [0], [0], [1], [0, 0, 1, 1], [], []>} : vector<25x32xbf16>, vector<32x64xbf16>, vector<25x64xf32> -> vector<25x64xf32>
    %62 = arith.addf %57, %61 : vector<25x64xf32>
    %63 = vector.extract_strided_slice %18 {offsets = [225, 0], sizes = [25, 32], strides = [1, 1]} : vector<400x32xf32> to vector<25x32xf32>
    %c288 = arith.constant 288 : index
    %c0_29 = arith.constant 0 : index
    %64 = vector.load %arg5[%c288, %c0_29] : memref<512x64xbf16, #tpu.memory_space<vmem>>, vector<32x64xbf16>
    %65 = arith.truncf %63 : vector<25x32xf32> to vector<25x32xbf16>
    %cst_30 = arith.constant dense<0.000000e+00> : vector<25x64xf32>
    %66 = tpu.matmul %65, %64, %cst_30 {dimension_numbers = #tpu.dot_dimension_numbers<[1], [0], [0], [1], [0, 0, 1, 1], [], []>} : vector<25x32xbf16>, vector<32x64xbf16>, vector<25x64xf32> -> vector<25x64xf32>
    %67 = arith.addf %62, %66 : vector<25x64xf32>
    %68 = vector.extract_strided_slice %18 {offsets = [250, 0], sizes = [25, 32], strides = [1, 1]} : vector<400x32xf32> to vector<25x32xf32>
    %c320 = arith.constant 320 : index
    %c0_31 = arith.constant 0 : index
    %69 = vector.load %arg5[%c320, %c0_31] : memref<512x64xbf16, #tpu.memory_space<vmem>>, vector<32x64xbf16>
    %70 = arith.truncf %68 : vector<25x32xf32> to vector<25x32xbf16>
    %cst_32 = arith.constant dense<0.000000e+00> : vector<25x64xf32>
    %71 = tpu.matmul %70, %69, %cst_32 {dimension_numbers = #tpu.dot_dimension_numbers<[1], [0], [0], [1], [0, 0, 1, 1], [], []>} : vector<25x32xbf16>, vector<32x64xbf16>, vector<25x64xf32> -> vector<25x64xf32>
    %72 = arith.addf %67, %71 : vector<25x64xf32>
    %73 = vector.extract_strided_slice %18 {offsets = [275, 0], sizes = [25, 32], strides = [1, 1]} : vector<400x32xf32> to vector<25x32xf32>
    %c352 = arith.constant 352 : index
    %c0_33 = arith.constant 0 : index
    %74 = vector.load %arg5[%c352, %c0_33] : memref<512x64xbf16, #tpu.memory_space<vmem>>, vector<32x64xbf16>
    %75 = arith.truncf %73 : vector<25x32xf32> to vector<25x32xbf16>
    %cst_34 = arith.constant dense<0.000000e+00> : vector<25x64xf32>
    %76 = tpu.matmul %75, %74, %cst_34 {dimension_numbers = #tpu.dot_dimension_numbers<[1], [0], [0], [1], [0, 0, 1, 1], [], []>} : vector<25x32xbf16>, vector<32x64xbf16>, vector<25x64xf32> -> vector<25x64xf32>
    %77 = arith.addf %72, %76 : vector<25x64xf32>
    %78 = vector.extract_strided_slice %18 {offsets = [300, 0], sizes = [25, 32], strides = [1, 1]} : vector<400x32xf32> to vector<25x32xf32>
    %c384 = arith.constant 384 : index
    %c0_35 = arith.constant 0 : index
    %79 = vector.load %arg5[%c384, %c0_35] : memref<512x64xbf16, #tpu.memory_space<vmem>>, vector<32x64xbf16>
    %80 = arith.truncf %78 : vector<25x32xf32> to vector<25x32xbf16>
    %cst_36 = arith.constant dense<0.000000e+00> : vector<25x64xf32>
    %81 = tpu.matmul %80, %79, %cst_36 {dimension_numbers = #tpu.dot_dimension_numbers<[1], [0], [0], [1], [0, 0, 1, 1], [], []>} : vector<25x32xbf16>, vector<32x64xbf16>, vector<25x64xf32> -> vector<25x64xf32>
    %82 = arith.addf %77, %81 : vector<25x64xf32>
    %83 = vector.extract_strided_slice %18 {offsets = [325, 0], sizes = [25, 32], strides = [1, 1]} : vector<400x32xf32> to vector<25x32xf32>
    %c416 = arith.constant 416 : index
    %c0_37 = arith.constant 0 : index
    %84 = vector.load %arg5[%c416, %c0_37] : memref<512x64xbf16, #tpu.memory_space<vmem>>, vector<32x64xbf16>
    %85 = arith.truncf %83 : vector<25x32xf32> to vector<25x32xbf16>
    %cst_38 = arith.constant dense<0.000000e+00> : vector<25x64xf32>
    %86 = tpu.matmul %85, %84, %cst_38 {dimension_numbers = #tpu.dot_dimension_numbers<[1], [0], [0], [1], [0, 0, 1, 1], [], []>} : vector<25x32xbf16>, vector<32x64xbf16>, vector<25x64xf32> -> vector<25x64xf32>
    %87 = arith.addf %82, %86 : vector<25x64xf32>
    %88 = vector.extract_strided_slice %18 {offsets = [350, 0], sizes = [25, 32], strides = [1, 1]} : vector<400x32xf32> to vector<25x32xf32>
    %c448 = arith.constant 448 : index
    %c0_39 = arith.constant 0 : index
    %89 = vector.load %arg5[%c448, %c0_39] : memref<512x64xbf16, #tpu.memory_space<vmem>>, vector<32x64xbf16>
    %90 = arith.truncf %88 : vector<25x32xf32> to vector<25x32xbf16>
    %cst_40 = arith.constant dense<0.000000e+00> : vector<25x64xf32>
    %91 = tpu.matmul %90, %89, %cst_40 {dimension_numbers = #tpu.dot_dimension_numbers<[1], [0], [0], [1], [0, 0, 1, 1], [], []>} : vector<25x32xbf16>, vector<32x64xbf16>, vector<25x64xf32> -> vector<25x64xf32>
    %92 = arith.addf %87, %91 : vector<25x64xf32>
    %93 = vector.extract_strided_slice %18 {offsets = [375, 0], sizes = [25, 32], strides = [1, 1]} : vector<400x32xf32> to vector<25x32xf32>
    %c480 = arith.constant 480 : index
    %c0_41 = arith.constant 0 : index
    %94 = vector.load %arg5[%c480, %c0_41] : memref<512x64xbf16, #tpu.memory_space<vmem>>, vector<32x64xbf16>
    %95 = arith.truncf %93 : vector<25x32xf32> to vector<25x32xbf16>
    %cst_42 = arith.constant dense<0.000000e+00> : vector<25x64xf32>
    %96 = tpu.matmul %95, %94, %cst_42 {dimension_numbers = #tpu.dot_dimension_numbers<[1], [0], [0], [1], [0, 0, 1, 1], [], []>} : vector<25x32xbf16>, vector<32x64xbf16>, vector<25x64xf32> -> vector<25x64xf32>
    %97 = arith.addf %92, %96 : vector<25x64xf32>
    %c0_43 = arith.constant 0 : index
    %c0_44 = arith.constant 0 : index
    %98 = vector.load %arg6[%c0_43, %c0_44] : memref<1x64xf32, #tpu.memory_space<vmem>>, vector<1x64xf32>
    %99 = vector.broadcast %98 : vector<1x64xf32> to vector<25x64xf32>
    %100 = arith.addf %97, %99 : vector<25x64xf32>
    %cst_45 = arith.constant 0.000000e+00 : f32
    %101 = vector.broadcast %cst_45 : f32 to vector<25x64xf32>
    %102 = arith.maximumf %100, %101 : vector<25x64xf32>
    %c0_46 = arith.constant 0 : index
    %c0_47 = arith.constant 0 : index
    %103 = vector.load %arg7[%c0_46, %c0_47] : memref<36x25xbf16, #tpu.memory_space<vmem>>, vector<36x25xbf16>
    %104 = arith.truncf %102 : vector<25x64xf32> to vector<25x64xbf16>
    %cst_48 = arith.constant dense<0.000000e+00> : vector<36x64xf32>
    %105 = tpu.matmul %103, %104, %cst_48 {dimension_numbers = #tpu.dot_dimension_numbers<[1], [0], [0], [1], [0, 0, 1, 1], [], []>} : vector<36x25xbf16>, vector<25x64xbf16>, vector<36x64xf32> -> vector<36x64xf32>
    %106 = vector.extract_strided_slice %105 {offsets = [0, 0], sizes = [9, 64], strides = [1, 1]} : vector<36x64xf32> to vector<9x64xf32>
    %107 = vector.extract_strided_slice %105 {offsets = [9, 0], sizes = [9, 64], strides = [1, 1]} : vector<36x64xf32> to vector<9x64xf32>
    %108 = arith.maximumf %106, %107 : vector<9x64xf32>
    %109 = vector.extract_strided_slice %105 {offsets = [18, 0], sizes = [9, 64], strides = [1, 1]} : vector<36x64xf32> to vector<9x64xf32>
    %110 = vector.extract_strided_slice %105 {offsets = [27, 0], sizes = [9, 64], strides = [1, 1]} : vector<36x64xf32> to vector<9x64xf32>
    %111 = arith.maximumf %109, %110 : vector<9x64xf32>
    %112 = arith.maximumf %108, %111 : vector<9x64xf32>
    %c0_49 = arith.constant 0 : index
    %c0_50 = arith.constant 0 : index
    %113 = vector.load %arg8[%c0_49, %c0_50] : memref<81x9xbf16, #tpu.memory_space<vmem>>, vector<81x9xbf16>
    %114 = arith.truncf %112 : vector<9x64xf32> to vector<9x64xbf16>
    %cst_51 = arith.constant dense<0.000000e+00> : vector<81x64xf32>
    %115 = tpu.matmul %113, %114, %cst_51 {dimension_numbers = #tpu.dot_dimension_numbers<[1], [0], [0], [1], [0, 0, 1, 1], [], []>} : vector<81x9xbf16>, vector<9x64xbf16>, vector<81x64xf32> -> vector<81x64xf32>
    %116 = vector.extract_strided_slice %115 {offsets = [0, 0], sizes = [9, 64], strides = [1, 1]} : vector<81x64xf32> to vector<9x64xf32>
    %c0_52 = arith.constant 0 : index
    %c0_53 = arith.constant 0 : index
    %117 = vector.load %arg9[%c0_52, %c0_53] : memref<576x64xbf16, #tpu.memory_space<vmem>>, vector<64x64xbf16>
    %118 = arith.truncf %116 : vector<9x64xf32> to vector<9x64xbf16>
    %cst_54 = arith.constant dense<0.000000e+00> : vector<9x64xf32>
    %119 = tpu.matmul %118, %117, %cst_54 {dimension_numbers = #tpu.dot_dimension_numbers<[1], [0], [0], [1], [0, 0, 1, 1], [], []>} : vector<9x64xbf16>, vector<64x64xbf16>, vector<9x64xf32> -> vector<9x64xf32>
    %120 = vector.extract_strided_slice %115 {offsets = [9, 0], sizes = [9, 64], strides = [1, 1]} : vector<81x64xf32> to vector<9x64xf32>
    %c64_55 = arith.constant 64 : index
    %c0_56 = arith.constant 0 : index
    %121 = vector.load %arg9[%c64_55, %c0_56] : memref<576x64xbf16, #tpu.memory_space<vmem>>, vector<64x64xbf16>
    %122 = arith.truncf %120 : vector<9x64xf32> to vector<9x64xbf16>
    %cst_57 = arith.constant dense<0.000000e+00> : vector<9x64xf32>
    %123 = tpu.matmul %122, %121, %cst_57 {dimension_numbers = #tpu.dot_dimension_numbers<[1], [0], [0], [1], [0, 0, 1, 1], [], []>} : vector<9x64xbf16>, vector<64x64xbf16>, vector<9x64xf32> -> vector<9x64xf32>
    %124 = arith.addf %119, %123 : vector<9x64xf32>
    %125 = vector.extract_strided_slice %115 {offsets = [18, 0], sizes = [9, 64], strides = [1, 1]} : vector<81x64xf32> to vector<9x64xf32>
    %c128_58 = arith.constant 128 : index
    %c0_59 = arith.constant 0 : index
    %126 = vector.load %arg9[%c128_58, %c0_59] : memref<576x64xbf16, #tpu.memory_space<vmem>>, vector<64x64xbf16>
    %127 = arith.truncf %125 : vector<9x64xf32> to vector<9x64xbf16>
    %cst_60 = arith.constant dense<0.000000e+00> : vector<9x64xf32>
    %128 = tpu.matmul %127, %126, %cst_60 {dimension_numbers = #tpu.dot_dimension_numbers<[1], [0], [0], [1], [0, 0, 1, 1], [], []>} : vector<9x64xbf16>, vector<64x64xbf16>, vector<9x64xf32> -> vector<9x64xf32>
    %129 = arith.addf %124, %128 : vector<9x64xf32>
    %130 = vector.extract_strided_slice %115 {offsets = [27, 0], sizes = [9, 64], strides = [1, 1]} : vector<81x64xf32> to vector<9x64xf32>
    %c192_61 = arith.constant 192 : index
    %c0_62 = arith.constant 0 : index
    %131 = vector.load %arg9[%c192_61, %c0_62] : memref<576x64xbf16, #tpu.memory_space<vmem>>, vector<64x64xbf16>
    %132 = arith.truncf %130 : vector<9x64xf32> to vector<9x64xbf16>
    %cst_63 = arith.constant dense<0.000000e+00> : vector<9x64xf32>
    %133 = tpu.matmul %132, %131, %cst_63 {dimension_numbers = #tpu.dot_dimension_numbers<[1], [0], [0], [1], [0, 0, 1, 1], [], []>} : vector<9x64xbf16>, vector<64x64xbf16>, vector<9x64xf32> -> vector<9x64xf32>
    %134 = arith.addf %129, %133 : vector<9x64xf32>
    %135 = vector.extract_strided_slice %115 {offsets = [36, 0], sizes = [9, 64], strides = [1, 1]} : vector<81x64xf32> to vector<9x64xf32>
    %c256_64 = arith.constant 256 : index
    %c0_65 = arith.constant 0 : index
    %136 = vector.load %arg9[%c256_64, %c0_65] : memref<576x64xbf16, #tpu.memory_space<vmem>>, vector<64x64xbf16>
    %137 = arith.truncf %135 : vector<9x64xf32> to vector<9x64xbf16>
    %cst_66 = arith.constant dense<0.000000e+00> : vector<9x64xf32>
    %138 = tpu.matmul %137, %136, %cst_66 {dimension_numbers = #tpu.dot_dimension_numbers<[1], [0], [0], [1], [0, 0, 1, 1], [], []>} : vector<9x64xbf16>, vector<64x64xbf16>, vector<9x64xf32> -> vector<9x64xf32>
    %139 = arith.addf %134, %138 : vector<9x64xf32>
    %140 = vector.extract_strided_slice %115 {offsets = [45, 0], sizes = [9, 64], strides = [1, 1]} : vector<81x64xf32> to vector<9x64xf32>
    %c320_67 = arith.constant 320 : index
    %c0_68 = arith.constant 0 : index
    %141 = vector.load %arg9[%c320_67, %c0_68] : memref<576x64xbf16, #tpu.memory_space<vmem>>, vector<64x64xbf16>
    %142 = arith.truncf %140 : vector<9x64xf32> to vector<9x64xbf16>
    %cst_69 = arith.constant dense<0.000000e+00> : vector<9x64xf32>
    %143 = tpu.matmul %142, %141, %cst_69 {dimension_numbers = #tpu.dot_dimension_numbers<[1], [0], [0], [1], [0, 0, 1, 1], [], []>} : vector<9x64xbf16>, vector<64x64xbf16>, vector<9x64xf32> -> vector<9x64xf32>
    %144 = arith.addf %139, %143 : vector<9x64xf32>
    %145 = vector.extract_strided_slice %115 {offsets = [54, 0], sizes = [9, 64], strides = [1, 1]} : vector<81x64xf32> to vector<9x64xf32>
    %c384_70 = arith.constant 384 : index
    %c0_71 = arith.constant 0 : index
    %146 = vector.load %arg9[%c384_70, %c0_71] : memref<576x64xbf16, #tpu.memory_space<vmem>>, vector<64x64xbf16>
    %147 = arith.truncf %145 : vector<9x64xf32> to vector<9x64xbf16>
    %cst_72 = arith.constant dense<0.000000e+00> : vector<9x64xf32>
    %148 = tpu.matmul %147, %146, %cst_72 {dimension_numbers = #tpu.dot_dimension_numbers<[1], [0], [0], [1], [0, 0, 1, 1], [], []>} : vector<9x64xbf16>, vector<64x64xbf16>, vector<9x64xf32> -> vector<9x64xf32>
    %149 = arith.addf %144, %148 : vector<9x64xf32>
    %150 = vector.extract_strided_slice %115 {offsets = [63, 0], sizes = [9, 64], strides = [1, 1]} : vector<81x64xf32> to vector<9x64xf32>
    %c448_73 = arith.constant 448 : index
    %c0_74 = arith.constant 0 : index
    %151 = vector.load %arg9[%c448_73, %c0_74] : memref<576x64xbf16, #tpu.memory_space<vmem>>, vector<64x64xbf16>
    %152 = arith.truncf %150 : vector<9x64xf32> to vector<9x64xbf16>
    %cst_75 = arith.constant dense<0.000000e+00> : vector<9x64xf32>
    %153 = tpu.matmul %152, %151, %cst_75 {dimension_numbers = #tpu.dot_dimension_numbers<[1], [0], [0], [1], [0, 0, 1, 1], [], []>} : vector<9x64xbf16>, vector<64x64xbf16>, vector<9x64xf32> -> vector<9x64xf32>
    %154 = arith.addf %149, %153 : vector<9x64xf32>
    %155 = vector.extract_strided_slice %115 {offsets = [72, 0], sizes = [9, 64], strides = [1, 1]} : vector<81x64xf32> to vector<9x64xf32>
    %c512 = arith.constant 512 : index
    %c0_76 = arith.constant 0 : index
    %156 = vector.load %arg9[%c512, %c0_76] : memref<576x64xbf16, #tpu.memory_space<vmem>>, vector<64x64xbf16>
    %157 = arith.truncf %155 : vector<9x64xf32> to vector<9x64xbf16>
    %cst_77 = arith.constant dense<0.000000e+00> : vector<9x64xf32>
    %158 = tpu.matmul %157, %156, %cst_77 {dimension_numbers = #tpu.dot_dimension_numbers<[1], [0], [0], [1], [0, 0, 1, 1], [], []>} : vector<9x64xbf16>, vector<64x64xbf16>, vector<9x64xf32> -> vector<9x64xf32>
    %159 = arith.addf %154, %158 : vector<9x64xf32>
    %c0_78 = arith.constant 0 : index
    %c0_79 = arith.constant 0 : index
    %160 = vector.load %arg10[%c0_78, %c0_79] : memref<1x64xf32, #tpu.memory_space<vmem>>, vector<1x64xf32>
    %161 = vector.broadcast %160 : vector<1x64xf32> to vector<9x64xf32>
    %162 = arith.addf %159, %161 : vector<9x64xf32>
    %cst_80 = arith.constant 0.000000e+00 : f32
    %163 = vector.broadcast %cst_80 : f32 to vector<9x64xf32>
    %164 = arith.maximumf %162, %163 : vector<9x64xf32>
    %c0_81 = arith.constant 0 : index
    %c0_82 = arith.constant 0 : index
    %165 = vector.load %arg11[%c0_81, %c0_82] : memref<16x9xbf16, #tpu.memory_space<vmem>>, vector<16x9xbf16>
    %166 = arith.truncf %164 : vector<9x64xf32> to vector<9x64xbf16>
    %cst_83 = arith.constant dense<0.000000e+00> : vector<16x64xf32>
    %167 = tpu.matmul %165, %166, %cst_83 {dimension_numbers = #tpu.dot_dimension_numbers<[1], [0], [0], [1], [0, 0, 1, 1], [], []>} : vector<16x9xbf16>, vector<9x64xbf16>, vector<16x64xf32> -> vector<16x64xf32>
    %168 = vector.extract_strided_slice %167 {offsets = [0, 0], sizes = [4, 64], strides = [1, 1]} : vector<16x64xf32> to vector<4x64xf32>
    %169 = vector.extract_strided_slice %167 {offsets = [4, 0], sizes = [4, 64], strides = [1, 1]} : vector<16x64xf32> to vector<4x64xf32>
    %170 = arith.maximumf %168, %169 : vector<4x64xf32>
    %171 = vector.extract_strided_slice %167 {offsets = [8, 0], sizes = [4, 64], strides = [1, 1]} : vector<16x64xf32> to vector<4x64xf32>
    %172 = vector.extract_strided_slice %167 {offsets = [12, 0], sizes = [4, 64], strides = [1, 1]} : vector<16x64xf32> to vector<4x64xf32>
    %173 = arith.maximumf %171, %172 : vector<4x64xf32>
    %174 = arith.maximumf %170, %173 : vector<4x64xf32>
    %175 = vector.extract_strided_slice %174 {offsets = [0, 0], sizes = [1, 64], strides = [1, 1]} : vector<4x64xf32> to vector<1x64xf32>
    %c0_84 = arith.constant 0 : index
    %c0_85 = arith.constant 0 : index
    %176 = vector.load %arg12[%c0_84, %c0_85] : memref<256x128xbf16, #tpu.memory_space<vmem>>, vector<64x128xbf16>
    %177 = arith.truncf %175 : vector<1x64xf32> to vector<1x64xbf16>
    %cst_86 = arith.constant dense<0.000000e+00> : vector<1x128xf32>
    %178 = tpu.matmul %177, %176, %cst_86 {dimension_numbers = #tpu.dot_dimension_numbers<[1], [0], [0], [1], [0, 0, 1, 1], [], []>} : vector<1x64xbf16>, vector<64x128xbf16>, vector<1x128xf32> -> vector<1x128xf32>
    %179 = vector.extract_strided_slice %174 {offsets = [1, 0], sizes = [1, 64], strides = [1, 1]} : vector<4x64xf32> to vector<1x64xf32>
    %c64_87 = arith.constant 64 : index
    %c0_88 = arith.constant 0 : index
    %180 = vector.load %arg12[%c64_87, %c0_88] : memref<256x128xbf16, #tpu.memory_space<vmem>>, vector<64x128xbf16>
    %181 = arith.truncf %179 : vector<1x64xf32> to vector<1x64xbf16>
    %cst_89 = arith.constant dense<0.000000e+00> : vector<1x128xf32>
    %182 = tpu.matmul %181, %180, %cst_89 {dimension_numbers = #tpu.dot_dimension_numbers<[1], [0], [0], [1], [0, 0, 1, 1], [], []>} : vector<1x64xbf16>, vector<64x128xbf16>, vector<1x128xf32> -> vector<1x128xf32>
    %183 = arith.addf %178, %182 : vector<1x128xf32>
    %184 = vector.extract_strided_slice %174 {offsets = [2, 0], sizes = [1, 64], strides = [1, 1]} : vector<4x64xf32> to vector<1x64xf32>
    %c128_90 = arith.constant 128 : index
    %c0_91 = arith.constant 0 : index
    %185 = vector.load %arg12[%c128_90, %c0_91] : memref<256x128xbf16, #tpu.memory_space<vmem>>, vector<64x128xbf16>
    %186 = arith.truncf %184 : vector<1x64xf32> to vector<1x64xbf16>
    %cst_92 = arith.constant dense<0.000000e+00> : vector<1x128xf32>
    %187 = tpu.matmul %186, %185, %cst_92 {dimension_numbers = #tpu.dot_dimension_numbers<[1], [0], [0], [1], [0, 0, 1, 1], [], []>} : vector<1x64xbf16>, vector<64x128xbf16>, vector<1x128xf32> -> vector<1x128xf32>
    %188 = arith.addf %183, %187 : vector<1x128xf32>
    %189 = vector.extract_strided_slice %174 {offsets = [3, 0], sizes = [1, 64], strides = [1, 1]} : vector<4x64xf32> to vector<1x64xf32>
    %c192_93 = arith.constant 192 : index
    %c0_94 = arith.constant 0 : index
    %190 = vector.load %arg12[%c192_93, %c0_94] : memref<256x128xbf16, #tpu.memory_space<vmem>>, vector<64x128xbf16>
    %191 = arith.truncf %189 : vector<1x64xf32> to vector<1x64xbf16>
    %cst_95 = arith.constant dense<0.000000e+00> : vector<1x128xf32>
    %192 = tpu.matmul %191, %190, %cst_95 {dimension_numbers = #tpu.dot_dimension_numbers<[1], [0], [0], [1], [0, 0, 1, 1], [], []>} : vector<1x64xbf16>, vector<64x128xbf16>, vector<1x128xf32> -> vector<1x128xf32>
    %193 = arith.addf %188, %192 : vector<1x128xf32>
    %c0_96 = arith.constant 0 : index
    %c0_97 = arith.constant 0 : index
    %194 = vector.load %arg13[%c0_96, %c0_97] : memref<1x128xf32, #tpu.memory_space<vmem>>, vector<1x128xf32>
    %195 = arith.addf %193, %194 : vector<1x128xf32>
    %196 = tpu.iota {dimensions = array<i32: 1>} : vector<1x128xi32>
    %c64_i32 = arith.constant 64 : i32
    %197 = vector.broadcast %c64_i32 : i32 to vector<1x128xi32>
    %198 = arith.cmpi slt, %196, %197 : vector<1x128xi32>
    %199 = math.tanh %195 : vector<1x128xf32>
    %200 = arith.select %198, %199, %195 : vector<1x128xi1>, vector<1x128xf32>
    %c0_98 = arith.constant 0 : index
    %c0_99 = arith.constant 0 : index
    %201 = vector.load %arg14[%c0_98, %c0_99] : memref<128x128xbf16, #tpu.memory_space<vmem>>, vector<128x128xbf16>
    %202 = arith.truncf %200 : vector<1x128xf32> to vector<1x128xbf16>
    %cst_100 = arith.constant dense<0.000000e+00> : vector<1x128xf32>
    %203 = tpu.matmul %202, %201, %cst_100 {dimension_numbers = #tpu.dot_dimension_numbers<[1], [0], [0], [1], [0, 0, 1, 1], [], []>} : vector<1x128xbf16>, vector<128x128xbf16>, vector<1x128xf32> -> vector<1x128xf32>
    %c0_101 = arith.constant 0 : index
    %c0_102 = arith.constant 0 : index
    %204 = vector.load %arg15[%c0_101, %c0_102] : memref<1x128xf32, #tpu.memory_space<vmem>>, vector<1x128xf32>
    %205 = arith.addf %203, %204 : vector<1x128xf32>
    %206 = math.tanh %205 : vector<1x128xf32>
    %c0_103 = arith.constant 0 : index
    %c0_104 = arith.constant 0 : index
    %207 = vector.load %arg16[%c0_103, %c0_104] : memref<128x128xbf16, #tpu.memory_space<vmem>>, vector<128x128xbf16>
    %208 = arith.truncf %206 : vector<1x128xf32> to vector<1x128xbf16>
    %cst_105 = arith.constant dense<0.000000e+00> : vector<1x128xf32>
    %209 = tpu.matmul %208, %207, %cst_105 {dimension_numbers = #tpu.dot_dimension_numbers<[1], [0], [0], [1], [0, 0, 1, 1], [], []>} : vector<1x128xbf16>, vector<128x128xbf16>, vector<1x128xf32> -> vector<1x128xf32>
    %c0_106 = arith.constant 0 : index
    %c0_107 = arith.constant 0 : index
    %210 = vector.load %arg17[%c0_106, %c0_107] : memref<1x128xf32, #tpu.memory_space<vmem>>, vector<1x128xf32>
    %211 = arith.addf %209, %210 : vector<1x128xf32>
    %212 = vector.extract_strided_slice %211 {offsets = [0, 0], sizes = [1, 4], strides = [1, 1]} : vector<1x128xf32> to vector<1x4xf32>
    %c0_108 = arith.constant 0 : index
    %c0_109 = arith.constant 0 : index
    %c0_110 = arith.constant 0 : index
    %213 = vector.load %arg20[%c0_108, %c0_109, %c0_110] : memref<1x1x4xf32, #tpu.memory_space<vmem>>, vector<1x1x4xf32>
    %214 = vector.shape_cast %213 : vector<1x1x4xf32> to vector<1x4xf32>
    %215 = vector.shape_cast %212 : vector<1x4xf32> to vector<1x1x4xf32>
    tpu.vector_store %arg20[%c0_108, %c0_109, %c0_110], %215 {strides = array<i32>} : memref<1x1x4xf32, #tpu.memory_space<vmem>>, vector<1x1x4xf32>,
    %216 = vector.extract_strided_slice %211 {offsets = [0, 64], sizes = [1, 64], strides = [1, 1]} : vector<1x128xf32> to vector<1x64xf32>
    %217 = math.tanh %216 : vector<1x64xf32>
    %c0_111 = arith.constant 0 : index
    %c0_112 = arith.constant 0 : index
    %218 = vector.load %arg18[%c0_111, %c0_112] : memref<1x64xf32, #tpu.memory_space<vmem>>, vector<1x64xf32>
    %219 = arith.mulf %217, %218 : vector<1x64xf32>
    %cst_113 = arith.constant dense<0.000000e+00> : vector<1xf32>
    %220 = vector.multi_reduction <add>, %219, %cst_113 [1] : vector<1x64xf32> to vector<1xf32>
    %221 = vector.shape_cast %220 : vector<1xf32> to vector<1x1xf32>
    %c0_114 = arith.constant 0 : index
    %c0_115 = arith.constant 0 : index
    %222 = vector.load %arg19[%c0_114, %c0_115] : memref<1x1xf32, #tpu.memory_space<vmem>>, vector<1x1xf32>
    %223 = arith.addf %221, %222 : vector<1x1xf32>
    %c0_116 = arith.constant 0 : index
    %c0_117 = arith.constant 0 : index
    %c0_118 = arith.constant 0 : index
    %224 = vector.load %arg21[%c0_116, %c0_117, %c0_118] : memref<1x1x1xf32, #tpu.memory_space<vmem>>, vector<1x1x1xf32>
    %225 = vector.shape_cast %224 : vector<1x1x1xf32> to vector<1x1xf32>
    %226 = vector.shape_cast %223 : vector<1x1xf32> to vector<1x1x1xf32>
    tpu.vector_store %arg21[%c0_116, %c0_117, %c0_118], %226 {strides = array<i32>} : memref<1x1x1xf32, #tpu.memory_space<vmem>>, vector<1x1x1xf32>,
    return
  }
  func.func @transform_0(%arg0: i32) -> (i32, i32, i32) {
    %c0_i32 = arith.constant 0 : i32
    %c0_i32_0 = arith.constant 0 : i32
    %c0_i32_1 = arith.constant 0 : i32
    return %arg0, %c0_i32, %c0_i32_0 : i32, i32, i32
  }
  func.func @transform_1(%arg0: i32) -> (i32, i32) {
    %c0_i32 = arith.constant 0 : i32
    %c0_i32_0 = arith.constant 0 : i32
    %c0_i32_1 = arith.constant 0 : i32
    return %c0_i32, %c0_i32_0 : i32, i32
  }
  func.func @transform_2(%arg0: i32) -> (i32, i32) {
    %c0_i32 = arith.constant 0 : i32
    %c0_i32_0 = arith.constant 0 : i32
    %c0_i32_1 = arith.constant 0 : i32
    return %c0_i32, %c0_i32_0 : i32, i32
  }
  func.func @transform_3(%arg0: i32) -> (i32, i32) {
    %c0_i32 = arith.constant 0 : i32
    %c0_i32_0 = arith.constant 0 : i32
    %c0_i32_1 = arith.constant 0 : i32
    return %c0_i32, %c0_i32_0 : i32, i32
  }
  func.func @transform_4(%arg0: i32) -> (i32, i32) {
    %c0_i32 = arith.constant 0 : i32
    %c0_i32_0 = arith.constant 0 : i32
    %c0_i32_1 = arith.constant 0 : i32
    return %c0_i32, %c0_i32_0 : i32, i32
  }
  func.func @transform_5(%arg0: i32) -> (i32, i32) {
    %c0_i32 = arith.constant 0 : i32
    %c0_i32_0 = arith.constant 0 : i32
    %c0_i32_1 = arith.constant 0 : i32
    return %c0_i32, %c0_i32_0 : i32, i32
  }
  func.func @transform_6(%arg0: i32) -> (i32, i32) {
    %c0_i32 = arith.constant 0 : i32
    %c0_i32_0 = arith.constant 0 : i32
    %c0_i32_1 = arith.constant 0 : i32
    return %c0_i32, %c0_i32_0 : i32, i32
  }
  func.func @transform_7(%arg0: i32) -> (i32, i32) {
    %c0_i32 = arith.constant 0 : i32
    %c0_i32_0 = arith.constant 0 : i32
    %c0_i32_1 = arith.constant 0 : i32
    return %c0_i32, %c0_i32_0 : i32, i32
  }
  func.func @transform_8(%arg0: i32) -> (i32, i32) {
    %c0_i32 = arith.constant 0 : i32
    %c0_i32_0 = arith.constant 0 : i32
    %c0_i32_1 = arith.constant 0 : i32
    return %c0_i32, %c0_i32_0 : i32, i32
  }
  func.func @transform_9(%arg0: i32) -> (i32, i32) {
    %c0_i32 = arith.constant 0 : i32
    %c0_i32_0 = arith.constant 0 : i32
    %c0_i32_1 = arith.constant 0 : i32
    return %c0_i32, %c0_i32_0 : i32, i32
  }
  func.func @transform_10(%arg0: i32) -> (i32, i32) {
    %c0_i32 = arith.constant 0 : i32
    %c0_i32_0 = arith.constant 0 : i32
    %c0_i32_1 = arith.constant 0 : i32
    return %c0_i32, %c0_i32_0 : i32, i32
  }
  func.func @transform_11(%arg0: i32) -> (i32, i32) {
    %c0_i32 = arith.constant 0 : i32
    %c0_i32_0 = arith.constant 0 : i32
    %c0_i32_1 = arith.constant 0 : i32
    return %c0_i32, %c0_i32_0 : i32, i32
  }
  func.func @transform_12(%arg0: i32) -> (i32, i32) {
    %c0_i32 = arith.constant 0 : i32
    %c0_i32_0 = arith.constant 0 : i32
    %c0_i32_1 = arith.constant 0 : i32
    return %c0_i32, %c0_i32_0 : i32, i32
  }
  func.func @transform_13(%arg0: i32) -> (i32, i32) {
    %c0_i32 = arith.constant 0 : i32
    %c0_i32_0 = arith.constant 0 : i32
    %c0_i32_1 = arith.constant 0 : i32
    return %c0_i32, %c0_i32_0 : i32, i32
  }
  func.func @transform_14(%arg0: i32) -> (i32, i32) {
    %c0_i32 = arith.constant 0 : i32
    %c0_i32_0 = arith.constant 0 : i32
    %c0_i32_1 = arith.constant 0 : i32
    return %c0_i32, %c0_i32_0 : i32, i32
  }
  func.func @transform_15(%arg0: i32) -> (i32, i32) {
    %c0_i32 = arith.constant 0 : i32
    %c0_i32_0 = arith.constant 0 : i32
    %c0_i32_1 = arith.constant 0 : i32
    return %c0_i32, %c0_i32_0 : i32, i32
  }
  func.func @transform_16(%arg0: i32) -> (i32, i32) {
    %c0_i32 = arith.constant 0 : i32
    %c0_i32_0 = arith.constant 0 : i32
    %c0_i32_1 = arith.constant 0 : i32
    return %c0_i32, %c0_i32_0 : i32, i32
  }
  func.func @transform_17(%arg0: i32) -> (i32, i32) {
    %c0_i32 = arith.constant 0 : i32
    %c0_i32_0 = arith.constant 0 : i32
    %c0_i32_1 = arith.constant 0 : i32
    return %c0_i32, %c0_i32_0 : i32, i32
  }
  func.func @transform_18(%arg0: i32) -> (i32, i32) {
    %c0_i32 = arith.constant 0 : i32
    %c0_i32_0 = arith.constant 0 : i32
    %c0_i32_1 = arith.constant 0 : i32
    return %c0_i32, %c0_i32_0 : i32, i32
  }
  func.func @transform_19(%arg0: i32) -> (i32, i32, i32) {
    %c0_i32 = arith.constant 0 : i32
    %c0_i32_0 = arith.constant 0 : i32
    %c0_i32_1 = arith.constant 0 : i32
    return %arg0, %c0_i32, %c0_i32_0 : i32, i32, i32
  }
  func.func @transform_20(%arg0: i32) -> (i32, i32, i32) {
    %c0_i32 = arith.constant 0 : i32
    %c0_i32_0 = arith.constant 0 : i32
    %c0_i32_1 = arith.constant 0 : i32
    return %arg0, %c0_i32, %c0_i32_0 : i32, i32, i32
  }
}

</mosaic_0001>

<llo_original>
// kernel: actor_critic_forward.1
$region0: #{actor_critic_forward.1}
  #allocation0 [shape = 'u32[]', space=smem, size = 0x4, offset = 0x4, fixed_abs, tag = 'smem constant byte address 0x4 - core index']
  #allocation1 [shape = 'u32[72,128]{1,0:T(1,128)}', space=vmem, size = 0x9000, scoped, tag = 'internal scratch']
  #allocation2 [shape = 'f32[1,1]{1,0:T(1,128)S(1)}', space=vmem, size = 0x200, scoped, tag = 'scoped memory for actor_critic_forward.1']
  %s0 = inlined_call_operand.vmem [shape: bf16[2,400,64], index: 0, kind: input, shape index: {}]
  %s1 = inlined_call_operand.vmem [shape: bf16[64,32], index: 1, kind: input, shape index: {}]
  %s2 = inlined_call_operand.vmem [shape: f32[1,32], index: 2, kind: input, shape index: {}]
  %s3 = inlined_call_operand.vmem [shape: bf16[400,100], index: 3, kind: input, shape index: {}]
  %s4 = inlined_call_operand.vmem [shape: bf16[512,64], index: 4, kind: input, shape index: {}]
  %s5 = inlined_call_operand.vmem [shape: f32[1,64], index: 5, kind: input, shape index: {}]
  %s6 = inlined_call_operand.vmem [shape: bf16[36,25], index: 6, kind: input, shape index: {}]
  %s7 = inlined_call_operand.vmem [shape: bf16[81,9], index: 7, kind: input, shape index: {}]
  %s8 = inlined_call_operand.vmem [shape: bf16[576,64], index: 8, kind: input, shape index: {}]
  %s9 = inlined_call_operand.vmem [shape: f32[1,64], index: 9, kind: input, shape index: {}]
  %s10 = inlined_call_operand.vmem [shape: bf16[16,9], index: 10, kind: input, shape index: {}]
  %s11 = inlined_call_operand.vmem [shape: bf16[256,128], index: 11, kind: input, shape index: {}]
  %s12 = inlined_call_operand.vmem [shape: f32[1,128], index: 12, kind: input, shape index: {}]
  %s13 = inlined_call_operand.vmem [shape: bf16[128,128], index: 13, kind: input, shape index: {}]
  %s14 = inlined_call_operand.vmem [shape: f32[1,128], index: 14, kind: input, shape index: {}]
  %s15 = inlined_call_operand.vmem [shape: bf16[128,128], index: 15, kind: input, shape index: {}]
  %s16 = inlined_call_operand.vmem [shape: f32[1,128], index: 16, kind: input, shape index: {}]
  %s17 = inlined_call_operand.vmem [shape: f32[1,64], index: 17, kind: input, shape index: {}]
  %s18 = inlined_call_operand.<no memory space> [shape: f32[1,1], index: 18, kind: input, shape index: {}]
  %s19 = inlined_call_operand.hbm [shape: f32[2,1,4], index: 19, kind: output, shape index: {0}]
  %s20 = inlined_call_operand.vmem [shape: f32[2,1,1], index: 20, kind: output, shape index: {1}]
  %21 = xla_tuple %s19, %s20
  %s22 = sld [smem:[#allocation0]]
  $region117: #{actor_critic_forward.1} parent=0
    _
  %s24 = ssub.s32 1, %s22
  %s25 = scalar_select 0, %s24, %s22
  %v26 = vstv %s18
  %27 = vst [vmem:[#allocation2] sm:$0x1] %v26
  $region1: #{actor_critic_forward.1} parent=0
    #allocation3 [shape = 'u8[1024]{0}', space=vmem, size = 0x400, scoped, tag = 'output window, operand 0']
    #allocation4 [shape = 's32[2]{0}', space=sflag, size = 0x8, scoped, tag = 'scoped memory for actor_critic_forward.1']
    %28 = vsyncpa [#allocation4], 0
    %s29 = scalar_lea.sflag [#allocation4], 1
    %30 = vsyncpa %s29, 0
    loop: start=0, step=1, limit=4
    $region2: #{actor_critic_forward.1} parent=1 // loop_pre_header
      _
    $region3: #{actor_critic_forward.1} parent=1 // loop_header
      %s32 = sphi 0, %s36
      %p33 = scmp.ge.s32.totalorder %s32, 4
      %s42 = sphi 0, %s44
      %s45 = sphi 0, %s42
      %s46 = sphi 0, %s45
      %s62 = sphi 0, %s46
      %s66 = sphi 0, %s66
      %s68 = sphi 0, %s66
      %s69 = sphi 0, %s68
      %s83 = sphi 0, %s69
      %s87 = sphi 0, %s87
      %s89 = sphi 0, %s87
      %s90 = sphi 0, %s89
      %s104 = sphi 0, %s90
      %s108 = sphi 0, %s108
      %s110 = sphi 0, %s108
      %s111 = sphi 0, %s110
      %s125 = sphi 0, %s111
      %s129 = sphi 0, %s129
      %s131 = sphi 0, %s129
      %s132 = sphi 0, %s131
      %s146 = sphi 0, %s132
      %s150 = sphi 0, %s150
      %s152 = sphi 0, %s150
      %s153 = sphi 0, %s152
      %s167 = sphi 0, %s153
      %s171 = sphi 0, %s171
      %s173 = sphi 0, %s171
      %s174 = sphi 0, %s173
      %s188 = sphi 0, %s174
      %s192 = sphi 0, %s192
      %s194 = sphi 0, %s192
      %s195 = sphi 0, %s194
      %s209 = sphi 0, %s195
      %s213 = sphi 0, %s213
      %s215 = sphi 0, %s213
      %s216 = sphi 0, %s215
      %s230 = sphi 0, %s216
      %s234 = sphi 0, %s234
      %s236 = sphi 0, %s234
      %s237 = sphi 0, %s236
      %s251 = sphi 0, %s237
      %s255 = sphi 0, %s255
      %s257 = sphi 0, %s255
      %s258 = sphi 0, %s257
      %s272 = sphi 0, %s258
      %s276 = sphi 0, %s276
      %s278 = sphi 0, %s276
      %s279 = sphi 0, %s278
      %s293 = sphi 0, %s279
      %s297 = sphi 0, %s297
      %s299 = sphi 0, %s297
      %s300 = sphi 0, %s299
      %s314 = sphi 0, %s300
      %s318 = sphi 0, %s318
      %s320 = sphi 0, %s318
      %s321 = sphi 0, %s320
      %s335 = sphi 0, %s321
      %s339 = sphi 0, %s339
      %s341 = sphi 0, %s339
      %s342 = sphi 0, %s341
      %s356 = sphi 0, %s342
      %s360 = sphi 0, %s360
      %s362 = sphi 0, %s360
      %s363 = sphi 0, %s362
      %s377 = sphi 0, %s363
      %s381 = sphi 0, %s381
      %s383 = sphi 0, %s381
      %s384 = sphi 0, %s383
      %s398 = sphi 0, %s384
      %s402 = sphi 0, %s402
      %s404 = sphi 0, %s402
      %s405 = sphi 0, %s404
      %s419 = sphi 0, %s405
      %s423 = sphi 0, %s423
      %s425 = sphi 0, %s423
      %s426 = sphi 0, %s425
      %s440 = sphi 0, %s426
      %s446 = sphi 0, %s448
      %s449 = sphi 0, %s446
      %s450 = sphi 0, %s449
      %s466 = sphi 0, %s450
      %s472 = sphi 0, %s474
      %s475 = sphi 0, %s472
      %s476 = sphi 0, %s475
      %s492 = sphi 0, %s476
    $region4: #{actor_critic_forward.1} parent=1 // loop_header_branch
      %35 = sbr.rel (%p33) target = $region8
    $region5: #{actor_critic_forward.1} parent=1 // loop_body
      %s37 = ssub.s32 %s32, 1
      %s38 = ssub.s32 %s32, 2
      %s39 = sadd.s32 %s32, 1
      %s40 = ssub.s32 %s32, %s39
      %p41 = scmp.eq.s32.totalorder %s40, 0
      %s43 = sadd.s32 %s42, 1
      %s44 = scalar_select %p41, %s42, %s43
      %p47 = pneg %p41
      %p48 = scmp.eq.s32.totalorder %s32, 1
      %p49 = por %p47, %p48
      %p50 = scmp.ne.s32.totalorder %s42, %s45
      %p51 = scmp.eq.s32.totalorder %s32, 0
      %p52 = por %p50, %p51
      %p53 = scmp.ne.s32.totalorder %s42, %s45
      %p54 = scmp.eq.s32.totalorder %s37, 1
      %p55 = por %p53, %p54
      %p56 = scmp.ne.s32.totalorder %s45, %s46
      %p57 = scmp.eq.s32.totalorder %s37, 0
      %p58 = por %p56, %p57
      %p59 = scmp.ne.s32.totalorder %s45, %s46
      %p60 = scmp.eq.s32.totalorder %s38, 1
      %p61 = por %p59, %p60
      %p63 = scmp.ne.s32.totalorder %s46, %s62
      %p64 = scmp.eq.s32.totalorder %s38, 0
      %p65 = por %p63, %p64
      %s67 = sadd.s32 %s66, 1
      %p70 = scmp.eq.s32.totalorder %s32, 1
      %p71 = scmp.ne.s32.totalorder %s66, %s68
      %p72 = scmp.eq.s32.totalorder %s32, 0
      %p73 = por %p71, %p72
      %p74 = scmp.ne.s32.totalorder %s66, %s68
      %p75 = scmp.eq.s32.totalorder %s37, 1
      %p76 = por %p74, %p75
      %p77 = scmp.ne.s32.totalorder %s68, %s69
      %p78 = scmp.eq.s32.totalorder %s37, 0
      %p79 = por %p77, %p78
      %p80 = scmp.ne.s32.totalorder %s68, %s69
      %p81 = scmp.eq.s32.totalorder %s38, 1
      %p82 = por %p80, %p81
      %p84 = scmp.ne.s32.totalorder %s69, %s83
      %p85 = scmp.eq.s32.totalorder %s38, 0
      %p86 = por %p84, %p85
      %s88 = sadd.s32 %s87, 1
      %p91 = scmp.eq.s32.totalorder %s32, 1
      %p92 = scmp.ne.s32.totalorder %s87, %s89
      %p93 = scmp.eq.s32.totalorder %s32, 0
      %p94 = por %p92, %p93
      %p95 = scmp.ne.s32.totalorder %s87, %s89
      %p96 = scmp.eq.s32.totalorder %s37, 1
      %p97 = por %p95, %p96
      %p98 = scmp.ne.s32.totalorder %s89, %s90
      %p99 = scmp.eq.s32.totalorder %s37, 0
      %p100 = por %p98, %p99
      %p101 = scmp.ne.s32.totalorder %s89, %s90
      %p102 = scmp.eq.s32.totalorder %s38, 1
      %p103 = por %p101, %p102
      %p105 = scmp.ne.s32.totalorder %s90, %s104
      %p106 = scmp.eq.s32.totalorder %s38, 0
      %p107 = por %p105, %p106
      %s109 = sadd.s32 %s108, 1
      %p112 = scmp.eq.s32.totalorder %s32, 1
      %p113 = scmp.ne.s32.totalorder %s108, %s110
      %p114 = scmp.eq.s32.totalorder %s32, 0
      %p115 = por %p113, %p114
      %p116 = scmp.ne.s32.totalorder %s108, %s110
      %p117 = scmp.eq.s32.totalorder %s37, 1
      %p118 = por %p116, %p117
      %p119 = scmp.ne.s32.totalorder %s110, %s111
      %p120 = scmp.eq.s32.totalorder %s37, 0
      %p121 = por %p119, %p120
      %p122 = scmp.ne.s32.totalorder %s110, %s111
      %p123 = scmp.eq.s32.totalorder %s38, 1
      %p124 = por %p122, %p123
      %p126 = scmp.ne.s32.totalorder %s111, %s125
      %p127 = scmp.eq.s32.totalorder %s38, 0
      %p128 = por %p126, %p127
      %s130 = sadd.s32 %s129, 1
      %p133 = scmp.eq.s32.totalorder %s32, 1
      %p134 = scmp.ne.s32.totalorder %s129, %s131
      %p135 = scmp.eq.s32.totalorder %s32, 0
      %p136 = por %p134, %p135
      %p137 = scmp.ne.s32.totalorder %s129, %s131
      %p138 = scmp.eq.s32.totalorder %s37, 1
      %p139 = por %p137, %p138
      %p140 = scmp.ne.s32.totalorder %s131, %s132
      %p141 = scmp.eq.s32.totalorder %s37, 0
      %p142 = por %p140, %p141
      %p143 = scmp.ne.s32.totalorder %s131, %s132
      %p144 = scmp.eq.s32.totalorder %s38, 1
      %p145 = por %p143, %p144
      %p147 = scmp.ne.s32.totalorder %s132, %s146
      %p148 = scmp.eq.s32.totalorder %s38, 0
      %p149 = por %p147, %p148
      %s151 = sadd.s32 %s150, 1
      %p154 = scmp.eq.s32.totalorder %s32, 1
      %p155 = scmp.ne.s32.totalorder %s150, %s152
      %p156 = scmp.eq.s32.totalorder %s32, 0
      %p157 = por %p155, %p156
      %p158 = scmp.ne.s32.totalorder %s150, %s152
      %p159 = scmp.eq.s32.totalorder %s37, 1
      %p160 = por %p158, %p159
      %p161 = scmp.ne.s32.totalorder %s152, %s153
      %p162 = scmp.eq.s32.totalorder %s37, 0
      %p163 = por %p161, %p162
      %p164 = scmp.ne.s32.totalorder %s152, %s153
      %p165 = scmp.eq.s32.totalorder %s38, 1
      %p166 = por %p164, %p165
      %p168 = scmp.ne.s32.totalorder %s153, %s167
      %p169 = scmp.eq.s32.totalorder %s38, 0
      %p170 = por %p168, %p169
      %s172 = sadd.s32 %s171, 1
      %p175 = scmp.eq.s32.totalorder %s32, 1
      %p176 = scmp.ne.s32.totalorder %s171, %s173
      %p177 = scmp.eq.s32.totalorder %s32, 0
      %p178 = por %p176, %p177
      %p179 = scmp.ne.s32.totalorder %s171, %s173
      %p180 = scmp.eq.s32.totalorder %s37, 1
      %p181 = por %p179, %p180
      %p182 = scmp.ne.s32.totalorder %s173, %s174
      %p183 = scmp.eq.s32.totalorder %s37, 0
      %p184 = por %p182, %p183
      %p185 = scmp.ne.s32.totalorder %s173, %s174
      %p186 = scmp.eq.s32.totalorder %s38, 1
      %p187 = por %p185, %p186
      %p189 = scmp.ne.s32.totalorder %s174, %s188
      %p190 = scmp.eq.s32.totalorder %s38, 0
      %p191 = por %p189, %p190
      %s193 = sadd.s32 %s192, 1
      %p196 = scmp.eq.s32.totalorder %s32, 1
      %p197 = scmp.ne.s32.totalorder %s192, %s194
      %p198 = scmp.eq.s32.totalorder %s32, 0
      %p199 = por %p197, %p198
      %p200 = scmp.ne.s32.totalorder %s192, %s194
      %p201 = scmp.eq.s32.totalorder %s37, 1
      %p202 = por %p200, %p201
      %p203 = scmp.ne.s32.totalorder %s194, %s195
      %p204 = scmp.eq.s32.totalorder %s37, 0
      %p205 = por %p203, %p204
      %p206 = scmp.ne.s32.totalorder %s194, %s195
      %p207 = scmp.eq.s32.totalorder %s38, 1
      %p208 = por %p206, %p207
      %p210 = scmp.ne.s32.totalorder %s195, %s209
      %p211 = scmp.eq.s32.totalorder %s38, 0
      %p212 = por %p210, %p211
      %s214 = sadd.s32 %s213, 1
      %p217 = scmp.eq.s32.totalorder %s32, 1
      %p218 = scmp.ne.s32.totalorder %s213, %s215
      %p219 = scmp.eq.s32.totalorder %s32, 0
      %p220 = por %p218, %p219
      %p221 = scmp.ne.s32.totalorder %s213, %s215
      %p222 = scmp.eq.s32.totalorder %s37, 1
      %p223 = por %p221, %p222
      %p224 = scmp.ne.s32.totalorder %s215, %s216
      %p225 = scmp.eq.s32.totalorder %s37, 0
      %p226 = por %p224, %p225
      %p227 = scmp.ne.s32.totalorder %s215, %s216
      %p228 = scmp.eq.s32.totalorder %s38, 1
      %p229 = por %p227, %p228
      %p231 = scmp.ne.s32.totalorder %s216, %s230
      %p232 = scmp.eq.s32.totalorder %s38, 0
      %p233 = por %p231, %p232
      %s235 = sadd.s32 %s234, 1
      %p238 = scmp.eq.s32.totalorder %s32, 1
      %p239 = scmp.ne.s32.totalorder %s234, %s236
      %p240 = scmp.eq.s32.totalorder %s32, 0
      %p241 = por %p239, %p240
      %p242 = scmp.ne.s32.totalorder %s234, %s236
      %p243 = scmp.eq.s32.totalorder %s37, 1
      %p244 = por %p242, %p243
      %p245 = scmp.ne.s32.totalorder %s236, %s237
      %p246 = scmp.eq.s32.totalorder %s37, 0
      %p247 = por %p245, %p246
      %p248 = scmp.ne.s32.totalorder %s236, %s237
      %p249 = scmp.eq.s32.totalorder %s38, 1
      %p250 = por %p248, %p249
      %p252 = scmp.ne.s32.totalorder %s237, %s251
      %p253 = scmp.eq.s32.totalorder %s38, 0
      %p254 = por %p252, %p253
      %s256 = sadd.s32 %s255, 1
      %p259 = scmp.eq.s32.totalorder %s32, 1
      %p260 = scmp.ne.s32.totalorder %s255, %s257
      %p261 = scmp.eq.s32.totalorder %s32, 0
      %p262 = por %p260, %p261
      %p263 = scmp.ne.s32.totalorder %s255, %s257
      %p264 = scmp.eq.s32.totalorder %s37, 1
      %p265 = por %p263, %p264
      %p266 = scmp.ne.s32.totalorder %s257, %s258
      %p267 = scmp.eq.s32.totalorder %s37, 0
      %p268 = por %p266, %p267
      %p269 = scmp.ne.s32.totalorder %s257, %s258
      %p270 = scmp.eq.s32.totalorder %s38, 1
      %p271 = por %p269, %p270
      %p273 = scmp.ne.s32.totalorder %s258, %s272
      %p274 = scmp.eq.s32.totalorder %s38, 0
      %p275 = por %p273, %p274
      %s277 = sadd.s32 %s276, 1
      %p280 = scmp.eq.s32.totalorder %s32, 1
      %p281 = scmp.ne.s32.totalorder %s276, %s278
      %p282 = scmp.eq.s32.totalorder %s32, 0
      %p283 = por %p281, %p282
      %p284 = scmp.ne.s32.totalorder %s276, %s278
      %p285 = scmp.eq.s32.totalorder %s37, 1
      %p286 = por %p284, %p285
      %p287 = scmp.ne.s32.totalorder %s278, %s279
      %p288 = scmp.eq.s32.totalorder %s37, 0
      %p289 = por %p287, %p288
      %p290 = scmp.ne.s32.totalorder %s278, %s279
      %p291 = scmp.eq.s32.totalorder %s38, 1
      %p292 = por %p290, %p291
      %p294 = scmp.ne.s32.totalorder %s279, %s293
      %p295 = scmp.eq.s32.totalorder %s38, 0
      %p296 = por %p294, %p295
      %s298 = sadd.s32 %s297, 1
      %p301 = scmp.eq.s32.totalorder %s32, 1
      %p302 = scmp.ne.s32.totalorder %s297, %s299
      %p303 = scmp.eq.s32.totalorder %s32, 0
      %p304 = por %p302, %p303
      %p305 = scmp.ne.s32.totalorder %s297, %s299
      %p306 = scmp.eq.s32.totalorder %s37, 1
      %p307 = por %p305, %p306
      %p308 = scmp.ne.s32.totalorder %s299, %s300
      %p309 = scmp.eq.s32.totalorder %s37, 0
      %p310 = por %p308, %p309
      %p311 = scmp.ne.s32.totalorder %s299, %s300
      %p312 = scmp.eq.s32.totalorder %s38, 1
      %p313 = por %p311, %p312
      %p315 = scmp.ne.s32.totalorder %s300, %s314
      %p316 = scmp.eq.s32.totalorder %s38, 0
      %p317 = por %p315, %p316
      %s319 = sadd.s32 %s318, 1
      %p322 = scmp.eq.s32.totalorder %s32, 1
      %p323 = scmp.ne.s32.totalorder %s318, %s320
      %p324 = scmp.eq.s32.totalorder %s32, 0
      %p325 = por %p323, %p324
      %p326 = scmp.ne.s32.totalorder %s318, %s320
      %p327 = scmp.eq.s32.totalorder %s37, 1
      %p328 = por %p326, %p327
      %p329 = scmp.ne.s32.totalorder %s320, %s321
      %p330 = scmp.eq.s32.totalorder %s37, 0
      %p331 = por %p329, %p330
      %p332 = scmp.ne.s32.totalorder %s320, %s321
      %p333 = scmp.eq.s32.totalorder %s38, 1
      %p334 = por %p332, %p333
      %p336 = scmp.ne.s32.totalorder %s321, %s335
      %p337 = scmp.eq.s32.totalorder %s38, 0
      %p338 = por %p336, %p337
      %s340 = sadd.s32 %s339, 1
      %p343 = scmp.eq.s32.totalorder %s32, 1
      %p344 = scmp.ne.s32.totalorder %s339, %s341
      %p345 = scmp.eq.s32.totalorder %s32, 0
      %p346 = por %p344, %p345
      %p347 = scmp.ne.s32.totalorder %s339, %s341
      %p348 = scmp.eq.s32.totalorder %s37, 1
      %p349 = por %p347, %p348
      %p350 = scmp.ne.s32.totalorder %s341, %s342
      %p351 = scmp.eq.s32.totalorder %s37, 0
      %p352 = por %p350, %p351
      %p353 = scmp.ne.s32.totalorder %s341, %s342
      %p354 = scmp.eq.s32.totalorder %s38, 1
      %p355 = por %p353, %p354
      %p357 = scmp.ne.s32.totalorder %s342, %s356
      %p358 = scmp.eq.s32.totalorder %s38, 0
      %p359 = por %p357, %p358
      %s361 = sadd.s32 %s360, 1
      %p364 = scmp.eq.s32.totalorder %s32, 1
      %p365 = scmp.ne.s32.totalorder %s360, %s362
      %p366 = scmp.eq.s32.totalorder %s32, 0
      %p367 = por %p365, %p366
      %p368 = scmp.ne.s32.totalorder %s360, %s362
      %p369 = scmp.eq.s32.totalorder %s37, 1
      %p370 = por %p368, %p369
      %p371 = scmp.ne.s32.totalorder %s362, %s363
      %p372 = scmp.eq.s32.totalorder %s37, 0
      %p373 = por %p371, %p372
      %p374 = scmp.ne.s32.totalorder %s362, %s363
      %p375 = scmp.eq.s32.totalorder %s38, 1
      %p376 = por %p374, %p375
      %p378 = scmp.ne.s32.totalorder %s363, %s377
      %p379 = scmp.eq.s32.totalorder %s38, 0
      %p380 = por %p378, %p379
      %s382 = sadd.s32 %s381, 1
      %p385 = scmp.eq.s32.totalorder %s32, 1
      %p386 = scmp.ne.s32.totalorder %s381, %s383
      %p387 = scmp.eq.s32.totalorder %s32, 0
      %p388 = por %p386, %p387
      %p389 = scmp.ne.s32.totalorder %s381, %s383
      %p390 = scmp.eq.s32.totalorder %s37, 1
      %p391 = por %p389, %p390
      %p392 = scmp.ne.s32.totalorder %s383, %s384
      %p393 = scmp.eq.s32.totalorder %s37, 0
      %p394 = por %p392, %p393
      %p395 = scmp.ne.s32.totalorder %s383, %s384
      %p396 = scmp.eq.s32.totalorder %s38, 1
      %p397 = por %p395, %p396
      %p399 = scmp.ne.s32.totalorder %s384, %s398
      %p400 = scmp.eq.s32.totalorder %s38, 0
      %p401 = por %p399, %p400
      %s403 = sadd.s32 %s402, 1
      %p406 = scmp.eq.s32.totalorder %s32, 1
      %p407 = scmp.ne.s32.totalorder %s402, %s404
      %p408 = scmp.eq.s32.totalorder %s32, 0
      %p409 = por %p407, %p408
      %p410 = scmp.ne.s32.totalorder %s402, %s404
      %p411 = scmp.eq.s32.totalorder %s37, 1
      %p412 = por %p410, %p411
      %p413 = scmp.ne.s32.totalorder %s404, %s405
      %p414 = scmp.eq.s32.totalorder %s37, 0
      %p415 = por %p413, %p414
      %p416 = scmp.ne.s32.totalorder %s404, %s405
      %p417 = scmp.eq.s32.totalorder %s38, 1
      %p418 = por %p416, %p417
      %p420 = scmp.ne.s32.totalorder %s405, %s419
      %p421 = scmp.eq.s32.totalorder %s38, 0
      %p422 = por %p420, %p421
      %s424 = sadd.s32 %s423, 1
      %p427 = scmp.eq.s32.totalorder %s32, 1
      %p428 = scmp.ne.s32.totalorder %s423, %s425
      %p429 = scmp.eq.s32.totalorder %s32, 0
      %p430 = por %p428, %p429
      %p431 = scmp.ne.s32.totalorder %s423, %s425
      %p432 = scmp.eq.s32.totalorder %s37, 1
      %p433 = por %p431, %p432
      %p434 = scmp.ne.s32.totalorder %s425, %s426
      %p435 = scmp.eq.s32.totalorder %s37, 0
      %p436 = por %p434, %p435
      %p437 = scmp.ne.s32.totalorder %s425, %s426
      %p438 = scmp.eq.s32.totalorder %s38, 1
      %p439 = por %p437, %p438
      %p441 = scmp.ne.s32.totalorder %s426, %s440
      %p442 = scmp.eq.s32.totalorder %s38, 0
      %p443 = por %p441, %p442
      %s444 = ssub.s32 %s32, %s39
      %p445 = scmp.eq.s32.totalorder %s444, 0
      %s447 = sadd.s32 %s446, 1
      %s448 = scalar_select %p445, %s446, %s447
      %p451 = pneg %p445
      %p452 = scmp.eq.s32.totalorder %s32, 1
      %p453 = por %p451, %p452
      %p454 = scmp.ne.s32.totalorder %s446, %s449
      %p455 = scmp.eq.s32.totalorder %s32, 0
      %p456 = por %p454, %p455
      %p457 = scmp.ne.s32.totalorder %s446, %s449
      %p458 = scmp.eq.s32.totalorder %s37, 1
      %p459 = por %p457, %p458
      %p460 = scmp.ne.s32.totalorder %s449, %s450
      %p461 = scmp.eq.s32.totalorder %s37, 0
      %p462 = por %p460, %p461
      %p463 = scmp.ne.s32.totalorder %s449, %s450
      %p464 = scmp.eq.s32.totalorder %s38, 1
      %p465 = por %p463, %p464
      %p467 = scmp.ne.s32.totalorder %s450, %s466
      %p468 = scmp.eq.s32.totalorder %s38, 0
      %p469 = por %p467, %p468
      %s470 = ssub.s32 %s32, %s39
      %p471 = scmp.eq.s32.totalorder %s470, 0
      %s473 = sadd.s32 %s472, 1
      %s474 = scalar_select %p471, %s472, %s473
      %p477 = pneg %p471
      %p478 = scmp.eq.s32.totalorder %s32, 1
      %p479 = por %p477, %p478
      %p480 = scmp.ne.s32.totalorder %s472, %s475
      %p481 = scmp.eq.s32.totalorder %s32, 0
      %p482 = por %p480, %p481
      %p483 = scmp.ne.s32.totalorder %s472, %s475
      %p484 = scmp.eq.s32.totalorder %s37, 1
      %p485 = por %p483, %p484
      %p486 = scmp.ne.s32.totalorder %s475, %s476
      %p487 = scmp.eq.s32.totalorder %s37, 0
      %p488 = por %p486, %p487
      %p489 = scmp.ne.s32.totalorder %s475, %s476
      %p490 = scmp.eq.s32.totalorder %s38, 1
      %p491 = por %p489, %p490
      %p493 = scmp.ne.s32.totalorder %s476, %s492
      %p494 = scmp.eq.s32.totalorder %s38, 0
      %p495 = por %p493, %p494
      %p496 = scmp.le.s32.totalorder 1, %s32
      %p497 = scmp.lt.s32.totalorder %s32, 3
      %p498 = pnand %p496, %p497
      %p499 = pneg %p498
      // Predicated region
      $region9: #{actor_critic_forward.1} parent=5 // pred_check
        _
      $region10: #{actor_critic_forward.1} parent=5 // pred_check_branch
        %501 = sbr.rel (%p498) target = $region12
      $region11: #{actor_critic_forward.1} parent=5 // pred_region
        %s502 = ssub.s32 %s32, 1
        // Predicated region
        $region13: #{actor_critic_forward.1} parent=11 // pred_check
          %p503 = pneg %p79
        $region14: #{actor_critic_forward.1} parent=11 // pred_check_branch
          %505 = sbr.rel (%p503) target = $region16
        $region15: #{actor_critic_forward.1} parent=11 // pred_region
          _
        $region16: #{actor_critic_forward.1} parent=11 // pred_fallthru
          _
        // Predicated region
        $region17: #{actor_critic_forward.1} parent=11 // pred_check
          %p506 = pneg %p100
        $region18: #{actor_critic_forward.1} parent=11 // pred_check_branch
          %508 = sbr.rel (%p506) target = $region20
        $region19: #{actor_critic_forward.1} parent=11 // pred_region
          _
        $region20: #{actor_critic_forward.1} parent=11 // pred_fallthru
          _
        // Predicated region
        $region21: #{actor_critic_forward.1} parent=11 // pred_check
          %p509 = pneg %p121
        $region22: #{actor_critic_forward.1} parent=11 // pred_check_branch
          %511 = sbr.rel (%p509) target = $region24
        $region23: #{actor_critic_forward.1} parent=11 // pred_region
          _
        $region24: #{actor_critic_forward.1} parent=11 // pred_fallthru
          _
        // Predicated region
        $region25: #{actor_critic_forward.1} parent=11 // pred_check
          %p512 = pneg %p142
        $region26: #{actor_critic_forward.1} parent=11 // pred_check_branch
          %514 = sbr.rel (%p512) target = $region28
        $region27: #{actor_critic_forward.1} parent=11 // pred_region
          _
        $region28: #{actor_critic_forward.1} parent=11 // pred_fallthru
          _
        // Predicated region
        $region29: #{actor_critic_forward.1} parent=11 // pred_check
          %p515 = pneg %p163
        $region30: #{actor_critic_forward.1} parent=11 // pred_check_branch
          %517 = sbr.rel (%p515) target = $region32
        $region31: #{actor_critic_forward.1} parent=11 // pred_region
          _
        $region32: #{actor_critic_forward.1} parent=11 // pred_fallthru
          _
        // Predicated region
        $region33: #{actor_critic_forward.1} parent=11 // pred_check
          %p518 = pneg %p184
        $region34: #{actor_critic_forward.1} parent=11 // pred_check_branch
          %520 = sbr.rel (%p518) target = $region36
        $region35: #{actor_critic_forward.1} parent=11 // pred_region
          _
        $region36: #{actor_critic_forward.1} parent=11 // pred_fallthru
          _
        // Predicated region
        $region37: #{actor_critic_forward.1} parent=11 // pred_check
          %p521 = pneg %p205
        $region38: #{actor_critic_forward.1} parent=11 // pred_check_branch
          %523 = sbr.rel (%p521) target = $region40
        $region39: #{actor_critic_forward.1} parent=11 // pred_region
          _
        $region40: #{actor_critic_forward.1} parent=11 // pred_fallthru
          _
        // Predicated region
        $region41: #{actor_critic_forward.1} parent=11 // pred_check
          %p524 = pneg %p226
        $region42: #{actor_critic_forward.1} parent=11 // pred_check_branch
          %526 = sbr.rel (%p524) target = $region44
        $region43: #{actor_critic_forward.1} parent=11 // pred_region
          _
        $region44: #{actor_critic_forward.1} parent=11 // pred_fallthru
          _
        // Predicated region
        $region45: #{actor_critic_forward.1} parent=11 // pred_check
          %p527 = pneg %p247
        $region46: #{actor_critic_forward.1} parent=11 // pred_check_branch
          %529 = sbr.rel (%p527) target = $region48
        $region47: #{actor_critic_forward.1} parent=11 // pred_region
          _
        $region48: #{actor_critic_forward.1} parent=11 // pred_fallthru
          _
        // Predicated region
        $region49: #{actor_critic_forward.1} parent=11 // pred_check
          %p530 = pneg %p268
        $region50: #{actor_critic_forward.1} parent=11 // pred_check_branch
          %532 = sbr.rel (%p530) target = $region52
        $region51: #{actor_critic_forward.1} parent=11 // pred_region
          _
        $region52: #{actor_critic_forward.1} parent=11 // pred_fallthru
          _
        // Predicated region
        $region53: #{actor_critic_forward.1} parent=11 // pred_check
          %p533 = pneg %p289
        $region54: #{actor_critic_forward.1} parent=11 // pred_check_branch
          %535 = sbr.rel (%p533) target = $region56
        $region55: #{actor_critic_forward.1} parent=11 // pred_region
          _
        $region56: #{actor_critic_forward.1} parent=11 // pred_fallthru
          _
        // Predicated region
        $region57: #{actor_critic_forward.1} parent=11 // pred_check
          %p536 = pneg %p310
        $region58: #{actor_critic_forward.1} parent=11 // pred_check_branch
          %538 = sbr.rel (%p536) target = $region60
        $region59: #{actor_critic_forward.1} parent=11 // pred_region
          _
        $region60: #{actor_critic_forward.1} parent=11 // pred_fallthru
          _
        // Predicated region
        $region61: #{actor_critic_forward.1} parent=11 // pred_check
          %p539 = pneg %p331
        $region62: #{actor_critic_forward.1} parent=11 // pred_check_branch
          %541 = sbr.rel (%p539) target = $region64
        $region63: #{actor_critic_forward.1} parent=11 // pred_region
          _
        $region64: #{actor_critic_forward.1} parent=11 // pred_fallthru
          _
        // Predicated region
        $region65: #{actor_critic_forward.1} parent=11 // pred_check
          %p542 = pneg %p352
        $region66: #{actor_critic_forward.1} parent=11 // pred_check_branch
          %544 = sbr.rel (%p542) target = $region68
        $region67: #{actor_critic_forward.1} parent=11 // pred_region
          _
        $region68: #{actor_critic_forward.1} parent=11 // pred_fallthru
          _
        // Predicated region
        $region69: #{actor_critic_forward.1} parent=11 // pred_check
          %p545 = pneg %p373
        $region70: #{actor_critic_forward.1} parent=11 // pred_check_branch
          %547 = sbr.rel (%p545) target = $region72
        $region71: #{actor_critic_forward.1} parent=11 // pred_region
          _
        $region72: #{actor_critic_forward.1} parent=11 // pred_fallthru
          _
        // Predicated region
        $region73: #{actor_critic_forward.1} parent=11 // pred_check
          %p548 = pneg %p394
        $region74: #{actor_critic_forward.1} parent=11 // pred_check_branch
          %550 = sbr.rel (%p548) target = $region76
        $region75: #{actor_critic_forward.1} parent=11 // pred_region
          _
        $region76: #{actor_critic_forward.1} parent=11 // pred_fallthru
          _
        // Predicated region
        $region77: #{actor_critic_forward.1} parent=11 // pred_check
          %p551 = pneg %p415
        $region78: #{actor_critic_forward.1} parent=11 // pred_check_branch
          %553 = sbr.rel (%p551) target = $region80
        $region79: #{actor_critic_forward.1} parent=11 // pred_region
          _
        $region80: #{actor_critic_forward.1} parent=11 // pred_fallthru
          _
        // Predicated region
        $region81: #{actor_critic_forward.1} parent=11 // pred_check
          %p554 = pneg %p436
        $region82: #{actor_critic_forward.1} parent=11 // pred_check_branch
          %556 = sbr.rel (%p554) target = $region84
        $region83: #{actor_critic_forward.1} parent=11 // pred_region
          _
        $region84: #{actor_critic_forward.1} parent=11 // pred_fallthru
          _
      $region12: #{actor_critic_forward.1} parent=5 // pred_fallthru
        _
      %p557 = scmp.lt.s32.totalorder %s32, 2
      // Predicated region
      $region85: #{actor_critic_forward.1} parent=5 // pred_check
        %p558 = pneg %p557
      $region86: #{actor_critic_forward.1} parent=5 // pred_check_branch
        %560 = sbr.rel (%p558) target = $region88
      $region87: #{actor_critic_forward.1} parent=5 // pred_region
        // Predicated region
        $region89: #{actor_critic_forward.1} parent=87 // pred_check
          %p561 = pneg %p52
        $region90: #{actor_critic_forward.1} parent=87 // pred_check_branch
          %563 = sbr.rel (%p561) target = $region92
        $region91: #{actor_critic_forward.1} parent=87 // pred_region
          %p564 = scmp.lt.s32.totalorder %s32, 1
          %s565 = scalar_select %p564, %s32, 1
          %s566 = smul.addr %s565, 50
          %s567 = smul.addr %s566, 4
          %s568 = scalar_lea.vmem %s0, %s567
        $region92: #{actor_critic_forward.1} parent=87 // pred_fallthru
          _
      $region88: #{actor_critic_forward.1} parent=5 // pred_fallthru
        _
      %p569 = scmp.le.s32.totalorder 1, %s32
      %p570 = scmp.lt.s32.totalorder %s32, 3
      %p571 = pnand %p569, %p570
      %p572 = pneg %p571
      // Predicated region
      $region93: #{actor_critic_forward.1} parent=5 // pred_check
        _
      $region94: #{actor_critic_forward.1} parent=5 // pred_check_branch
        %574 = sbr.rel (%p571) target = $region96
      $region95: #{actor_critic_forward.1} parent=5 // pred_region
        %s575 = ssub.s32 %s32, 1
        %p576 = scmp.lt.s32.totalorder %s37, 1
        %s577 = scalar_select %p576, %s37, 1
        %s578 = smul.addr %s577, 50
        %s579 = smul.addr %s578, 4
        %s580 = scalar_lea.vmem %s0, %s579
        %p581 = pneg %p58
        %p582 = pneg %p55
        %p583 = pneg %p79
        %p584 = pneg %p76
        %p585 = pneg %p100
        %p586 = pneg %p97
        %p587 = pneg %p121
        %p588 = pneg %p118
        %p589 = pneg %p142
        %p590 = pneg %p139
        %p591 = pneg %p163
        %p592 = pneg %p160
        %p593 = pneg %p184
        %p594 = pneg %p181
        %p595 = pneg %p205
        %p596 = pneg %p202
        %p597 = pneg %p226
        %p598 = pneg %p223
        %p599 = pneg %p247
        %p600 = pneg %p244
        %p601 = pneg %p268
        %p602 = pneg %p265
        %p603 = pneg %p289
        %p604 = pneg %p286
        %p605 = pneg %p310
        %p606 = pneg %p307
        %p607 = pneg %p331
        %p608 = pneg %p328
        %p609 = pneg %p352
        %p610 = pneg %p349
        %p611 = pneg %p373
        %p612 = pneg %p370
        %p613 = pneg %p394
        %p614 = pneg %p391
        %p615 = pneg %p415
        %p616 = pneg %p412
        %p617 = pneg %p436
        %p618 = pneg %p433
        %p619 = pneg %p462
        %p620 = pneg %p459
        %s621 = sand.u32 %s449, 1
        %s622 = scalar_lea.sflag [#allocation4], %s621
        %s623 = sand.u32 %s449, 1
        %s624 = scalar_lea.vmem [#allocation3], %s623
        %p625 = pneg %p488
        %p626 = pneg %p485
        %p627 = scmp.lt.s32.totalorder %s37, 1
        %s628 = scalar_select %p627, %s37, 1
        %s629 = scalar_lea.vmem %s20, %s628
        %p630 = scmp.lt.s32.totalorder %s37, 1
        %s631 = scalar_select %p630, %s37, 1
        %s632 = smul.addr %s631, 50
        %s633 = smul.addr %s632, 4
        %s634 = scalar_lea.vmem %s0, %s633
        %p635 = scmp.lt.s32.totalorder %s37, 1
        %s636 = scalar_select %p635, %s37, 1
        %s637 = scalar_lea.vmem %s20, %s636
        %v639 = vld [vmem:[%s634] sm:$0xf]
        %v640 = vld [vmem:[%s634 + $0x4] sm:$0xf]
        %v641 = vld [vmem:[%s634 + $0x8] sm:$0xf]
        %v642 = vld [vmem:[%s634 + $0xc] sm:$0xf]
        %v643 = vld [vmem:[%s634 + $0x10] sm:$0xf]
        %v644 = vld [vmem:[%s634 + $0x14] sm:$0xf]
        %v645 = vld [vmem:[%s634 + $0x18] sm:$0xf]
        %v646 = vld [vmem:[%s634 + $0x1c] sm:$0xf]
        %v647 = vld [vmem:[%s634 + $0x20] sm:$0xf]
        %v648 = vld [vmem:[%s634 + $0x24] sm:$0xf]
        %v649 = vld [vmem:[%s634 + $0x28] sm:$0xf]
        %v650 = vld [vmem:[%s634 + $0x2c] sm:$0xf]
        %v651 = vld [vmem:[%s634 + $0x30] sm:$0xf]
        %v652 = vld [vmem:[%s634 + $0x34] sm:$0xf]
        %v653 = vld [vmem:[%s634 + $0x38] sm:$0xf]
        %v654 = vld [vmem:[%s634 + $0x3c] sm:$0xf]
        %v655 = vld [vmem:[%s634 + $0x40] sm:$0xf]
        %v656 = vld [vmem:[%s634 + $0x44] sm:$0xf]
        %v657 = vld [vmem:[%s634 + $0x48] sm:$0xf]
        %v658 = vld [vmem:[%s634 + $0x4c] sm:$0xf]
        %v659 = vld [vmem:[%s634 + $0x50] sm:$0xf]
        %v660 = vld [vmem:[%s634 + $0x54] sm:$0xf]
        %v661 = vld [vmem:[%s634 + $0x58] sm:$0xf]
        %v662 = vld [vmem:[%s634 + $0x5c] sm:$0xf]
        %v663 = vld [vmem:[%s634 + $0x60] sm:$0xf]
        %v664 = vld [vmem:[%s634 + $0x64] sm:$0xf]
        %v665 = vld [vmem:[%s634 + $0x68] sm:$0xf]
        %v666 = vld [vmem:[%s634 + $0x6c] sm:$0xf]
        %v667 = vld [vmem:[%s634 + $0x70] sm:$0xf]
        %v668 = vld [vmem:[%s634 + $0x74] sm:$0xf]
        %v669 = vld [vmem:[%s634 + $0x78] sm:$0xf]
        %v670 = vld [vmem:[%s634 + $0x7c] sm:$0xf]
        %v671 = vld [vmem:[%s634 + $0x80] sm:$0xf]
        %v672 = vld [vmem:[%s634 + $0x84] sm:$0xf]
        %v673 = vld [vmem:[%s634 + $0x88] sm:$0xf]
        %v674 = vld [vmem:[%s634 + $0x8c] sm:$0xf]
        %v675 = vld [vmem:[%s634 + $0x90] sm:$0xf]
        %v676 = vld [vmem:[%s634 + $0x94] sm:$0xf]
        %v677 = vld [vmem:[%s634 + $0x98] sm:$0xf]
        %v678 = vld [vmem:[%s634 + $0x9c] sm:$0xf]
        %v679 = vld [vmem:[%s634 + $0xa0] sm:$0xf]
        %v680 = vld [vmem:[%s634 + $0xa4] sm:$0xf]
        %v681 = vld [vmem:[%s634 + $0xa8] sm:$0xf]
        %v682 = vld [vmem:[%s634 + $0xac] sm:$0xf]
        %v683 = vld [vmem:[%s634 + $0xb0] sm:$0xf]
        %v684 = vld [vmem:[%s634 + $0xb4] sm:$0xf]
        %v685 = vld [vmem:[%s634 + $0xb8] sm:$0xf]
        %v686 = vld [vmem:[%s634 + $0xbc] sm:$0xf]
        %v687 = vld [vmem:[%s634 + $0xc0] sm:$0xf]
        %v688 = vld [vmem:[%s634 + $0xc4] sm:$0xf]
        %v689 = vld [vmem:[%s1] sm:$0xf]
        %v690 = vld [vmem:[%s1 + $0x4] sm:$0xf]
        %v691 = vld [vmem:[%s1 + $0x8] sm:$0xf]
        %v692 = vld [vmem:[%s1 + $0xc] sm:$0xf]
        %v693 = vld [vmem:[%s1 + $0x10] sm:$0xf]
        %v694 = vld [vmem:[%s1 + $0x14] sm:$0xf]
        %v695 = vld [vmem:[%s1 + $0x18] sm:$0xf]
        %v696 = vld [vmem:[%s1 + $0x1c] sm:$0xf]
        %v697 = vld [vmem:[%s2] sm:$0x1]
        %v699 = vperm.slane %v697, 0
        %v751 = vunpack.c.l.b16 %v639
        %v752 = vunpack.c.l.b16 %v640
        %v753 = vunpack.c.l.b16 %v641
        %v754 = vunpack.c.l.b16 %v642
        %v755 = vunpack.c.l.b16 %v643
        %v756 = vunpack.c.l.b16 %v644
        %v757 = vunpack.c.l.b16 %v645
        %v758 = vunpack.c.l.b16 %v646
        %v759 = vunpack.c.l.b16 %v647
        %v760 = vunpack.c.l.b16 %v648
        %v761 = vunpack.c.l.b16 %v649
        %v762 = vunpack.c.l.b16 %v650
        %v763 = vunpack.c.l.b16 %v651
        %v764 = vunpack.c.l.b16 %v652
        %v765 = vunpack.c.l.b16 %v653
        %v766 = vunpack.c.l.b16 %v654
        %v767 = vunpack.c.l.b16 %v655
        %v768 = vunpack.c.l.b16 %v656
        %v769 = vunpack.c.l.b16 %v657
        %v770 = vunpack.c.l.b16 %v658
        %v771 = vunpack.c.l.b16 %v659
        %v772 = vunpack.c.l.b16 %v660
        %v773 = vunpack.c.l.b16 %v661
        %v774 = vunpack.c.l.b16 %v662
        %v775 = vunpack.c.l.b16 %v663
        %v776 = vunpack.c.l.b16 %v664
        %v777 = vunpack.c.l.b16 %v665
        %v778 = vunpack.c.l.b16 %v666
        %v779 = vunpack.c.l.b16 %v667
        %v780 = vunpack.c.l.b16 %v668
        %v781 = vunpack.c.l.b16 %v669
        %v782 = vunpack.c.l.b16 %v670
        %v783 = vunpack.c.l.b16 %v671
        %v784 = vunpack.c.l.b16 %v672
        %v785 = vunpack.c.l.b16 %v673
        %v786 = vunpack.c.l.b16 %v674
        %v787 = vunpack.c.l.b16 %v675
        %v788 = vunpack.c.l.b16 %v676
        %v789 = vunpack.c.l.b16 %v677
        %v790 = vunpack.c.l.b16 %v678
        %v791 = vunpack.c.l.b16 %v679
        %v792 = vunpack.c.l.b16 %v680
        %v793 = vunpack.c.l.b16 %v681
        %v794 = vunpack.c.l.b16 %v682
        %v795 = vunpack.c.l.b16 %v683
        %v796 = vunpack.c.l.b16 %v684
        %v797 = vunpack.c.l.b16 %v685
        %v798 = vunpack.c.l.b16 %v686
        %v799 = vunpack.c.l.b16 %v687
        %v800 = vunpack.c.l.b16 %v688
        %v801 = vpack.c.b16 %v752, %v751
        %v802 = vpack.c.b16 %v754, %v753
        %v803 = vpack.c.b16 %v756, %v755
        %v804 = vpack.c.b16 %v758, %v757
        %v805 = vpack.c.b16 %v760, %v759
        %v806 = vpack.c.b16 %v762, %v761
        %v807 = vpack.c.b16 %v764, %v763
        %v808 = vpack.c.b16 %v766, %v765
        %v809 = vpack.c.b16 %v768, %v767
        %v810 = vpack.c.b16 %v770, %v769
        %v811 = vpack.c.b16 %v772, %v771
        %v812 = vpack.c.b16 %v774, %v773
        %v813 = vpack.c.b16 %v776, %v775
        %v814 = vpack.c.b16 %v778, %v777
        %v815 = vpack.c.b16 %v780, %v779
        %v816 = vpack.c.b16 %v782, %v781
        %v817 = vpack.c.b16 %v784, %v783
        %v818 = vpack.c.b16 %v786, %v785
        %v819 = vpack.c.b16 %v788, %v787
        %v820 = vpack.c.b16 %v790, %v789
        %v821 = vpack.c.b16 %v792, %v791
        %v822 = vpack.c.b16 %v794, %v793
        %v823 = vpack.c.b16 %v796, %v795
        %v824 = vpack.c.b16 %v798, %v797
        %v825 = vpack.c.b16 %v800, %v799
        %v834 = vunpack.c.l.b16 %v689
        %v835 = vunpack.c.l.b16 %v690
        %v836 = vunpack.c.l.b16 %v691
        %v837 = vunpack.c.l.b16 %v692
        %v838 = vunpack.c.l.b16 %v693
        %v839 = vunpack.c.l.b16 %v694
        %v840 = vunpack.c.l.b16 %v695
        %v841 = vunpack.c.l.b16 %v696
        %v842 = vpack.c.b16 %v835, %v834
        %v843 = vpack.c.b16 %v837, %v836
        %v844 = vpack.c.b16 %v839, %v838
        %v845 = vpack.c.b16 %v841, %v840
        %vm850 = vcmask 523264
        %v852 = vsel %vm850, %v801, 0
        %v855 = vsel %vm850, %v802, 0
        %v858 = vsel %vm850, %v803, 0
        %v861 = vsel %vm850, %v804, 0
        %v864 = vsel %vm850, %v805, 0
        %v867 = vsel %vm850, %v806, 0
        %v870 = vsel %vm850, %v807, 0
        %v873 = vsel %vm850, %v808, 0
        %v876 = vsel %vm850, %v809, 0
        %v879 = vsel %vm850, %v810, 0
        %v882 = vsel %vm850, %v811, 0
        %v885 = vsel %vm850, %v812, 0
        %v888 = vsel %vm850, %v813, 0
        %v891 = vsel %vm850, %v814, 0
        %v894 = vsel %vm850, %v815, 0
        %v897 = vsel %vm850, %v816, 0
        %v900 = vsel %vm850, %v817, 0
        %v903 = vsel %vm850, %v818, 0
        %v906 = vsel %vm850, %v819, 0
        %v909 = vsel %vm850, %v820, 0
        %v912 = vsel %vm850, %v821, 0
        %v915 = vsel %vm850, %v822, 0
        %v918 = vsel %vm850, %v823, 0
        %v921 = vsel %vm850, %v824, 0
        %v924 = vsel %vm850, %v825, 0
        %926 = vmatpush.bf16.msra.mxu0 0
        %927 = vmatpush.bf16.msra.mxu0 0
        %928 = vmatpush.bf16.msra.mxu0 0
        %929 = vmatpush.bf16.msra.mxu0 0
        %930 = vmatpush.bf16.msra.mxu0 %v845
        %931 = vmatpush.bf16.msra.mxu0 %v844
        %932 = vmatpush.bf16.msra.mxu0 %v843
        %933 = vmatpush.bf16.msra.mxu0 %v842
        %934 = vmatmul.bf16.gmra.mxu0 %v852
        %v935 = vpop.f32.mrf.mxu0
        %v936 = vadd.f32 %v699, %v935
        %v937 = vpop.f32.mrf.mxu0
        %v938 = vadd.f32 %v699, %v937
        %939 = vmatmul.bf16.gmra.mxu0 %v855
        %v940 = vpop.f32.mrf.mxu0
        %v941 = vadd.f32 %v699, %v940
        %v942 = vpop.f32.mrf.mxu0
        %v943 = vadd.f32 %v699, %v942
        %944 = vmatmul.bf16.gmra.mxu0 %v858
        %v945 = vpop.f32.mrf.mxu0
        %v946 = vadd.f32 %v699, %v945
        %v947 = vpop.f32.mrf.mxu0
        %v948 = vadd.f32 %v699, %v947
        %949 = vmatmul.bf16.gmra.mxu0 %v861
        %v950 = vpop.f32.mrf.mxu0
        %v951 = vadd.f32 %v699, %v950
        %v952 = vpop.f32.mrf.mxu0
        %v953 = vadd.f32 %v699, %v952
        %954 = vmatmul.bf16.gmra.mxu0 %v864
        %v955 = vpop.f32.mrf.mxu0
        %v956 = vadd.f32 %v699, %v955
        %v957 = vpop.f32.mrf.mxu0
        %v958 = vadd.f32 %v699, %v957
        %959 = vmatmul.bf16.gmra.mxu0 %v867
        %v960 = vpop.f32.mrf.mxu0
        %v961 = vadd.f32 %v699, %v960
        %v962 = vpop.f32.mrf.mxu0
        %v963 = vadd.f32 %v699, %v962
        %964 = vmatmul.bf16.gmra.mxu0 %v870
        %v965 = vpop.f32.mrf.mxu0
        %v966 = vadd.f32 %v699, %v965
        %v967 = vpop.f32.mrf.mxu0
        %v968 = vadd.f32 %v699, %v967
        %969 = vmatmul.bf16.gmra.mxu0 %v873
        %v970 = vpop.f32.mrf.mxu0
        %v971 = vadd.f32 %v699, %v970
        %v972 = vpop.f32.mrf.mxu0
        %v973 = vadd.f32 %v699, %v972
        %974 = vmatmul.bf16.gmra.mxu0 %v876
        %v975 = vpop.f32.mrf.mxu0
        %v976 = vadd.f32 %v699, %v975
        %v977 = vpop.f32.mrf.mxu0
        %v978 = vadd.f32 %v699, %v977
        %979 = vmatmul.bf16.gmra.mxu0 %v879
        %v980 = vpop.f32.mrf.mxu0
        %v981 = vadd.f32 %v699, %v980
        %v982 = vpop.f32.mrf.mxu0
        %v983 = vadd.f32 %v699, %v982
        %984 = vmatmul.bf16.gmra.mxu0 %v882
        %v985 = vpop.f32.mrf.mxu0
        %v986 = vadd.f32 %v699, %v985
        %v987 = vpop.f32.mrf.mxu0
        %v988 = vadd.f32 %v699, %v987
        %989 = vmatmul.bf16.gmra.mxu0 %v885
        %v990 = vpop.f32.mrf.mxu0
        %v991 = vadd.f32 %v699, %v990
        %v992 = vpop.f32.mrf.mxu0
        %v993 = vadd.f32 %v699, %v992
        %994 = vmatmul.bf16.gmra.mxu0 %v888
        %v995 = vpop.f32.mrf.mxu0
        %v996 = vadd.f32 %v699, %v995
        %v997 = vpop.f32.mrf.mxu0
        %v998 = vadd.f32 %v699, %v997
        %999 = vmatmul.bf16.gmra.mxu0 %v891
        %v1000 = vpop.f32.mrf.mxu0
        %v1001 = vadd.f32 %v699, %v1000
        %v1002 = vpop.f32.mrf.mxu0
        %v1003 = vadd.f32 %v699, %v1002
        %1004 = vmatmul.bf16.gmra.mxu0 %v894
        %v1005 = vpop.f32.mrf.mxu0
        %v1006 = vadd.f32 %v699, %v1005
        %v1007 = vpop.f32.mrf.mxu0
        %v1008 = vadd.f32 %v699, %v1007
        %1009 = vmatmul.bf16.gmra.mxu0 %v897
        %v1010 = vpop.f32.mrf.mxu0
        %v1011 = vadd.f32 %v699, %v1010
        %v1012 = vpop.f32.mrf.mxu0
        %v1013 = vadd.f32 %v699, %v1012
        %1014 = vmatmul.bf16.gmra.mxu0 %v900
        %v1015 = vpop.f32.mrf.mxu0
        %v1016 = vadd.f32 %v699, %v1015
        %v1017 = vpop.f32.mrf.mxu0
        %v1018 = vadd.f32 %v699, %v1017
        %1019 = vmatmul.bf16.gmra.mxu0 %v903
        %v1020 = vpop.f32.mrf.mxu0
        %v1021 = vadd.f32 %v699, %v1020
        %v1022 = vpop.f32.mrf.mxu0
        %v1023 = vadd.f32 %v699, %v1022
        %1024 = vmatmul.bf16.gmra.mxu0 %v906
        %v1025 = vpop.f32.mrf.mxu0
        %v1026 = vadd.f32 %v699, %v1025
        %v1027 = vpop.f32.mrf.mxu0
        %v1028 = vadd.f32 %v699, %v1027
        %1029 = vmatmul.bf16.gmra.mxu0 %v909
        %v1030 = vpop.f32.mrf.mxu0
        %v1031 = vadd.f32 %v699, %v1030
        %v1032 = vpop.f32.mrf.mxu0
        %v1033 = vadd.f32 %v699, %v1032
        %1034 = vmatmul.bf16.gmra.mxu0 %v912
        %v1035 = vpop.f32.mrf.mxu0
        %v1036 = vadd.f32 %v699, %v1035
        %v1037 = vpop.f32.mrf.mxu0
        %v1038 = vadd.f32 %v699, %v1037
        %1039 = vmatmul.bf16.gmra.mxu0 %v915
        %v1040 = vpop.f32.mrf.mxu0
        %v1041 = vadd.f32 %v699, %v1040
        %v1042 = vpop.f32.mrf.mxu0
        %v1043 = vadd.f32 %v699, %v1042
        %1044 = vmatmul.bf16.gmra.mxu0 %v918
        %v1045 = vpop.f32.mrf.mxu0
        %v1046 = vadd.f32 %v699, %v1045
        %v1047 = vpop.f32.mrf.mxu0
        %v1048 = vadd.f32 %v699, %v1047
        %1049 = vmatmul.bf16.gmra.mxu0 %v921
        %v1050 = vpop.f32.mrf.mxu0
        %v1051 = vadd.f32 %v699, %v1050
        %v1052 = vpop.f32.mrf.mxu0
        %v1053 = vadd.f32 %v699, %v1052
        %1054 = vmatmul.bf16.gmra.mxu0 %v924
        %v1055 = vpop.f32.mrf.mxu0
        %v1056 = vadd.f32 %v699, %v1055
        %v1057 = vpop.f32.mrf.mxu0
        %v1058 = vadd.f32 %v699, %v1057
        %1059 = vdwg.mxu0
        %v1060 = vmax.f32 %v936, 0.0
        %v1061 = vmax.f32 %v938, 0.0
        %v1062 = vmax.f32 %v941, 0.0
        %v1063 = vmax.f32 %v943, 0.0
        %v1064 = vmax.f32 %v946, 0.0
        %v1065 = vmax.f32 %v948, 0.0
        %v1066 = vmax.f32 %v951, 0.0
        %v1067 = vmax.f32 %v953, 0.0
        %v1068 = vmax.f32 %v956, 0.0
        %v1069 = vmax.f32 %v958, 0.0
        %v1070 = vmax.f32 %v961, 0.0
        %v1071 = vmax.f32 %v963, 0.0
        %v1072 = vmax.f32 %v966, 0.0
        %v1073 = vmax.f32 %v968, 0.0
        %v1074 = vmax.f32 %v971, 0.0
        %v1075 = vmax.f32 %v973, 0.0
        %v1076 = vmax.f32 %v976, 0.0
        %v1077 = vmax.f32 %v978, 0.0
        %v1078 = vmax.f32 %v981, 0.0
        %v1079 = vmax.f32 %v983, 0.0
        %v1080 = vmax.f32 %v986, 0.0
        %v1081 = vmax.f32 %v988, 0.0
        %v1082 = vmax.f32 %v991, 0.0
        %v1083 = vmax.f32 %v993, 0.0
        %v1084 = vmax.f32 %v996, 0.0
        %v1085 = vmax.f32 %v998, 0.0
        %v1086 = vmax.f32 %v1001, 0.0
        %v1087 = vmax.f32 %v1003, 0.0
        %v1088 = vmax.f32 %v1006, 0.0
        %v1089 = vmax.f32 %v1008, 0.0
        %v1090 = vmax.f32 %v1011, 0.0
        %v1091 = vmax.f32 %v1013, 0.0
        %v1092 = vmax.f32 %v1016, 0.0
        %v1093 = vmax.f32 %v1018, 0.0
        %v1094 = vmax.f32 %v1021, 0.0
        %v1095 = vmax.f32 %v1023, 0.0
        %v1096 = vmax.f32 %v1026, 0.0
        %v1097 = vmax.f32 %v1028, 0.0
        %v1098 = vmax.f32 %v1031, 0.0
        %v1099 = vmax.f32 %v1033, 0.0
        %v1100 = vmax.f32 %v1036, 0.0
        %v1101 = vmax.f32 %v1038, 0.0
        %v1102 = vmax.f32 %v1041, 0.0
        %v1103 = vmax.f32 %v1043, 0.0
        %v1104 = vmax.f32 %v1046, 0.0
        %v1105 = vmax.f32 %v1048, 0.0
        %v1106 = vmax.f32 %v1051, 0.0
        %v1107 = vmax.f32 %v1053, 0.0
        %v1108 = vmax.f32 %v1056, 0.0
        %v1109 = vmax.f32 %v1058, 0.0
        %vm1123 = vcmask 1043456
        %v1124 = vrot.slane %v1072, 4
        %v1125 = vrot.slane %v1073, 4
        %v1126 = vsel %vm1123, %v1124, %v1125
        %v1127 = vrot.slane %v1074, 4
        %v1128 = vsel %vm1123, %v1125, %v1127
        %v1129 = vrot.slane %v1075, 4
        %v1130 = vsel %vm1123, %v1127, %v1129
        %v1131 = vrot.slane %v1076, 4
        %v1132 = vsel %vm1123, %v1129, %v1131
        %v1133 = vrot.slane %v1077, 4
        %v1134 = vsel %vm1123, %v1131, %v1133
        %v1135 = vrot.slane %v1078, 4
        %v1136 = vsel %vm1123, %v1133, %v1135
        %v1137 = vrot.slane %v1079, 4
        %v1138 = vsel %vm1123, %v1135, %v1137
        %v1139 = vrot.slane %v1080, 4
        %v1140 = vsel %vm1123, %v1137, %v1139
        %v1141 = vrot.slane %v1081, 4
        %v1142 = vsel %vm1123, %v1139, %v1141
        %v1143 = vrot.slane %v1082, 4
        %v1144 = vsel %vm1123, %v1141, %v1143
        %v1145 = vrot.slane %v1083, 4
        %v1146 = vsel %vm1123, %v1143, %v1145
        %v1147 = vrot.slane %v1084, 4
        %v1148 = vsel %vm1123, %v1145, %v1147
        %v1162 = vmax.f32 %v1060, %v1126
        %v1163 = vmax.f32 %v1061, %v1128
        %v1164 = vmax.f32 %v1062, %v1130
        %v1165 = vmax.f32 %v1063, %v1132
        %v1166 = vmax.f32 %v1064, %v1134
        %v1167 = vmax.f32 %v1065, %v1136
        %v1168 = vmax.f32 %v1066, %v1138
        %v1169 = vmax.f32 %v1067, %v1140
        %v1170 = vmax.f32 %v1068, %v1142
        %v1171 = vmax.f32 %v1069, %v1144
        %v1172 = vmax.f32 %v1070, %v1146
        %v1173 = vmax.f32 %v1071, %v1148
        %v1174 = vmax.f32 %v1072, %v1147
        %v1188 = vrot.slane %v1097, 4
        %v1189 = vrot.slane %v1098, 4
        %v1190 = vsel %vm1123, %v1188, %v1189
        %v1191 = vrot.slane %v1099, 4
        %v1192 = vsel %vm1123, %v1189, %v1191
        %v1193 = vrot.slane %v1100, 4
        %v1194 = vsel %vm1123, %v1191, %v1193
        %v1195 = vrot.slane %v1101, 4
        %v1196 = vsel %vm1123, %v1193, %v1195
        %v1197 = vrot.slane %v1102, 4
        %v1198 = vsel %vm1123, %v1195, %v1197
        %v1199 = vrot.slane %v1103, 4
        %v1200 = vsel %vm1123, %v1197, %v1199
        %v1201 = vrot.slane %v1104, 4
        %v1202 = vsel %vm1123, %v1199, %v1201
        %v1203 = vrot.slane %v1105, 4
        %v1204 = vsel %vm1123, %v1201, %v1203
        %v1205 = vrot.slane %v1106, 4
        %v1206 = vsel %vm1123, %v1203, %v1205
        %v1207 = vrot.slane %v1107, 4
        %v1208 = vsel %vm1123, %v1205, %v1207
        %v1209 = vrot.slane %v1108, 4
        %v1210 = vsel %vm1123, %v1207, %v1209
        %v1211 = vrot.slane %v1109, 4
        %v1212 = vsel %vm1123, %v1209, %v1211
        %v1226 = vmax.f32 %v1085, %v1190
        %v1227 = vmax.f32 %v1086, %v1192
        %v1228 = vmax.f32 %v1087, %v1194
        %v1229 = vmax.f32 %v1088, %v1196
        %v1230 = vmax.f32 %v1089, %v1198
        %v1231 = vmax.f32 %v1090, %v1200
        %v1232 = vmax.f32 %v1091, %v1202
        %v1233 = vmax.f32 %v1092, %v1204
        %v1234 = vmax.f32 %v1093, %v1206
        %v1235 = vmax.f32 %v1094, %v1208
        %v1236 = vmax.f32 %v1095, %v1210
        %v1237 = vmax.f32 %v1096, %v1212
        %v1238 = vmax.f32 %v1097, %v1211
        %v1239 = vmax.f32 %v1162, %v1226
        %v1240 = vmax.f32 %v1163, %v1227
        %v1241 = vmax.f32 %v1164, %v1228
        %v1242 = vmax.f32 %v1165, %v1229
        %v1243 = vmax.f32 %v1166, %v1230
        %v1244 = vmax.f32 %v1167, %v1231
        %v1245 = vmax.f32 %v1168, %v1232
        %v1246 = vmax.f32 %v1169, %v1233
        %v1247 = vmax.f32 %v1170, %v1234
        %v1248 = vmax.f32 %v1171, %v1235
        %v1249 = vmax.f32 %v1172, %v1236
        %v1250 = vmax.f32 %v1173, %v1237
        %v1251 = vmax.f32 %v1174, %v1238
        %v1252 = vld [vmem:[%s3] sm:$0xf]
        %v1253 = vld [vmem:[%s3 + $0x4] sm:$0xf]
        %v1254 = vld [vmem:[%s3 + $0x8] sm:$0xf]
        %v1255 = vld [vmem:[%s3 + $0xc] sm:$0xf]
        %v1256 = vld [vmem:[%s3 + $0x10] sm:$0xf]
        %v1257 = vld [vmem:[%s3 + $0x14] sm:$0xf]
        %v1258 = vld [vmem:[%s3 + $0x18] sm:$0xf]
        %v1259 = vld [vmem:[%s3 + $0x1c] sm:$0xf]
        %v1260 = vld [vmem:[%s3 + $0x20] sm:$0xf]
        %v1261 = vld [vmem:[%s3 + $0x24] sm:$0xf]
        %v1262 = vld [vmem:[%s3 + $0x28] sm:$0xf]
        %v1263 = vld [vmem:[%s3 + $0x2c] sm:$0xf]
        %v1264 = vld [vmem:[%s3 + $0x30] sm:$0xf]
        %v1265 = vld [vmem:[%s3 + $0x34] sm:$0xf]
        %v1266 = vld [vmem:[%s3 + $0x38] sm:$0xf]
        %v1267 = vld [vmem:[%s3 + $0x3c] sm:$0xf]
        %v1268 = vld [vmem:[%s3 + $0x40] sm:$0xf]
        %v1269 = vld [vmem:[%s3 + $0x44] sm:$0xf]
        %v1270 = vld [vmem:[%s3 + $0x48] sm:$0xf]
        %v1271 = vld [vmem:[%s3 + $0x4c] sm:$0xf]
        %v1272 = vld [vmem:[%s3 + $0x50] sm:$0xf]
        %v1273 = vld [vmem:[%s3 + $0x54] sm:$0xf]
        %v1274 = vld [vmem:[%s3 + $0x58] sm:$0xf]
        %v1275 = vld [vmem:[%s3 + $0x5c] sm:$0xf]
        %v1276 = vld [vmem:[%s3 + $0x60] sm:$0xf]
        %v1277 = vld [vmem:[%s3 + $0x64] sm:$0xf]
        %v1278 = vld [vmem:[%s3 + $0x68] sm:$0xf]
        %v1279 = vld [vmem:[%s3 + $0x6c] sm:$0xf]
        %v1280 = vld [vmem:[%s3 + $0x70] sm:$0xf]
        %v1281 = vld [vmem:[%s3 + $0x74] sm:$0xf]
        %v1282 = vld [vmem:[%s3 + $0x78] sm:$0xf]
        %v1283 = vld [vmem:[%s3 + $0x7c] sm:$0xf]
        %v1284 = vld [vmem:[%s3 + $0x80] sm:$0xf]
        %v1285 = vld [vmem:[%s3 + $0x84] sm:$0xf]
        %v1286 = vld [vmem:[%s3 + $0x88] sm:$0xf]
        %v1287 = vld [vmem:[%s3 + $0x8c] sm:$0xf]
        %v1288 = vld [vmem:[%s3 + $0x90] sm:$0xf]
        %v1289 = vld [vmem:[%s3 + $0x94] sm:$0xf]
        %v1290 = vld [vmem:[%s3 + $0x98] sm:$0xf]
        %v1291 = vld [vmem:[%s3 + $0x9c] sm:$0xf]
        %v1292 = vld [vmem:[%s3 + $0xa0] sm:$0xf]
        %v1293 = vld [vmem:[%s3 + $0xa4] sm:$0xf]
        %v1294 = vld [vmem:[%s3 + $0xa8] sm:$0xf]
        %v1295 = vld [vmem:[%s3 + $0xac] sm:$0xf]
        %v1296 = vld [vmem:[%s3 + $0xb0] sm:$0xf]
        %v1297 = vld [vmem:[%s3 + $0xb4] sm:$0xf]
        %v1298 = vld [vmem:[%s3 + $0xb8] sm:$0xf]
        %v1299 = vld [vmem:[%s3 + $0xbc] sm:$0xf]
        %v1300 = vld [vmem:[%s3 + $0xc0] sm:$0xf]
        %v1301 = vld [vmem:[%s3 + $0xc4] sm:$0xf]
        %v1302 = vpack.c.bf16 %v1240, %v1239
        %v1303 = vpack.c.bf16 %v1242, %v1241
        %v1304 = vpack.c.bf16 %v1244, %v1243
        %v1305 = vpack.c.bf16 %v1246, %v1245
        %v1306 = vpack.c.bf16 %v1248, %v1247
        %v1307 = vpack.c.bf16 %v1250, %v1249
        %v1308 = vpack.c.bf16 %v1251, %v1251
        %v1359 = vunpack.c.l.b16 %v1252
        %v1360 = vunpack.c.l.b16 %v1253
        %v1361 = vunpack.c.l.b16 %v1254
        %v1362 = vunpack.c.l.b16 %v1255
        %v1363 = vunpack.c.l.b16 %v1256
        %v1364 = vunpack.c.l.b16 %v1257
        %v1365 = vunpack.c.l.b16 %v1258
        %v1366 = vunpack.c.l.b16 %v1259
        %v1367 = vunpack.c.l.b16 %v1260
        %v1368 = vunpack.c.l.b16 %v1261
        %v1369 = vunpack.c.l.b16 %v1262
        %v1370 = vunpack.c.l.b16 %v1263
        %v1371 = vunpack.c.l.b16 %v1264
        %v1372 = vunpack.c.l.b16 %v1265
        %v1373 = vunpack.c.l.b16 %v1266
        %v1374 = vunpack.c.l.b16 %v1267
        %v1375 = vunpack.c.l.b16 %v1268
        %v1376 = vunpack.c.l.b16 %v1269
        %v1377 = vunpack.c.l.b16 %v1270
        %v1378 = vunpack.c.l.b16 %v1271
        %v1379 = vunpack.c.l.b16 %v1272
        %v1380 = vunpack.c.l.b16 %v1273
        %v1381 = vunpack.c.l.b16 %v1274
        %v1382 = vunpack.c.l.b16 %v1275
        %v1383 = vunpack.c.l.b16 %v1276
        %v1384 = vunpack.c.l.b16 %v1277
        %v1385 = vunpack.c.l.b16 %v1278
        %v1386 = vunpack.c.l.b16 %v1279
        %v1387 = vunpack.c.l.b16 %v1280
        %v1388 = vunpack.c.l.b16 %v1281
        %v1389 = vunpack.c.l.b16 %v1282
        %v1390 = vunpack.c.l.b16 %v1283
        %v1391 = vunpack.c.l.b16 %v1284
        %v1392 = vunpack.c.l.b16 %v1285
        %v1393 = vunpack.c.l.b16 %v1286
        %v1394 = vunpack.c.l.b16 %v1287
        %v1395 = vunpack.c.l.b16 %v1288
        %v1396 = vunpack.c.l.b16 %v1289
        %v1397 = vunpack.c.l.b16 %v1290
        %v1398 = vunpack.c.l.b16 %v1291
        %v1399 = vunpack.c.l.b16 %v1292
        %v1400 = vunpack.c.l.b16 %v1293
        %v1401 = vunpack.c.l.b16 %v1294
        %v1402 = vunpack.c.l.b16 %v1295
        %v1403 = vunpack.c.l.b16 %v1296
        %v1404 = vunpack.c.l.b16 %v1297
        %v1405 = vunpack.c.l.b16 %v1298
        %v1406 = vunpack.c.l.b16 %v1299
        %v1407 = vunpack.c.l.b16 %v1300
        %v1408 = vunpack.c.l.b16 %v1301
        %v1409 = vpack.c.b16 %v1360, %v1359
        %v1410 = vpack.c.b16 %v1362, %v1361
        %v1411 = vpack.c.b16 %v1364, %v1363
        %v1412 = vpack.c.b16 %v1366, %v1365
        %v1413 = vpack.c.b16 %v1368, %v1367
        %v1414 = vpack.c.b16 %v1370, %v1369
        %v1415 = vpack.c.b16 %v1372, %v1371
        %v1416 = vpack.c.b16 %v1374, %v1373
        %v1417 = vpack.c.b16 %v1376, %v1375
        %v1418 = vpack.c.b16 %v1378, %v1377
        %v1419 = vpack.c.b16 %v1380, %v1379
        %v1420 = vpack.c.b16 %v1382, %v1381
        %v1421 = vpack.c.b16 %v1384, %v1383
        %v1422 = vpack.c.b16 %v1386, %v1385
        %v1423 = vpack.c.b16 %v1388, %v1387
        %v1424 = vpack.c.b16 %v1390, %v1389
        %v1425 = vpack.c.b16 %v1392, %v1391
        %v1426 = vpack.c.b16 %v1394, %v1393
        %v1427 = vpack.c.b16 %v1396, %v1395
        %v1428 = vpack.c.b16 %v1398, %v1397
        %v1429 = vpack.c.b16 %v1400, %v1399
        %v1430 = vpack.c.b16 %v1402, %v1401
        %v1431 = vpack.c.b16 %v1404, %v1403
        %v1432 = vpack.c.b16 %v1406, %v1405
        %v1433 = vpack.c.b16 %v1408, %v1407
        %vm1434 = vcmask 818176
        %v1436 = vsel %vm1434, %v1409, 0
        %v1439 = vsel %vm1434, %v1410, 0
        %v1442 = vsel %vm1434, %v1411, 0
        %v1445 = vsel %vm1434, %v1412, 0
        %v1448 = vsel %vm1434, %v1413, 0
        %v1451 = vsel %vm1434, %v1414, 0
        %v1454 = vsel %vm1434, %v1415, 0
        %v1457 = vsel %vm1434, %v1416, 0
        %v1460 = vsel %vm1434, %v1417, 0
        %v1463 = vsel %vm1434, %v1418, 0
        %v1466 = vsel %vm1434, %v1419, 0
        %v1469 = vsel %vm1434, %v1420, 0
        %v1472 = vsel %vm1434, %v1421, 0
        %v1475 = vsel %vm1434, %v1422, 0
        %v1478 = vsel %vm1434, %v1423, 0
        %v1481 = vsel %vm1434, %v1424, 0
        %v1484 = vsel %vm1434, %v1425, 0
        %v1487 = vsel %vm1434, %v1426, 0
        %v1490 = vsel %vm1434, %v1427, 0
        %v1493 = vsel %vm1434, %v1428, 0
        %v1496 = vsel %vm1434, %v1429, 0
        %v1499 = vsel %vm1434, %v1430, 0
        %v1502 = vsel %vm1434, %v1431, 0
        %v1505 = vsel %vm1434, %v1432, 0
        %v1508 = vsel %vm1434, %v1433, 0
        %vm1510 = vcmask 1041408
        %v1512 = vsel %vm1510, %v1308, 0
        %1514 = vmatpush.bf16.msra.mxu0 0
        %1515 = vmatpush.bf16.msra.mxu0 %v1512
        %1516 = vmatpush.bf16.msra.mxu0 %v1307
        %1517 = vmatpush.bf16.msra.mxu0 %v1306
        %1518 = vmatpush.bf16.msra.mxu0 %v1305
        %1519 = vmatpush.bf16.msra.mxu0 %v1304
        %1520 = vmatpush.bf16.msra.mxu0 %v1303
        %1521 = vmatpush.bf16.msra.mxu0 %v1302
        %1522 = vmatmul.bf16.gmra.mxu0 %v1436
        %v1523 = vpop.f32.mrf.mxu0
        %v1524 = vadd.f32 0.0, %v1523
        %v1525 = vpop.f32.mrf.mxu0
        %v1526 = vadd.f32 0.0, %v1525
        %1527 = vmatmul.bf16.gmra.mxu0 %v1439
        %v1528 = vpop.f32.mrf.mxu0
        %v1529 = vadd.f32 0.0, %v1528
        %v1530 = vpop.f32.mrf.mxu0
        %v1531 = vadd.f32 0.0, %v1530
        %1532 = vmatmul.bf16.gmra.mxu0 %v1442
        %v1533 = vpop.f32.mrf.mxu0
        %v1534 = vadd.f32 0.0, %v1533
        %v1535 = vpop.f32.mrf.mxu0
        %v1536 = vadd.f32 0.0, %v1535
        %1537 = vmatmul.bf16.gmra.mxu0 %v1445
        %v1538 = vpop.f32.mrf.mxu0
        %v1539 = vadd.f32 0.0, %v1538
        %v1540 = vpop.f32.mrf.mxu0
        %v1541 = vadd.f32 0.0, %v1540
        %1542 = vmatmul.bf16.gmra.mxu0 %v1448
        %v1543 = vpop.f32.mrf.mxu0
        %v1544 = vadd.f32 0.0, %v1543
        %v1545 = vpop.f32.mrf.mxu0
        %v1546 = vadd.f32 0.0, %v1545
        %1547 = vmatmul.bf16.gmra.mxu0 %v1451
        %v1548 = vpop.f32.mrf.mxu0
        %v1549 = vadd.f32 0.0, %v1548
        %v1550 = vpop.f32.mrf.mxu0
        %v1551 = vadd.f32 0.0, %v1550
        %1552 = vmatmul.bf16.gmra.mxu0 %v1454
        %v1553 = vpop.f32.mrf.mxu0
        %v1554 = vadd.f32 0.0, %v1553
        %v1555 = vpop.f32.mrf.mxu0
        %v1556 = vadd.f32 0.0, %v1555
        %1557 = vmatmul.bf16.gmra.mxu0 %v1457
        %v1558 = vpop.f32.mrf.mxu0
        %v1559 = vadd.f32 0.0, %v1558
        %v1560 = vpop.f32.mrf.mxu0
        %v1561 = vadd.f32 0.0, %v1560
        %1562 = vmatmul.bf16.gmra.mxu0 %v1460
        %v1563 = vpop.f32.mrf.mxu0
        %v1564 = vadd.f32 0.0, %v1563
        %v1565 = vpop.f32.mrf.mxu0
        %v1566 = vadd.f32 0.0, %v1565
        %1567 = vmatmul.bf16.gmra.mxu0 %v1463
        %v1568 = vpop.f32.mrf.mxu0
        %v1569 = vadd.f32 0.0, %v1568
        %v1570 = vpop.f32.mrf.mxu0
        %v1571 = vadd.f32 0.0, %v1570
        %1572 = vmatmul.bf16.gmra.mxu0 %v1466
        %v1573 = vpop.f32.mrf.mxu0
        %v1574 = vadd.f32 0.0, %v1573
        %v1575 = vpop.f32.mrf.mxu0
        %v1576 = vadd.f32 0.0, %v1575
        %1577 = vmatmul.bf16.gmra.mxu0 %v1469
        %v1578 = vpop.f32.mrf.mxu0
        %v1579 = vadd.f32 0.0, %v1578
        %v1580 = vpop.f32.mrf.mxu0
        %v1581 = vadd.f32 0.0, %v1580
        %1582 = vmatmul.bf16.gmra.mxu0 %v1472
        %v1583 = vpop.f32.mrf.mxu0
        %v1584 = vadd.f32 0.0, %v1583
        %v1585 = vpop.f32.mrf.mxu0
        %v1586 = vadd.f32 0.0, %v1585
        %1587 = vmatmul.bf16.gmra.mxu0 %v1475
        %v1588 = vpop.f32.mrf.mxu0
        %v1589 = vadd.f32 0.0, %v1588
        %v1590 = vpop.f32.mrf.mxu0
        %v1591 = vadd.f32 0.0, %v1590
        %1592 = vmatmul.bf16.gmra.mxu0 %v1478
        %v1593 = vpop.f32.mrf.mxu0
        %v1594 = vadd.f32 0.0, %v1593
        %v1595 = vpop.f32.mrf.mxu0
        %v1596 = vadd.f32 0.0, %v1595
        %1597 = vmatmul.bf16.gmra.mxu0 %v1481
        %v1598 = vpop.f32.mrf.mxu0
        %v1599 = vadd.f32 0.0, %v1598
        %v1600 = vpop.f32.mrf.mxu0
        %v1601 = vadd.f32 0.0, %v1600
        %1602 = vmatmul.bf16.gmra.mxu0 %v1484
        %v1603 = vpop.f32.mrf.mxu0
        %v1604 = vadd.f32 0.0, %v1603
        %v1605 = vpop.f32.mrf.mxu0
        %v1606 = vadd.f32 0.0, %v1605
        %1607 = vmatmul.bf16.gmra.mxu0 %v1487
        %v1608 = vpop.f32.mrf.mxu0
        %v1609 = vadd.f32 0.0, %v1608
        %v1610 = vpop.f32.mrf.mxu0
        %v1611 = vadd.f32 0.0, %v1610
        %1612 = vmatmul.bf16.gmra.mxu0 %v1490
        %v1613 = vpop.f32.mrf.mxu0
        %v1614 = vadd.f32 0.0, %v1613
        %v1615 = vpop.f32.mrf.mxu0
        %v1616 = vadd.f32 0.0, %v1615
        %1617 = vmatmul.bf16.gmra.mxu0 %v1493
        %v1618 = vpop.f32.mrf.mxu0
        %v1619 = vadd.f32 0.0, %v1618
        %v1620 = vpop.f32.mrf.mxu0
        %v1621 = vadd.f32 0.0, %v1620
        %1622 = vmatmul.bf16.gmra.mxu0 %v1496
        %v1623 = vpop.f32.mrf.mxu0
        %v1624 = vadd.f32 0.0, %v1623
        %v1625 = vpop.f32.mrf.mxu0
        %v1626 = vadd.f32 0.0, %v1625
        %1627 = vmatmul.bf16.gmra.mxu0 %v1499
        %v1628 = vpop.f32.mrf.mxu0
        %v1629 = vadd.f32 0.0, %v1628
        %v1630 = vpop.f32.mrf.mxu0
        %v1631 = vadd.f32 0.0, %v1630
        %1632 = vmatmul.bf16.gmra.mxu0 %v1502
        %v1633 = vpop.f32.mrf.mxu0
        %v1634 = vadd.f32 0.0, %v1633
        %v1635 = vpop.f32.mrf.mxu0
        %v1636 = vadd.f32 0.0, %v1635
        %1637 = vmatmul.bf16.gmra.mxu0 %v1505
        %v1638 = vpop.f32.mrf.mxu0
        %v1639 = vadd.f32 0.0, %v1638
        %v1640 = vpop.f32.mrf.mxu0
        %v1641 = vadd.f32 0.0, %v1640
        %1642 = vmatmul.bf16.gmra.mxu0 %v1508
        %v1643 = vpop.f32.mrf.mxu0
        %v1644 = vadd.f32 0.0, %v1643
        %v1645 = vpop.f32.mrf.mxu0
        %v1646 = vadd.f32 0.0, %v1645
        %1647 = vdwg.mxu0
        %v1648 = vld [vmem:[%s4] sm:$0xf]
        %v1649 = vld [vmem:[%s4 + $0x4] sm:$0xf]
        %v1650 = vld [vmem:[%s4 + $0x8] sm:$0xf]
        %v1651 = vld [vmem:[%s4 + $0xc] sm:$0xf]
        %v1652 = vpack.c.bf16 %v1526, %v1524
        %v1653 = vpack.c.bf16 %v1531, %v1529
        %v1654 = vld [vmem:[%s4 + $0x10] sm:$0xf]
        %v1655 = vld [vmem:[%s4 + $0x14] sm:$0xf]
        %v1656 = vld [vmem:[%s4 + $0x18] sm:$0xf]
        %v1657 = vld [vmem:[%s4 + $0x1c] sm:$0xf]
        %v1658 = vpack.c.bf16 %v1534, %v1531
        %v1659 = vpack.c.bf16 %v1539, %v1536
        %vm1660 = vsmask.f32 7424
        %v1662 = vshrl.u32 %v1658, 16
        %v1664 = vshll.u32 %v1658, 16
        %v1666 = vrot.slane %v1664, 1
        %v1667 = vor.u32 %v1662, %v1666
        %v1669 = vshll.u32 %v1659, 16
        %v1671 = vrot.slane %v1669, 1
        %v1672 = vsel %vm1660, %v1667, %v1671
        %v1673 = vshrl.u32 %v1659, 16
        %v1675 = vor.u32 %v1673, %v1671
        %v1680 = vunpack.c.l.b16 %v1654
        %v1681 = vunpack.c.l.b16 %v1655
        %v1682 = vunpack.c.l.b16 %v1656
        %v1683 = vunpack.c.l.b16 %v1657
        %v1684 = vpack.c.b16 %v1681, %v1680
        %v1685 = vpack.c.b16 %v1683, %v1682
        %vm1688 = vcmask 261120
        %v1690 = vsel %vm1688, %v1672, 0
        %v1693 = vsel %vm1688, %v1675, 0
        %1695 = vmatpush.bf16.msra.mxu0 0
        %1696 = vmatpush.bf16.msra.mxu0 0
        %1697 = vmatpush.bf16.msra.mxu0 0
        %1698 = vmatpush.bf16.msra.mxu0 0
        %1699 = vmatpush.bf16.msra.mxu0 0
        %1700 = vmatpush.bf16.msra.mxu0 0
        %1701 = vmatpush.bf16.msra.mxu0 %v1685
        %1702 = vmatpush.bf16.msra.mxu0 %v1684
        %1703 = vmatmul.bf16.gmra.mxu0 %v1690
        %v1704 = vpop.f32.mrf.mxu0
        %v1705 = vadd.f32 0.0, %v1704
        %v1706 = vpop.f32.mrf.mxu0
        %v1707 = vadd.f32 0.0, %v1706
        %1708 = vmatmul.bf16.gmra.mxu0 %v1693
        %v1709 = vpop.f32.mrf.mxu0
        %v1710 = vadd.f32 0.0, %v1709
        %v1711 = vpop.f32.mrf.mxu0
        %v1712 = vadd.f32 0.0, %v1711
        %1713 = vdwg.mxu0
        %v1718 = vunpack.c.l.b16 %v1648
        %v1719 = vunpack.c.l.b16 %v1649
        %v1720 = vunpack.c.l.b16 %v1650
        %v1721 = vunpack.c.l.b16 %v1651
        %v1722 = vpack.c.b16 %v1719, %v1718
        %v1723 = vpack.c.b16 %v1721, %v1720
        %v1727 = vsel %vm1688, %v1652, 0
        %v1730 = vsel %vm1688, %v1653, 0
        %1732 = vmatpush.bf16.msra.mxu0 0
        %1733 = vmatpush.bf16.msra.mxu0 0
        %1734 = vmatpush.bf16.msra.mxu0 0
        %1735 = vmatpush.bf16.msra.mxu0 0
        %1736 = vmatpush.bf16.msra.mxu0 0
        %1737 = vmatpush.bf16.msra.mxu0 0
        %1738 = vmatpush.bf16.msra.mxu0 %v1723
        %1739 = vmatpush.bf16.msra.mxu0 %v1722
        %1740 = vmatmul.bf16.gmra.mxu0 %v1727
        %v1741 = vpop.f32.mrf.mxu0
        %v1742 = vadd.f32 %v1705, %v1741
        %v1743 = vpop.f32.mrf.mxu0
        %v1744 = vadd.f32 %v1707, %v1743
        %1745 = vmatmul.bf16.gmra.mxu0 %v1730
        %v1746 = vpop.f32.mrf.mxu0
        %v1747 = vadd.f32 %v1710, %v1746
        %v1748 = vpop.f32.mrf.mxu0
        %v1749 = vadd.f32 %v1712, %v1748
        %1750 = vdwg.mxu0
        %v1751 = vld [vmem:[%s4 + $0x20] sm:$0xf]
        %v1752 = vld [vmem:[%s4 + $0x24] sm:$0xf]
        %v1753 = vld [vmem:[%s4 + $0x28] sm:$0xf]
        %v1754 = vld [vmem:[%s4 + $0x2c] sm:$0xf]
        %v1755 = vpack.c.bf16 %v1541, %v1539
        %v1756 = vpack.c.bf16 %v1546, %v1544
        %vm1759 = vcmask 1046528
        %v1760 = vrot.slane %v1755, 1
        %v1761 = vrot.slane %v1756, 1
        %v1762 = vsel %vm1759, %v1760, %v1761
        %v1767 = vunpack.c.l.b16 %v1751
        %v1768 = vunpack.c.l.b16 %v1752
        %v1769 = vunpack.c.l.b16 %v1753
        %v1770 = vunpack.c.l.b16 %v1754
        %v1771 = vpack.c.b16 %v1768, %v1767
        %v1772 = vpack.c.b16 %v1770, %v1769
        %v1776 = vsel %vm1688, %v1762, 0
        %v1779 = vsel %vm1688, %v1761, 0
        %1781 = vmatpush.bf16.msra.mxu0 0
        %1782 = vmatpush.bf16.msra.mxu0 0
        %1783 = vmatpush.bf16.msra.mxu0 0
        %1784 = vmatpush.bf16.msra.mxu0 0
        %1785 = vmatpush.bf16.msra.mxu0 0
        %1786 = vmatpush.bf16.msra.mxu0 0
        %1787 = vmatpush.bf16.msra.mxu0 %v1772
        %1788 = vmatpush.bf16.msra.mxu0 %v1771
        %1789 = vmatmul.bf16.gmra.mxu0 %v1776
        %v1790 = vpop.f32.mrf.mxu0
        %v1791 = vadd.f32 0.0, %v1790
        %v1792 = vpop.f32.mrf.mxu0
        %v1793 = vadd.f32 0.0, %v1792
        %1794 = vmatmul.bf16.gmra.mxu0 %v1779
        %v1795 = vpop.f32.mrf.mxu0
        %v1796 = vadd.f32 0.0, %v1795
        %v1797 = vpop.f32.mrf.mxu0
        %v1798 = vadd.f32 0.0, %v1797
        %1799 = vdwg.mxu0
        %v1800 = vadd.f32 %v1742, %v1791
        %v1801 = vadd.f32 %v1744, %v1793
        %v1802 = vadd.f32 %v1747, %v1796
        %v1803 = vadd.f32 %v1749, %v1798
        %v1804 = vld [vmem:[%s4 + $0x30] sm:$0xf]
        %v1805 = vld [vmem:[%s4 + $0x34] sm:$0xf]
        %v1806 = vld [vmem:[%s4 + $0x38] sm:$0xf]
        %v1807 = vld [vmem:[%s4 + $0x3c] sm:$0xf]
        %v1808 = vpack.c.bf16 %v1549, %v1546
        %v1809 = vpack.c.bf16 %v1554, %v1551
        %vm1810 = vsmask.f32 6400
        %v1812 = vshrl.u32 %v1808, 16
        %v1814 = vrot.slane %v1812, 1
        %v1815 = vshll.u32 %v1808, 16
        %v1817 = vrot.slane %v1815, 2
        %v1818 = vor.u32 %v1814, %v1817
        %v1820 = vshrl.u32 %v1809, 16
        %v1822 = vrot.slane %v1820, 1
        %v1823 = vshll.u32 %v1809, 16
        %v1825 = vrot.slane %v1823, 2
        %v1826 = vor.u32 %v1822, %v1825
        %v1827 = vsel %vm1810, %v1818, %v1826
        %v1832 = vunpack.c.l.b16 %v1804
        %v1833 = vunpack.c.l.b16 %v1805
        %v1834 = vunpack.c.l.b16 %v1806
        %v1835 = vunpack.c.l.b16 %v1807
        %v1836 = vpack.c.b16 %v1833, %v1832
        %v1837 = vpack.c.b16 %v1835, %v1834
        %v1841 = vsel %vm1688, %v1827, 0
        %v1844 = vsel %vm1688, %v1826, 0
        %1846 = vmatpush.bf16.msra.mxu0 0
        %1847 = vmatpush.bf16.msra.mxu0 0
        %1848 = vmatpush.bf16.msra.mxu0 0
        %1849 = vmatpush.bf16.msra.mxu0 0
        %1850 = vmatpush.bf16.msra.mxu0 0
        %1851 = vmatpush.bf16.msra.mxu0 0
        %1852 = vmatpush.bf16.msra.mxu0 %v1837
        %1853 = vmatpush.bf16.msra.mxu0 %v1836
        %1854 = vmatmul.bf16.gmra.mxu0 %v1841
        %v1855 = vpop.f32.mrf.mxu0
        %v1856 = vadd.f32 0.0, %v1855
        %v1857 = vpop.f32.mrf.mxu0
        %v1858 = vadd.f32 0.0, %v1857
        %1859 = vmatmul.bf16.gmra.mxu0 %v1844
        %v1860 = vpop.f32.mrf.mxu0
        %v1861 = vadd.f32 0.0, %v1860
        %v1862 = vpop.f32.mrf.mxu0
        %v1863 = vadd.f32 0.0, %v1862
        %1864 = vdwg.mxu0
        %v1865 = vadd.f32 %v1800, %v1856
        %v1866 = vadd.f32 %v1801, %v1858
        %v1867 = vadd.f32 %v1802, %v1861
        %v1868 = vadd.f32 %v1803, %v1863
        %v1869 = vld [vmem:[%s4 + $0x40] sm:$0xf]
        %v1870 = vld [vmem:[%s4 + $0x44] sm:$0xf]
        %v1871 = vld [vmem:[%s4 + $0x48] sm:$0xf]
        %v1872 = vld [vmem:[%s4 + $0x4c] sm:$0xf]
        %v1873 = vpack.c.bf16 %v1556, %v1554
        %v1874 = vpack.c.bf16 %v1561, %v1559
        %vm1877 = vcmask 1045504
        %v1878 = vrot.slane %v1873, 2
        %v1879 = vrot.slane %v1874, 2
        %v1880 = vsel %vm1877, %v1878, %v1879
        %v1885 = vunpack.c.l.b16 %v1869
        %v1886 = vunpack.c.l.b16 %v1870
        %v1887 = vunpack.c.l.b16 %v1871
        %v1888 = vunpack.c.l.b16 %v1872
        %v1889 = vpack.c.b16 %v1886, %v1885
        %v1890 = vpack.c.b16 %v1888, %v1887
        %v1894 = vsel %vm1688, %v1880, 0
        %v1897 = vsel %vm1688, %v1879, 0
        %1899 = vmatpush.bf16.msra.mxu0 0
        %1900 = vmatpush.bf16.msra.mxu0 0
        %1901 = vmatpush.bf16.msra.mxu0 0
        %1902 = vmatpush.bf16.msra.mxu0 0
        %1903 = vmatpush.bf16.msra.mxu0 0
        %1904 = vmatpush.bf16.msra.mxu0 0
        %1905 = vmatpush.bf16.msra.mxu0 %v1890
        %1906 = vmatpush.bf16.msra.mxu0 %v1889
        %1907 = vmatmul.bf16.gmra.mxu0 %v1894
        %v1908 = vpop.f32.mrf.mxu0
        %v1909 = vadd.f32 0.0, %v1908
        %v1910 = vpop.f32.mrf.mxu0
        %v1911 = vadd.f32 0.0, %v1910
        %1912 = vmatmul.bf16.gmra.mxu0 %v1897
        %v1913 = vpop.f32.mrf.mxu0
        %v1914 = vadd.f32 0.0, %v1913
        %v1915 = vpop.f32.mrf.mxu0
        %v1916 = vadd.f32 0.0, %v1915
        %1917 = vdwg.mxu0
        %v1918 = vadd.f32 %v1865, %v1909
        %v1919 = vadd.f32 %v1866, %v1911
        %v1920 = vadd.f32 %v1867, %v1914
        %v1921 = vadd.f32 %v1868, %v1916
        %v1922 = vld [vmem:[%s4 + $0x50] sm:$0xf]
        %v1923 = vld [vmem:[%s4 + $0x54] sm:$0xf]
        %v1924 = vld [vmem:[%s4 + $0x58] sm:$0xf]
        %v1925 = vld [vmem:[%s4 + $0x5c] sm:$0xf]
        %v1926 = vpack.c.bf16 %v1564, %v1561
        %v1927 = vpack.c.bf16 %v1569, %v1566
        %vm1928 = vsmask.f32 5376
        %v1930 = vshrl.u32 %v1926, 16
        %v1932 = vrot.slane %v1930, 2
        %v1933 = vshll.u32 %v1926, 16
        %v1935 = vrot.slane %v1933, 3
        %v1936 = vor.u32 %v1932, %v1935
        %v1938 = vshrl.u32 %v1927, 16
        %v1940 = vrot.slane %v1938, 2
        %v1941 = vshll.u32 %v1927, 16
        %v1943 = vrot.slane %v1941, 3
        %v1944 = vor.u32 %v1940, %v1943
        %v1945 = vsel %vm1928, %v1936, %v1944
        %v1950 = vunpack.c.l.b16 %v1922
        %v1951 = vunpack.c.l.b16 %v1923
        %v1952 = vunpack.c.l.b16 %v1924
        %v1953 = vunpack.c.l.b16 %v1925
        %v1954 = vpack.c.b16 %v1951, %v1950
        %v1955 = vpack.c.b16 %v1953, %v1952
        %v1959 = vsel %vm1688, %v1945, 0
        %v1962 = vsel %vm1688, %v1944, 0
        %1964 = vmatpush.bf16.msra.mxu0 0
        %1965 = vmatpush.bf16.msra.mxu0 0
        %1966 = vmatpush.bf16.msra.mxu0 0
        %1967 = vmatpush.bf16.msra.mxu0 0
        %1968 = vmatpush.bf16.msra.mxu0 0
        %1969 = vmatpush.bf16.msra.mxu0 0
        %1970 = vmatpush.bf16.msra.mxu0 %v1955
        %1971 = vmatpush.bf16.msra.mxu0 %v1954
        %1972 = vmatmul.bf16.gmra.mxu0 %v1959
        %v1973 = vpop.f32.mrf.mxu0
        %v1974 = vadd.f32 0.0, %v1973
        %v1975 = vpop.f32.mrf.mxu0
        %v1976 = vadd.f32 0.0, %v1975
        %1977 = vmatmul.bf16.gmra.mxu0 %v1962
        %v1978 = vpop.f32.mrf.mxu0
        %v1979 = vadd.f32 0.0, %v1978
        %v1980 = vpop.f32.mrf.mxu0
        %v1981 = vadd.f32 0.0, %v1980
        %1982 = vdwg.mxu0
        %v1983 = vadd.f32 %v1918, %v1974
        %v1984 = vadd.f32 %v1919, %v1976
        %v1985 = vadd.f32 %v1920, %v1979
        %v1986 = vadd.f32 %v1921, %v1981
        %v1987 = vld [vmem:[%s4 + $0x60] sm:$0xf]
        %v1988 = vld [vmem:[%s4 + $0x64] sm:$0xf]
        %v1989 = vld [vmem:[%s4 + $0x68] sm:$0xf]
        %v1990 = vld [vmem:[%s4 + $0x6c] sm:$0xf]
        %v1991 = vpack.c.bf16 %v1571, %v1569
        %v1992 = vpack.c.bf16 %v1576, %v1574
        %vm1995 = vcmask 1044480
        %v1996 = vrot.slane %v1991, 3
        %v1997 = vrot.slane %v1992, 3
        %v1998 = vsel %vm1995, %v1996, %v1997
        %v2003 = vunpack.c.l.b16 %v1987
        %v2004 = vunpack.c.l.b16 %v1988
        %v2005 = vunpack.c.l.b16 %v1989
        %v2006 = vunpack.c.l.b16 %v1990
        %v2007 = vpack.c.b16 %v2004, %v2003
        %v2008 = vpack.c.b16 %v2006, %v2005
        %v2012 = vsel %vm1688, %v1998, 0
        %v2015 = vsel %vm1688, %v1997, 0
        %2017 = vmatpush.bf16.msra.mxu0 0
        %2018 = vmatpush.bf16.msra.mxu0 0
        %2019 = vmatpush.bf16.msra.mxu0 0
        %2020 = vmatpush.bf16.msra.mxu0 0
        %2021 = vmatpush.bf16.msra.mxu0 0
        %2022 = vmatpush.bf16.msra.mxu0 0
        %2023 = vmatpush.bf16.msra.mxu0 %v2008
        %2024 = vmatpush.bf16.msra.mxu0 %v2007
        %2025 = vmatmul.bf16.gmra.mxu0 %v2012
        %v2026 = vpop.f32.mrf.mxu0
        %v2027 = vadd.f32 0.0, %v2026
        %v2028 = vpop.f32.mrf.mxu0
        %v2029 = vadd.f32 0.0, %v2028
        %2030 = vmatmul.bf16.gmra.mxu0 %v2015
        %v2031 = vpop.f32.mrf.mxu0
        %v2032 = vadd.f32 0.0, %v2031
        %v2033 = vpop.f32.mrf.mxu0
        %v2034 = vadd.f32 0.0, %v2033
        %2035 = vdwg.mxu0
        %v2036 = vadd.f32 %v1983, %v2027
        %v2037 = vadd.f32 %v1984, %v2029
        %v2038 = vadd.f32 %v1985, %v2032
        %v2039 = vadd.f32 %v1986, %v2034
        %v2040 = vld [vmem:[%s4 + $0x70] sm:$0xf]
        %v2041 = vld [vmem:[%s4 + $0x74] sm:$0xf]
        %v2042 = vld [vmem:[%s4 + $0x78] sm:$0xf]
        %v2043 = vld [vmem:[%s4 + $0x7c] sm:$0xf]
        %v2044 = vpack.c.bf16 %v1579, %v1576
        %v2045 = vpack.c.bf16 %v1584, %v1581
        %vm2046 = vsmask.f32 4352
        %v2048 = vshrl.u32 %v2044, 16
        %v2050 = vrot.slane %v2048, 3
        %v2051 = vshll.u32 %v2044, 16
        %v2053 = vrot.slane %v2051, 4
        %v2054 = vor.u32 %v2050, %v2053
        %v2056 = vshrl.u32 %v2045, 16
        %v2058 = vrot.slane %v2056, 3
        %v2059 = vshll.u32 %v2045, 16
        %v2061 = vrot.slane %v2059, 4
        %v2062 = vor.u32 %v2058, %v2061
        %v2063 = vsel %vm2046, %v2054, %v2062
        %v2068 = vunpack.c.l.b16 %v2040
        %v2069 = vunpack.c.l.b16 %v2041
        %v2070 = vunpack.c.l.b16 %v2042
        %v2071 = vunpack.c.l.b16 %v2043
        %v2072 = vpack.c.b16 %v2069, %v2068
        %v2073 = vpack.c.b16 %v2071, %v2070
        %v2077 = vsel %vm1688, %v2063, 0
        %v2080 = vsel %vm1688, %v2062, 0
        %2082 = vmatpush.bf16.msra.mxu0 0
        %2083 = vmatpush.bf16.msra.mxu0 0
        %2084 = vmatpush.bf16.msra.mxu0 0
        %2085 = vmatpush.bf16.msra.mxu0 0
        %2086 = vmatpush.bf16.msra.mxu0 0
        %2087 = vmatpush.bf16.msra.mxu0 0
        %2088 = vmatpush.bf16.msra.mxu0 %v2073
        %2089 = vmatpush.bf16.msra.mxu0 %v2072
        %2090 = vmatmul.bf16.gmra.mxu0 %v2077
        %v2091 = vpop.f32.mrf.mxu0
        %v2092 = vadd.f32 0.0, %v2091
        %v2093 = vpop.f32.mrf.mxu0
        %v2094 = vadd.f32 0.0, %v2093
        %2095 = vmatmul.bf16.gmra.mxu0 %v2080
        %v2096 = vpop.f32.mrf.mxu0
        %v2097 = vadd.f32 0.0, %v2096
        %v2098 = vpop.f32.mrf.mxu0
        %v2099 = vadd.f32 0.0, %v2098
        %2100 = vdwg.mxu0
        %v2101 = vadd.f32 %v2036, %v2092
        %v2102 = vadd.f32 %v2037, %v2094
        %v2103 = vadd.f32 %v2038, %v2097
        %v2104 = vadd.f32 %v2039, %v2099
        %v2105 = vld [vmem:[%s4 + $0x80] sm:$0xf]
        %v2106 = vld [vmem:[%s4 + $0x84] sm:$0xf]
        %v2107 = vld [vmem:[%s4 + $0x88] sm:$0xf]
        %v2108 = vld [vmem:[%s4 + $0x8c] sm:$0xf]
        %v2109 = vpack.c.bf16 %v1589, %v1586
        %v2110 = vpack.c.bf16 %v1594, %v1591
        %v2115 = vunpack.c.l.b16 %v2105
        %v2116 = vunpack.c.l.b16 %v2106
        %v2117 = vunpack.c.l.b16 %v2107
        %v2118 = vunpack.c.l.b16 %v2108
        %v2119 = vpack.c.b16 %v2116, %v2115
        %v2120 = vpack.c.b16 %v2118, %v2117
        %v2124 = vsel %vm1688, %v2109, 0
        %v2127 = vsel %vm1688, %v2110, 0
        %2129 = vmatpush.bf16.msra.mxu0 0
        %2130 = vmatpush.bf16.msra.mxu0 0
        %2131 = vmatpush.bf16.msra.mxu0 0
        %2132 = vmatpush.bf16.msra.mxu0 0
        %2133 = vmatpush.bf16.msra.mxu0 0
        %2134 = vmatpush.bf16.msra.mxu0 0
        %2135 = vmatpush.bf16.msra.mxu0 %v2120
        %2136 = vmatpush.bf16.msra.mxu0 %v2119
        %2137 = vmatmul.bf16.gmra.mxu0 %v2124
        %v2138 = vpop.f32.mrf.mxu0
        %v2139 = vadd.f32 0.0, %v2138
        %v2140 = vpop.f32.mrf.mxu0
        %v2141 = vadd.f32 0.0, %v2140
        %2142 = vmatmul.bf16.gmra.mxu0 %v2127
        %v2143 = vpop.f32.mrf.mxu0
        %v2144 = vadd.f32 0.0, %v2143
        %v2145 = vpop.f32.mrf.mxu0
        %v2146 = vadd.f32 0.0, %v2145
        %2147 = vdwg.mxu0
        %v2148 = vadd.f32 %v2101, %v2139
        %v2149 = vadd.f32 %v2102, %v2141
        %v2150 = vadd.f32 %v2103, %v2144
        %v2151 = vadd.f32 %v2104, %v2146
        %v2152 = vld [vmem:[%s4 + $0x90] sm:$0xf]
        %v2153 = vld [vmem:[%s4 + $0x94] sm:$0xf]
        %v2154 = vld [vmem:[%s4 + $0x98] sm:$0xf]
        %v2155 = vld [vmem:[%s4 + $0x9c] sm:$0xf]
        %v2156 = vpack.c.bf16 %v1596, %v1594
        %v2157 = vpack.c.bf16 %v1601, %v1599
        %v2159 = vshrl.u32 %v2156, 16
        %v2161 = vshll.u32 %v2156, 16
        %v2163 = vrot.slane %v2161, 1
        %v2164 = vor.u32 %v2159, %v2163
        %v2166 = vshll.u32 %v2157, 16
        %v2168 = vrot.slane %v2166, 1
        %v2169 = vsel %vm1660, %v2164, %v2168
        %v2170 = vshrl.u32 %v2157, 16
        %v2172 = vor.u32 %v2170, %v2168
        %v2177 = vunpack.c.l.b16 %v2152
        %v2178 = vunpack.c.l.b16 %v2153
        %v2179 = vunpack.c.l.b16 %v2154
        %v2180 = vunpack.c.l.b16 %v2155
        %v2181 = vpack.c.b16 %v2178, %v2177
        %v2182 = vpack.c.b16 %v2180, %v2179
        %v2186 = vsel %vm1688, %v2169, 0
        %v2189 = vsel %vm1688, %v2172, 0
        %2191 = vmatpush.bf16.msra.mxu0 0
        %2192 = vmatpush.bf16.msra.mxu0 0
        %2193 = vmatpush.bf16.msra.mxu0 0
        %2194 = vmatpush.bf16.msra.mxu0 0
        %2195 = vmatpush.bf16.msra.mxu0 0
        %2196 = vmatpush.bf16.msra.mxu0 0
        %2197 = vmatpush.bf16.msra.mxu0 %v2182
        %2198 = vmatpush.bf16.msra.mxu0 %v2181
        %2199 = vmatmul.bf16.gmra.mxu0 %v2186
        %v2200 = vpop.f32.mrf.mxu0
        %v2201 = vadd.f32 0.0, %v2200
        %v2202 = vpop.f32.mrf.mxu0
        %v2203 = vadd.f32 0.0, %v2202
        %2204 = vmatmul.bf16.gmra.mxu0 %v2189
        %v2205 = vpop.f32.mrf.mxu0
        %v2206 = vadd.f32 0.0, %v2205
        %v2207 = vpop.f32.mrf.mxu0
        %v2208 = vadd.f32 0.0, %v2207
        %2209 = vdwg.mxu0
        %v2210 = vadd.f32 %v2148, %v2201
        %v2211 = vadd.f32 %v2149, %v2203
        %v2212 = vadd.f32 %v2150, %v2206
        %v2213 = vadd.f32 %v2151, %v2208
        %v2214 = vld [vmem:[%s4 + $0xa0] sm:$0xf]
        %v2215 = vld [vmem:[%s4 + $0xa4] sm:$0xf]
        %v2216 = vld [vmem:[%s4 + $0xa8] sm:$0xf]
        %v2217 = vld [vmem:[%s4 + $0xac] sm:$0xf]
        %v2218 = vpack.c.bf16 %v1604, %v1601
        %v2219 = vpack.c.bf16 %v1609, %v1606
        %v2222 = vrot.slane %v2218, 1
        %v2223 = vrot.slane %v2219, 1
        %v2224 = vsel %vm1759, %v2222, %v2223
        %v2229 = vunpack.c.l.b16 %v2214
        %v2230 = vunpack.c.l.b16 %v2215
        %v2231 = vunpack.c.l.b16 %v2216
        %v2232 = vunpack.c.l.b16 %v2217
        %v2233 = vpack.c.b16 %v2230, %v2229
        %v2234 = vpack.c.b16 %v2232, %v2231
        %v2238 = vsel %vm1688, %v2224, 0
        %v2241 = vsel %vm1688, %v2223, 0
        %2243 = vmatpush.bf16.msra.mxu0 0
        %2244 = vmatpush.bf16.msra.mxu0 0
        %2245 = vmatpush.bf16.msra.mxu0 0
        %2246 = vmatpush.bf16.msra.mxu0 0
        %2247 = vmatpush.bf16.msra.mxu0 0
        %2248 = vmatpush.bf16.msra.mxu0 0
        %2249 = vmatpush.bf16.msra.mxu0 %v2234
        %2250 = vmatpush.bf16.msra.mxu0 %v2233
        %2251 = vmatmul.bf16.gmra.mxu0 %v2238
        %v2252 = vpop.f32.mrf.mxu0
        %v2253 = vadd.f32 0.0, %v2252
        %v2254 = vpop.f32.mrf.mxu0
        %v2255 = vadd.f32 0.0, %v2254
        %2256 = vmatmul.bf16.gmra.mxu0 %v2241
        %v2257 = vpop.f32.mrf.mxu0
        %v2258 = vadd.f32 0.0, %v2257
        %v2259 = vpop.f32.mrf.mxu0
        %v2260 = vadd.f32 0.0, %v2259
        %2261 = vdwg.mxu0
        %v2262 = vadd.f32 %v2210, %v2253
        %v2263 = vadd.f32 %v2211, %v2255
        %v2264 = vadd.f32 %v2212, %v2258
        %v2265 = vadd.f32 %v2213, %v2260
        %v2266 = vld [vmem:[%s4 + $0xb0] sm:$0xf]
        %v2267 = vld [vmem:[%s4 + $0xb4] sm:$0xf]
        %v2268 = vld [vmem:[%s4 + $0xb8] sm:$0xf]
        %v2269 = vld [vmem:[%s4 + $0xbc] sm:$0xf]
        %v2270 = vpack.c.bf16 %v1611, %v1609
        %v2271 = vpack.c.bf16 %v1616, %v1614
        %v2273 = vshrl.u32 %v2270, 16
        %v2275 = vrot.slane %v2273, 1
        %v2276 = vshll.u32 %v2270, 16
        %v2278 = vrot.slane %v2276, 2
        %v2279 = vor.u32 %v2275, %v2278
        %v2281 = vshrl.u32 %v2271, 16
        %v2283 = vrot.slane %v2281, 1
        %v2284 = vshll.u32 %v2271, 16
        %v2286 = vrot.slane %v2284, 2
        %v2287 = vor.u32 %v2283, %v2286
        %v2288 = vsel %vm1810, %v2279, %v2287
        %v2293 = vunpack.c.l.b16 %v2266
        %v2294 = vunpack.c.l.b16 %v2267
        %v2295 = vunpack.c.l.b16 %v2268
        %v2296 = vunpack.c.l.b16 %v2269
        %v2297 = vpack.c.b16 %v2294, %v2293
        %v2298 = vpack.c.b16 %v2296, %v2295
        %v2302 = vsel %vm1688, %v2288, 0
        %v2305 = vsel %vm1688, %v2287, 0
        %2307 = vmatpush.bf16.msra.mxu0 0
        %2308 = vmatpush.bf16.msra.mxu0 0
        %2309 = vmatpush.bf16.msra.mxu0 0
        %2310 = vmatpush.bf16.msra.mxu0 0
        %2311 = vmatpush.bf16.msra.mxu0 0
        %2312 = vmatpush.bf16.msra.mxu0 0
        %2313 = vmatpush.bf16.msra.mxu0 %v2298
        %2314 = vmatpush.bf16.msra.mxu0 %v2297
        %2315 = vmatmul.bf16.gmra.mxu0 %v2302
        %v2316 = vpop.f32.mrf.mxu0
        %v2317 = vadd.f32 0.0, %v2316
        %v2318 = vpop.f32.mrf.mxu0
        %v2319 = vadd.f32 0.0, %v2318
        %2320 = vmatmul.bf16.gmra.mxu0 %v2305
        %v2321 = vpop.f32.mrf.mxu0
        %v2322 = vadd.f32 0.0, %v2321
        %v2323 = vpop.f32.mrf.mxu0
        %v2324 = vadd.f32 0.0, %v2323
        %2325 = vdwg.mxu0
        %v2326 = vadd.f32 %v2262, %v2317
        %v2327 = vadd.f32 %v2263, %v2319
        %v2328 = vadd.f32 %v2264, %v2322
        %v2329 = vadd.f32 %v2265, %v2324
        %v2330 = vld [vmem:[%s4 + $0xc0] sm:$0xf]
        %v2331 = vld [vmem:[%s4 + $0xc4] sm:$0xf]
        %v2332 = vld [vmem:[%s4 + $0xc8] sm:$0xf]
        %v2333 = vld [vmem:[%s4 + $0xcc] sm:$0xf]
        %v2334 = vpack.c.bf16 %v1619, %v1616
        %v2335 = vpack.c.bf16 %v1624, %v1621
        %v2338 = vrot.slane %v2334, 2
        %v2339 = vrot.slane %v2335, 2
        %v2340 = vsel %vm1877, %v2338, %v2339
        %v2345 = vunpack.c.l.b16 %v2330
        %v2346 = vunpack.c.l.b16 %v2331
        %v2347 = vunpack.c.l.b16 %v2332
        %v2348 = vunpack.c.l.b16 %v2333
        %v2349 = vpack.c.b16 %v2346, %v2345
        %v2350 = vpack.c.b16 %v2348, %v2347
        %v2354 = vsel %vm1688, %v2340, 0
        %v2357 = vsel %vm1688, %v2339, 0
        %2359 = vmatpush.bf16.msra.mxu0 0
        %2360 = vmatpush.bf16.msra.mxu0 0
        %2361 = vmatpush.bf16.msra.mxu0 0
        %2362 = vmatpush.bf16.msra.mxu0 0
        %2363 = vmatpush.bf16.msra.mxu0 0
        %2364 = vmatpush.bf16.msra.mxu0 0
        %2365 = vmatpush.bf16.msra.mxu0 %v2350
        %2366 = vmatpush.bf16.msra.mxu0 %v2349
        %2367 = vmatmul.bf16.gmra.mxu0 %v2354
        %v2368 = vpop.f32.mrf.mxu0
        %v2369 = vadd.f32 0.0, %v2368
        %v2370 = vpop.f32.mrf.mxu0
        %v2371 = vadd.f32 0.0, %v2370
        %2372 = vmatmul.bf16.gmra.mxu0 %v2357
        %v2373 = vpop.f32.mrf.mxu0
        %v2374 = vadd.f32 0.0, %v2373
        %v2375 = vpop.f32.mrf.mxu0
        %v2376 = vadd.f32 0.0, %v2375
        %2377 = vdwg.mxu0
        %v2378 = vadd.f32 %v2326, %v2369
        %v2379 = vadd.f32 %v2327, %v2371
        %v2380 = vadd.f32 %v2328, %v2374
        %v2381 = vadd.f32 %v2329, %v2376
        %v2382 = vld [vmem:[%s4 + $0xd0] sm:$0xf]
        %v2383 = vld [vmem:[%s4 + $0xd4] sm:$0xf]
        %v2384 = vld [vmem:[%s4 + $0xd8] sm:$0xf]
        %v2385 = vld [vmem:[%s4 + $0xdc] sm:$0xf]
        %v2386 = vpack.c.bf16 %v1626, %v1624
        %v2387 = vpack.c.bf16 %v1631, %v1629
        %v2389 = vshrl.u32 %v2386, 16
        %v2391 = vrot.slane %v2389, 2
        %v2392 = vshll.u32 %v2386, 16
        %v2394 = vrot.slane %v2392, 3
        %v2395 = vor.u32 %v2391, %v2394
        %v2397 = vshrl.u32 %v2387, 16
        %v2399 = vrot.slane %v2397, 2
        %v2400 = vshll.u32 %v2387, 16
        %v2402 = vrot.slane %v2400, 3
        %v2403 = vor.u32 %v2399, %v2402
        %v2404 = vsel %vm1928, %v2395, %v2403
        %v2409 = vunpack.c.l.b16 %v2382
        %v2410 = vunpack.c.l.b16 %v2383
        %v2411 = vunpack.c.l.b16 %v2384
        %v2412 = vunpack.c.l.b16 %v2385
        %v2413 = vpack.c.b16 %v2410, %v2409
        %v2414 = vpack.c.b16 %v2412, %v2411
        %v2418 = vsel %vm1688, %v2404, 0
        %v2421 = vsel %vm1688, %v2403, 0
        %2423 = vmatpush.bf16.msra.mxu0 0
        %2424 = vmatpush.bf16.msra.mxu0 0
        %2425 = vmatpush.bf16.msra.mxu0 0
        %2426 = vmatpush.bf16.msra.mxu0 0
        %2427 = vmatpush.bf16.msra.mxu0 0
        %2428 = vmatpush.bf16.msra.mxu0 0
        %2429 = vmatpush.bf16.msra.mxu0 %v2414
        %2430 = vmatpush.bf16.msra.mxu0 %v2413
        %2431 = vmatmul.bf16.gmra.mxu0 %v2418
        %v2432 = vpop.f32.mrf.mxu0
        %v2433 = vadd.f32 0.0, %v2432
        %v2434 = vpop.f32.mrf.mxu0
        %v2435 = vadd.f32 0.0, %v2434
        %2436 = vmatmul.bf16.gmra.mxu0 %v2421
        %v2437 = vpop.f32.mrf.mxu0
        %v2438 = vadd.f32 0.0, %v2437
        %v2439 = vpop.f32.mrf.mxu0
        %v2440 = vadd.f32 0.0, %v2439
        %2441 = vdwg.mxu0
        %v2442 = vadd.f32 %v2378, %v2433
        %v2443 = vadd.f32 %v2379, %v2435
        %v2444 = vadd.f32 %v2380, %v2438
        %v2445 = vadd.f32 %v2381, %v2440
        %v2446 = vld [vmem:[%s4 + $0xe0] sm:$0xf]
        %v2447 = vld [vmem:[%s4 + $0xe4] sm:$0xf]
        %v2448 = vld [vmem:[%s4 + $0xe8] sm:$0xf]
        %v2449 = vld [vmem:[%s4 + $0xec] sm:$0xf]
        %v2450 = vpack.c.bf16 %v1634, %v1631
        %v2451 = vpack.c.bf16 %v1639, %v1636
        %v2454 = vrot.slane %v2450, 3
        %v2455 = vrot.slane %v2451, 3
        %v2456 = vsel %vm1995, %v2454, %v2455
        %v2461 = vunpack.c.l.b16 %v2446
        %v2462 = vunpack.c.l.b16 %v2447
        %v2463 = vunpack.c.l.b16 %v2448
        %v2464 = vunpack.c.l.b16 %v2449
        %v2465 = vpack.c.b16 %v2462, %v2461
        %v2466 = vpack.c.b16 %v2464, %v2463
        %v2470 = vsel %vm1688, %v2456, 0
        %v2473 = vsel %vm1688, %v2455, 0
        %2475 = vmatpush.bf16.msra.mxu0 0
        %2476 = vmatpush.bf16.msra.mxu0 0
        %2477 = vmatpush.bf16.msra.mxu0 0
        %2478 = vmatpush.bf16.msra.mxu0 0
        %2479 = vmatpush.bf16.msra.mxu0 0
        %2480 = vmatpush.bf16.msra.mxu0 0
        %2481 = vmatpush.bf16.msra.mxu0 %v2466
        %2482 = vmatpush.bf16.msra.mxu0 %v2465
        %2483 = vmatmul.bf16.gmra.mxu0 %v2470
        %v2484 = vpop.f32.mrf.mxu0
        %v2485 = vadd.f32 0.0, %v2484
        %v2486 = vpop.f32.mrf.mxu0
        %v2487 = vadd.f32 0.0, %v2486
        %2488 = vmatmul.bf16.gmra.mxu0 %v2473
        %v2489 = vpop.f32.mrf.mxu0
        %v2490 = vadd.f32 0.0, %v2489
        %v2491 = vpop.f32.mrf.mxu0
        %v2492 = vadd.f32 0.0, %v2491
        %2493 = vdwg.mxu0
        %v2494 = vadd.f32 %v2442, %v2485
        %v2495 = vadd.f32 %v2443, %v2487
        %v2496 = vadd.f32 %v2444, %v2490
        %v2497 = vadd.f32 %v2445, %v2492
        %v2498 = vld [vmem:[%s4 + $0xf0] sm:$0xf]
        %v2499 = vld [vmem:[%s4 + $0xf4] sm:$0xf]
        %v2500 = vld [vmem:[%s4 + $0xf8] sm:$0xf]
        %v2501 = vld [vmem:[%s4 + $0xfc] sm:$0xf]
        %v2502 = vpack.c.bf16 %v1641, %v1639
        %v2503 = vpack.c.bf16 %v1646, %v1644
        %v2505 = vshrl.u32 %v2502, 16
        %v2507 = vrot.slane %v2505, 3
        %v2508 = vshll.u32 %v2502, 16
        %v2510 = vrot.slane %v2508, 4
        %v2511 = vor.u32 %v2507, %v2510
        %v2513 = vshrl.u32 %v2503, 16
        %v2515 = vrot.slane %v2513, 3
        %v2516 = vshll.u32 %v2503, 16
        %v2518 = vrot.slane %v2516, 4
        %v2519 = vor.u32 %v2515, %v2518
        %v2520 = vsel %vm2046, %v2511, %v2519
        %v2525 = vunpack.c.l.b16 %v2498
        %v2526 = vunpack.c.l.b16 %v2499
        %v2527 = vunpack.c.l.b16 %v2500
        %v2528 = vunpack.c.l.b16 %v2501
        %v2529 = vpack.c.b16 %v2526, %v2525
        %v2530 = vpack.c.b16 %v2528, %v2527
        %v2534 = vsel %vm1688, %v2520, 0
        %v2537 = vsel %vm1688, %v2519, 0
        %2539 = vmatpush.bf16.msra.mxu0 0
        %2540 = vmatpush.bf16.msra.mxu0 0
        %2541 = vmatpush.bf16.msra.mxu0 0
        %2542 = vmatpush.bf16.msra.mxu0 0
        %2543 = vmatpush.bf16.msra.mxu0 0
        %2544 = vmatpush.bf16.msra.mxu0 0
        %2545 = vmatpush.bf16.msra.mxu0 %v2530
        %2546 = vmatpush.bf16.msra.mxu0 %v2529
        %2547 = vmatmul.bf16.gmra.mxu0 %v2534
        %v2548 = vpop.f32.mrf.mxu0
        %v2549 = vadd.f32 0.0, %v2548
        %v2550 = vpop.f32.mrf.mxu0
        %v2551 = vadd.f32 0.0, %v2550
        %2552 = vmatmul.bf16.gmra.mxu0 %v2537
        %v2553 = vpop.f32.mrf.mxu0
        %v2554 = vadd.f32 0.0, %v2553
        %v2555 = vpop.f32.mrf.mxu0
        %v2556 = vadd.f32 0.0, %v2555
        %2557 = vdwg.mxu0
        %v2558 = vadd.f32 %v2494, %v2549
        %v2559 = vadd.f32 %v2495, %v2551
        %v2560 = vadd.f32 %v2496, %v2554
        %v2561 = vadd.f32 %v2497, %v2556
        %v2562 = vld [vmem:[%s5] sm:$0x1]
        %v2564 = vperm.slane %v2562, 0
        %v2566 = vadd.f32 %v2558, %v2564
        %v2567 = vadd.f32 %v2559, %v2564
        %v2568 = vadd.f32 %v2560, %v2564
        %v2569 = vadd.f32 %v2561, %v2564
        %v2570 = vmax.f32 %v2566, 0.0
        %v2571 = vmax.f32 %v2567, 0.0
        %v2572 = vmax.f32 %v2568, 0.0
        %v2573 = vmax.f32 %v2569, 0.0
        %v2574 = vld [vmem:[%s6] sm:$0xf]
        %v2575 = vld [vmem:[%s6 + $0x4] sm:$0xf]
        %v2576 = vld [vmem:[%s6 + $0x8] sm:$0xf]
        %v2577 = vld [vmem:[%s6 + $0xc] sm:$0xf]
        %v2578 = vld [vmem:[%s6 + $0x10] sm:$0x3]
        %v2579 = vpack.c.bf16 %v2571, %v2570
        %v2580 = vpack.c.bf16 %v2573, %v2572
        %v2586 = vunpack.c.l.b16 %v2574
        %v2587 = vunpack.c.l.b16 %v2575
        %v2588 = vunpack.c.l.b16 %v2576
        %v2589 = vunpack.c.l.b16 %v2577
        %v2590 = vunpack.c.l.b16 %v2578
        %v2591 = vpack.c.b16 %v2587, %v2586
        %v2592 = vpack.c.b16 %v2589, %v2588
        %v2593 = vpack.c.b16 %v2590, %v2590
        %vm2594 = vcmask 203776
        %v2596 = vsel %vm2594, %v2591, 0
        %v2599 = vsel %vm2594, %v2592, 0
        %v2602 = vsel %vm2594, %v2593, 0
        %vm2604 = vcmask 1044480
        %v2605 = vsel %vm1123, 4294967295, 65535
        %v2606 = vsel %vm2604, %v2605, 0
        %v2608 = vand.u32 %v2580, %v2606
        %2610 = vmatpush.bf16.msra.mxu0 0
        %2611 = vmatpush.bf16.msra.mxu0 0
        %2612 = vmatpush.bf16.msra.mxu0 0
        %2613 = vmatpush.bf16.msra.mxu0 0
        %2614 = vmatpush.bf16.msra.mxu0 0
        %2615 = vmatpush.bf16.msra.mxu0 0
        %2616 = vmatpush.bf16.msra.mxu0 %v2608
        %2617 = vmatpush.bf16.msra.mxu0 %v2579
        %2618 = vmatmul.bf16.gmra.mxu0 %v2596
        %v2619 = vpop.f32.mrf.mxu0
        %v2620 = vadd.f32 0.0, %v2619
        %v2621 = vpop.f32.mrf.mxu0
        %v2622 = vadd.f32 0.0, %v2621
        %2623 = vmatmul.bf16.gmra.mxu0 %v2599
        %v2624 = vpop.f32.mrf.mxu0
        %v2625 = vadd.f32 0.0, %v2624
        %v2626 = vpop.f32.mrf.mxu0
        %v2627 = vadd.f32 0.0, %v2626
        %2628 = vmatmul.bf16.gmra.mxu0 %v2602
        %v2629 = vpop.f32.mrf.mxu0
        %v2630 = vadd.f32 0.0, %v2629
        %v2631 = vpop.f32.mrf.mxu0
        %2632 = vdwg.mxu0
        %vm2635 = vcmask 1046528
        %v2636 = vrot.slane %v2622, 1
        %v2637 = vrot.slane %v2625, 1
        %v2638 = vsel %vm2635, %v2636, %v2637
        %v2641 = vmax.f32 %v2620, %v2638
        %v2642 = vmax.f32 %v2622, %v2637
        %v2645 = vrot.slane %v2627, 1
        %v2646 = vrot.slane %v2630, 1
        %v2647 = vsel %vm2635, %v2645, %v2646
        %v2650 = vmax.f32 %v2625, %v2647
        %v2651 = vmax.f32 %v2627, %v2646
        %vm2654 = vcmask 1045504
        %v2655 = vrot.slane %v2650, 2
        %v2656 = vrot.slane %v2651, 2
        %v2657 = vsel %vm2654, %v2655, %v2656
        %v2660 = vmax.f32 %v2641, %v2657
        %v2661 = vmax.f32 %v2642, %v2656
        %v2662 = vld [vmem:[%s7] sm:$0xf]
        %v2663 = vld [vmem:[%s7 + $0x4] sm:$0xf]
        %v2664 = vld [vmem:[%s7 + $0x8] sm:$0xf]
        %v2665 = vld [vmem:[%s7 + $0xc] sm:$0xf]
        %v2666 = vld [vmem:[%s7 + $0x10] sm:$0xf]
        %v2667 = vld [vmem:[%s7 + $0x14] sm:$0xf]
        %v2668 = vld [vmem:[%s7 + $0x18] sm:$0xf]
        %v2669 = vld [vmem:[%s7 + $0x1c] sm:$0xf]
        %v2670 = vld [vmem:[%s7 + $0x20] sm:$0xf]
        %v2671 = vld [vmem:[%s7 + $0x24] sm:$0xf]
        %v2672 = vld [vmem:[%s7 + $0x28] sm:$0x1]
        %v2673 = vpack.c.bf16 %v2661, %v2660
        %v2685 = vunpack.c.l.b16 %v2662
        %v2686 = vunpack.c.l.b16 %v2663
        %v2687 = vunpack.c.l.b16 %v2664
        %v2688 = vunpack.c.l.b16 %v2665
        %v2689 = vunpack.c.l.b16 %v2666
        %v2690 = vunpack.c.l.b16 %v2667
        %v2691 = vunpack.c.l.b16 %v2668
        %v2692 = vunpack.c.l.b16 %v2669
        %v2693 = vunpack.c.l.b16 %v2670
        %v2694 = vunpack.c.l.b16 %v2671
        %v2695 = vunpack.c.l.b16 %v2672
        %v2696 = vpack.c.b16 %v2686, %v2685
        %v2697 = vpack.c.b16 %v2688, %v2687
        %v2698 = vpack.c.b16 %v2690, %v2689
        %v2699 = vpack.c.b16 %v2692, %v2691
        %v2700 = vpack.c.b16 %v2694, %v2693
        %v2701 = vpack.c.b16 %v2695, %v2695
        %vm2702 = vcmask 72704
        %v2704 = vsel %vm2702, %v2696, 0
        %v2707 = vsel %vm2702, %v2697, 0
        %v2710 = vsel %vm2702, %v2698, 0
        %v2713 = vsel %vm2702, %v2699, 0
        %v2716 = vsel %vm2702, %v2700, 0
        %v2719 = vsel %vm2702, %v2701, 0
        %v2722 = vand.u32 %v2673, %v2606
        %2724 = vmatpush.bf16.msra.mxu0 0
        %2725 = vmatpush.bf16.msra.mxu0 0
        %2726 = vmatpush.bf16.msra.mxu0 0
        %2727 = vmatpush.bf16.msra.mxu0 0
        %2728 = vmatpush.bf16.msra.mxu0 0
        %2729 = vmatpush.bf16.msra.mxu0 0
        %2730 = vmatpush.bf16.msra.mxu0 0
        %2731 = vmatpush.bf16.msra.mxu0 %v2722
        %2732 = vmatmul.bf16.gmra.mxu0 %v2704
        %v2733 = vpop.f32.mrf.mxu0
        %v2734 = vadd.f32 0.0, %v2733
        %v2735 = vpop.f32.mrf.mxu0
        %v2736 = vadd.f32 0.0, %v2735
        %2737 = vmatmul.bf16.gmra.mxu0 %v2707
        %v2738 = vpop.f32.mrf.mxu0
        %v2739 = vadd.f32 0.0, %v2738
        %v2740 = vpop.f32.mrf.mxu0
        %v2741 = vadd.f32 0.0, %v2740
        %2742 = vmatmul.bf16.gmra.mxu0 %v2710
        %v2743 = vpop.f32.mrf.mxu0
        %v2744 = vadd.f32 0.0, %v2743
        %v2745 = vpop.f32.mrf.mxu0
        %v2746 = vadd.f32 0.0, %v2745
        %2747 = vmatmul.bf16.gmra.mxu0 %v2713
        %v2748 = vpop.f32.mrf.mxu0
        %v2749 = vadd.f32 0.0, %v2748
        %v2750 = vpop.f32.mrf.mxu0
        %v2751 = vadd.f32 0.0, %v2750
        %2752 = vmatmul.bf16.gmra.mxu0 %v2716
        %v2753 = vpop.f32.mrf.mxu0
        %v2754 = vadd.f32 0.0, %v2753
        %v2755 = vpop.f32.mrf.mxu0
        %v2756 = vadd.f32 0.0, %v2755
        %2757 = vmatmul.bf16.gmra.mxu0 %v2719
        %v2758 = vpop.f32.mrf.mxu0
        %v2759 = vadd.f32 0.0, %v2758
        %v2760 = vpop.f32.mrf.mxu0
        %2761 = vdwg.mxu0
        %v2762 = vld [vmem:[%s8] sm:$0xf]
        %v2763 = vld [vmem:[%s8 + $0x4] sm:$0xf]
        %v2764 = vld [vmem:[%s8 + $0x8] sm:$0xf]
        %v2765 = vld [vmem:[%s8 + $0xc] sm:$0xf]
        %v2766 = vld [vmem:[%s8 + $0x10] sm:$0xf]
        %v2767 = vld [vmem:[%s8 + $0x14] sm:$0xf]
        %v2768 = vld [vmem:[%s8 + $0x18] sm:$0xf]
        %v2769 = vld [vmem:[%s8 + $0x1c] sm:$0xf]
        %v2770 = vpack.c.bf16 %v2736, %v2734
        %v2771 = vld [vmem:[%s8 + $0x20] sm:$0xf]
        %v2772 = vld [vmem:[%s8 + $0x24] sm:$0xf]
        %v2773 = vld [vmem:[%s8 + $0x28] sm:$0xf]
        %v2774 = vld [vmem:[%s8 + $0x2c] sm:$0xf]
        %v2775 = vld [vmem:[%s8 + $0x30] sm:$0xf]
        %v2776 = vld [vmem:[%s8 + $0x34] sm:$0xf]
        %v2777 = vld [vmem:[%s8 + $0x38] sm:$0xf]
        %v2778 = vld [vmem:[%s8 + $0x3c] sm:$0xf]
        %v2779 = vpack.c.bf16 %v2739, %v2736
        %v2781 = vshrl.u32 %v2779, 16
        %v2783 = vshll.u32 %v2779, 16
        %v2785 = vrot.slane %v2783, 1
        %v2786 = vor.u32 %v2781, %v2785
        %v2795 = vunpack.c.l.b16 %v2771
        %v2796 = vunpack.c.l.b16 %v2772
        %v2797 = vunpack.c.l.b16 %v2773
        %v2798 = vunpack.c.l.b16 %v2774
        %v2799 = vunpack.c.l.b16 %v2775
        %v2800 = vunpack.c.l.b16 %v2776
        %v2801 = vunpack.c.l.b16 %v2777
        %v2802 = vunpack.c.l.b16 %v2778
        %v2803 = vpack.c.b16 %v2796, %v2795
        %v2804 = vpack.c.b16 %v2798, %v2797
        %v2805 = vpack.c.b16 %v2800, %v2799
        %v2806 = vpack.c.b16 %v2802, %v2801
        %v2812 = vsel %vm850, %v2786, 0
        %2814 = vmatpush.bf16.msra.mxu0 0
        %2815 = vmatpush.bf16.msra.mxu0 0
        %2816 = vmatpush.bf16.msra.mxu0 0
        %2817 = vmatpush.bf16.msra.mxu0 0
        %2818 = vmatpush.bf16.msra.mxu0 %v2806
        %2819 = vmatpush.bf16.msra.mxu0 %v2805
        %2820 = vmatpush.bf16.msra.mxu0 %v2804
        %2821 = vmatpush.bf16.msra.mxu0 %v2803
        %2822 = vmatmul.bf16.gmra.mxu0 %v2812
        %v2823 = vpop.f32.mrf.mxu0
        %v2824 = vadd.f32 0.0, %v2823
        %v2825 = vpop.f32.mrf.mxu0
        %v2826 = vadd.f32 0.0, %v2825
        %2827 = vdwg.mxu0
        %v2836 = vunpack.c.l.b16 %v2762
        %v2837 = vunpack.c.l.b16 %v2763
        %v2838 = vunpack.c.l.b16 %v2764
        %v2839 = vunpack.c.l.b16 %v2765
        %v2840 = vunpack.c.l.b16 %v2766
        %v2841 = vunpack.c.l.b16 %v2767
        %v2842 = vunpack.c.l.b16 %v2768
        %v2843 = vunpack.c.l.b16 %v2769
        %v2844 = vpack.c.b16 %v2837, %v2836
        %v2845 = vpack.c.b16 %v2839, %v2838
        %v2846 = vpack.c.b16 %v2841, %v2840
        %v2847 = vpack.c.b16 %v2843, %v2842
        %v2853 = vsel %vm850, %v2770, 0
        %2855 = vmatpush.bf16.msra.mxu0 0
        %2856 = vmatpush.bf16.msra.mxu0 0
        %2857 = vmatpush.bf16.msra.mxu0 0
        %2858 = vmatpush.bf16.msra.mxu0 0
        %2859 = vmatpush.bf16.msra.mxu0 %v2847
        %2860 = vmatpush.bf16.msra.mxu0 %v2846
        %2861 = vmatpush.bf16.msra.mxu0 %v2845
        %2862 = vmatpush.bf16.msra.mxu0 %v2844
        %2863 = vmatmul.bf16.gmra.mxu0 %v2853
        %v2864 = vpop.f32.mrf.mxu0
        %v2865 = vadd.f32 %v2824, %v2864
        %v2866 = vpop.f32.mrf.mxu0
        %v2867 = vadd.f32 %v2826, %v2866
        %2868 = vdwg.mxu0
        %v2869 = vld [vmem:[%s8 + $0x40] sm:$0xf]
        %v2870 = vld [vmem:[%s8 + $0x44] sm:$0xf]
        %v2871 = vld [vmem:[%s8 + $0x48] sm:$0xf]
        %v2872 = vld [vmem:[%s8 + $0x4c] sm:$0xf]
        %v2873 = vld [vmem:[%s8 + $0x50] sm:$0xf]
        %v2874 = vld [vmem:[%s8 + $0x54] sm:$0xf]
        %v2875 = vld [vmem:[%s8 + $0x58] sm:$0xf]
        %v2876 = vld [vmem:[%s8 + $0x5c] sm:$0xf]
        %v2877 = vpack.c.bf16 %v2741, %v2739
        %v2879 = vrot.slane %v2877, 1
        %v2888 = vunpack.c.l.b16 %v2869
        %v2889 = vunpack.c.l.b16 %v2870
        %v2890 = vunpack.c.l.b16 %v2871
        %v2891 = vunpack.c.l.b16 %v2872
        %v2892 = vunpack.c.l.b16 %v2873
        %v2893 = vunpack.c.l.b16 %v2874
        %v2894 = vunpack.c.l.b16 %v2875
        %v2895 = vunpack.c.l.b16 %v2876
        %v2896 = vpack.c.b16 %v2889, %v2888
        %v2897 = vpack.c.b16 %v2891, %v2890
        %v2898 = vpack.c.b16 %v2893, %v2892
        %v2899 = vpack.c.b16 %v2895, %v2894
        %v2905 = vsel %vm850, %v2879, 0
        %2907 = vmatpush.bf16.msra.mxu0 0
        %2908 = vmatpush.bf16.msra.mxu0 0
        %2909 = vmatpush.bf16.msra.mxu0 0
        %2910 = vmatpush.bf16.msra.mxu0 0
        %2911 = vmatpush.bf16.msra.mxu0 %v2899
        %2912 = vmatpush.bf16.msra.mxu0 %v2898
        %2913 = vmatpush.bf16.msra.mxu0 %v2897
        %2914 = vmatpush.bf16.msra.mxu0 %v2896
        %2915 = vmatmul.bf16.gmra.mxu0 %v2905
        %v2916 = vpop.f32.mrf.mxu0
        %v2917 = vadd.f32 0.0, %v2916
        %v2918 = vpop.f32.mrf.mxu0
        %v2919 = vadd.f32 0.0, %v2918
        %2920 = vdwg.mxu0
        %v2921 = vadd.f32 %v2865, %v2917
        %v2922 = vadd.f32 %v2867, %v2919
        %v2923 = vld [vmem:[%s8 + $0x60] sm:$0xf]
        %v2924 = vld [vmem:[%s8 + $0x64] sm:$0xf]
        %v2925 = vld [vmem:[%s8 + $0x68] sm:$0xf]
        %v2926 = vld [vmem:[%s8 + $0x6c] sm:$0xf]
        %v2927 = vld [vmem:[%s8 + $0x70] sm:$0xf]
        %v2928 = vld [vmem:[%s8 + $0x74] sm:$0xf]
        %v2929 = vld [vmem:[%s8 + $0x78] sm:$0xf]
        %v2930 = vld [vmem:[%s8 + $0x7c] sm:$0xf]
        %v2931 = vpack.c.bf16 %v2744, %v2741
        %v2933 = vshrl.u32 %v2931, 16
        %v2935 = vrot.slane %v2933, 1
        %v2936 = vshll.u32 %v2931, 16
        %v2938 = vrot.slane %v2936, 2
        %v2939 = vor.u32 %v2935, %v2938
        %v2948 = vunpack.c.l.b16 %v2923
        %v2949 = vunpack.c.l.b16 %v2924
        %v2950 = vunpack.c.l.b16 %v2925
        %v2951 = vunpack.c.l.b16 %v2926
        %v2952 = vunpack.c.l.b16 %v2927
        %v2953 = vunpack.c.l.b16 %v2928
        %v2954 = vunpack.c.l.b16 %v2929
        %v2955 = vunpack.c.l.b16 %v2930
        %v2956 = vpack.c.b16 %v2949, %v2948
        %v2957 = vpack.c.b16 %v2951, %v2950
        %v2958 = vpack.c.b16 %v2953, %v2952
        %v2959 = vpack.c.b16 %v2955, %v2954
        %v2965 = vsel %vm850, %v2939, 0
        %2967 = vmatpush.bf16.msra.mxu0 0
        %2968 = vmatpush.bf16.msra.mxu0 0
        %2969 = vmatpush.bf16.msra.mxu0 0
        %2970 = vmatpush.bf16.msra.mxu0 0
        %2971 = vmatpush.bf16.msra.mxu0 %v2959
        %2972 = vmatpush.bf16.msra.mxu0 %v2958
        %2973 = vmatpush.bf16.msra.mxu0 %v2957
        %2974 = vmatpush.bf16.msra.mxu0 %v2956
        %2975 = vmatmul.bf16.gmra.mxu0 %v2965
        %v2976 = vpop.f32.mrf.mxu0
        %v2977 = vadd.f32 0.0, %v2976
        %v2978 = vpop.f32.mrf.mxu0
        %v2979 = vadd.f32 0.0, %v2978
        %2980 = vdwg.mxu0
        %v2981 = vadd.f32 %v2921, %v2977
        %v2982 = vadd.f32 %v2922, %v2979
        %v2983 = vld [vmem:[%s8 + $0x80] sm:$0xf]
        %v2984 = vld [vmem:[%s8 + $0x84] sm:$0xf]
        %v2985 = vld [vmem:[%s8 + $0x88] sm:$0xf]
        %v2986 = vld [vmem:[%s8 + $0x8c] sm:$0xf]
        %v2987 = vld [vmem:[%s8 + $0x90] sm:$0xf]
        %v2988 = vld [vmem:[%s8 + $0x94] sm:$0xf]
        %v2989 = vld [vmem:[%s8 + $0x98] sm:$0xf]
        %v2990 = vld [vmem:[%s8 + $0x9c] sm:$0xf]
        %v2991 = vpack.c.bf16 %v2746, %v2744
        %v2993 = vrot.slane %v2991, 2
        %v3002 = vunpack.c.l.b16 %v2983
        %v3003 = vunpack.c.l.b16 %v2984
        %v3004 = vunpack.c.l.b16 %v2985
        %v3005 = vunpack.c.l.b16 %v2986
        %v3006 = vunpack.c.l.b16 %v2987
        %v3007 = vunpack.c.l.b16 %v2988
        %v3008 = vunpack.c.l.b16 %v2989
        %v3009 = vunpack.c.l.b16 %v2990
        %v3010 = vpack.c.b16 %v3003, %v3002
        %v3011 = vpack.c.b16 %v3005, %v3004
        %v3012 = vpack.c.b16 %v3007, %v3006
        %v3013 = vpack.c.b16 %v3009, %v3008
        %v3019 = vsel %vm850, %v2993, 0
        %3021 = vmatpush.bf16.msra.mxu0 0
        %3022 = vmatpush.bf16.msra.mxu0 0
        %3023 = vmatpush.bf16.msra.mxu0 0
        %3024 = vmatpush.bf16.msra.mxu0 0
        %3025 = vmatpush.bf16.msra.mxu0 %v3013
        %3026 = vmatpush.bf16.msra.mxu0 %v3012
        %3027 = vmatpush.bf16.msra.mxu0 %v3011
        %3028 = vmatpush.bf16.msra.mxu0 %v3010
        %3029 = vmatmul.bf16.gmra.mxu0 %v3019
        %v3030 = vpop.f32.mrf.mxu0
        %v3031 = vadd.f32 0.0, %v3030
        %v3032 = vpop.f32.mrf.mxu0
        %v3033 = vadd.f32 0.0, %v3032
        %3034 = vdwg.mxu0
        %v3035 = vadd.f32 %v2981, %v3031
        %v3036 = vadd.f32 %v2982, %v3033
        %v3037 = vld [vmem:[%s8 + $0xa0] sm:$0xf]
        %v3038 = vld [vmem:[%s8 + $0xa4] sm:$0xf]
        %v3039 = vld [vmem:[%s8 + $0xa8] sm:$0xf]
        %v3040 = vld [vmem:[%s8 + $0xac] sm:$0xf]
        %v3041 = vld [vmem:[%s8 + $0xb0] sm:$0xf]
        %v3042 = vld [vmem:[%s8 + $0xb4] sm:$0xf]
        %v3043 = vld [vmem:[%s8 + $0xb8] sm:$0xf]
        %v3044 = vld [vmem:[%s8 + $0xbc] sm:$0xf]
        %v3045 = vpack.c.bf16 %v2749, %v2746
        %v3047 = vshrl.u32 %v3045, 16
        %v3049 = vrot.slane %v3047, 2
        %v3050 = vshll.u32 %v3045, 16
        %v3052 = vrot.slane %v3050, 3
        %v3053 = vor.u32 %v3049, %v3052
        %v3062 = vunpack.c.l.b16 %v3037
        %v3063 = vunpack.c.l.b16 %v3038
        %v3064 = vunpack.c.l.b16 %v3039
        %v3065 = vunpack.c.l.b16 %v3040
        %v3066 = vunpack.c.l.b16 %v3041
        %v3067 = vunpack.c.l.b16 %v3042
        %v3068 = vunpack.c.l.b16 %v3043
        %v3069 = vunpack.c.l.b16 %v3044
        %v3070 = vpack.c.b16 %v3063, %v3062
        %v3071 = vpack.c.b16 %v3065, %v3064
        %v3072 = vpack.c.b16 %v3067, %v3066
        %v3073 = vpack.c.b16 %v3069, %v3068
        %v3079 = vsel %vm850, %v3053, 0
        %3081 = vmatpush.bf16.msra.mxu0 0
        %3082 = vmatpush.bf16.msra.mxu0 0
        %3083 = vmatpush.bf16.msra.mxu0 0
        %3084 = vmatpush.bf16.msra.mxu0 0
        %3085 = vmatpush.bf16.msra.mxu0 %v3073
        %3086 = vmatpush.bf16.msra.mxu0 %v3072
        %3087 = vmatpush.bf16.msra.mxu0 %v3071
        %3088 = vmatpush.bf16.msra.mxu0 %v3070
        %3089 = vmatmul.bf16.gmra.mxu0 %v3079
        %v3090 = vpop.f32.mrf.mxu0
        %v3091 = vadd.f32 0.0, %v3090
        %v3092 = vpop.f32.mrf.mxu0
        %v3093 = vadd.f32 0.0, %v3092
        %3094 = vdwg.mxu0
        %v3095 = vadd.f32 %v3035, %v3091
        %v3096 = vadd.f32 %v3036, %v3093
        %v3097 = vld [vmem:[%s8 + $0xc0] sm:$0xf]
        %v3098 = vld [vmem:[%s8 + $0xc4] sm:$0xf]
        %v3099 = vld [vmem:[%s8 + $0xc8] sm:$0xf]
        %v3100 = vld [vmem:[%s8 + $0xcc] sm:$0xf]
        %v3101 = vld [vmem:[%s8 + $0xd0] sm:$0xf]
        %v3102 = vld [vmem:[%s8 + $0xd4] sm:$0xf]
        %v3103 = vld [vmem:[%s8 + $0xd8] sm:$0xf]
        %v3104 = vld [vmem:[%s8 + $0xdc] sm:$0xf]
        %v3105 = vpack.c.bf16 %v2751, %v2749
        %v3107 = vrot.slane %v3105, 3
        %v3116 = vunpack.c.l.b16 %v3097
        %v3117 = vunpack.c.l.b16 %v3098
        %v3118 = vunpack.c.l.b16 %v3099
        %v3119 = vunpack.c.l.b16 %v3100
        %v3120 = vunpack.c.l.b16 %v3101
        %v3121 = vunpack.c.l.b16 %v3102
        %v3122 = vunpack.c.l.b16 %v3103
        %v3123 = vunpack.c.l.b16 %v3104
        %v3124 = vpack.c.b16 %v3117, %v3116
        %v3125 = vpack.c.b16 %v3119, %v3118
        %v3126 = vpack.c.b16 %v3121, %v3120
        %v3127 = vpack.c.b16 %v3123, %v3122
        %v3133 = vsel %vm850, %v3107, 0
        %3135 = vmatpush.bf16.msra.mxu0 0
        %3136 = vmatpush.bf16.msra.mxu0 0
        %3137 = vmatpush.bf16.msra.mxu0 0
        %3138 = vmatpush.bf16.msra.mxu0 0
        %3139 = vmatpush.bf16.msra.mxu0 %v3127
        %3140 = vmatpush.bf16.msra.mxu0 %v3126
        %3141 = vmatpush.bf16.msra.mxu0 %v3125
        %3142 = vmatpush.bf16.msra.mxu0 %v3124
        %3143 = vmatmul.bf16.gmra.mxu0 %v3133
        %v3144 = vpop.f32.mrf.mxu0
        %v3145 = vadd.f32 0.0, %v3144
        %v3146 = vpop.f32.mrf.mxu0
        %v3147 = vadd.f32 0.0, %v3146
        %3148 = vdwg.mxu0
        %v3149 = vadd.f32 %v3095, %v3145
        %v3150 = vadd.f32 %v3096, %v3147
        %v3151 = vld [vmem:[%s8 + $0xe0] sm:$0xf]
        %v3152 = vld [vmem:[%s8 + $0xe4] sm:$0xf]
        %v3153 = vld [vmem:[%s8 + $0xe8] sm:$0xf]
        %v3154 = vld [vmem:[%s8 + $0xec] sm:$0xf]
        %v3155 = vld [vmem:[%s8 + $0xf0] sm:$0xf]
        %v3156 = vld [vmem:[%s8 + $0xf4] sm:$0xf]
        %v3157 = vld [vmem:[%s8 + $0xf8] sm:$0xf]
        %v3158 = vld [vmem:[%s8 + $0xfc] sm:$0xf]
        %v3159 = vpack.c.bf16 %v2754, %v2751
        %v3161 = vshrl.u32 %v3159, 16
        %v3163 = vrot.slane %v3161, 3
        %v3164 = vshll.u32 %v3159, 16
        %v3166 = vrot.slane %v3164, 4
        %v3167 = vor.u32 %v3163, %v3166
        %v3176 = vunpack.c.l.b16 %v3151
        %v3177 = vunpack.c.l.b16 %v3152
        %v3178 = vunpack.c.l.b16 %v3153
        %v3179 = vunpack.c.l.b16 %v3154
        %v3180 = vunpack.c.l.b16 %v3155
        %v3181 = vunpack.c.l.b16 %v3156
        %v3182 = vunpack.c.l.b16 %v3157
        %v3183 = vunpack.c.l.b16 %v3158
        %v3184 = vpack.c.b16 %v3177, %v3176
        %v3185 = vpack.c.b16 %v3179, %v3178
        %v3186 = vpack.c.b16 %v3181, %v3180
        %v3187 = vpack.c.b16 %v3183, %v3182
        %v3193 = vsel %vm850, %v3167, 0
        %3195 = vmatpush.bf16.msra.mxu0 0
        %3196 = vmatpush.bf16.msra.mxu0 0
        %3197 = vmatpush.bf16.msra.mxu0 0
        %3198 = vmatpush.bf16.msra.mxu0 0
        %3199 = vmatpush.bf16.msra.mxu0 %v3187
        %3200 = vmatpush.bf16.msra.mxu0 %v3186
        %3201 = vmatpush.bf16.msra.mxu0 %v3185
        %3202 = vmatpush.bf16.msra.mxu0 %v3184
        %3203 = vmatmul.bf16.gmra.mxu0 %v3193
        %v3204 = vpop.f32.mrf.mxu0
        %v3205 = vadd.f32 0.0, %v3204
        %v3206 = vpop.f32.mrf.mxu0
        %v3207 = vadd.f32 0.0, %v3206
        %3208 = vdwg.mxu0
        %v3209 = vadd.f32 %v3149, %v3205
        %v3210 = vadd.f32 %v3150, %v3207
        %v3211 = vld [vmem:[%s8 + $0x100] sm:$0xf]
        %v3212 = vld [vmem:[%s8 + $0x104] sm:$0xf]
        %v3213 = vld [vmem:[%s8 + $0x108] sm:$0xf]
        %v3214 = vld [vmem:[%s8 + $0x10c] sm:$0xf]
        %v3215 = vld [vmem:[%s8 + $0x110] sm:$0xf]
        %v3216 = vld [vmem:[%s8 + $0x114] sm:$0xf]
        %v3217 = vld [vmem:[%s8 + $0x118] sm:$0xf]
        %v3218 = vld [vmem:[%s8 + $0x11c] sm:$0xf]
        %v3219 = vpack.c.bf16 %v2759, %v2756
        %v3228 = vunpack.c.l.b16 %v3211
        %v3229 = vunpack.c.l.b16 %v3212
        %v3230 = vunpack.c.l.b16 %v3213
        %v3231 = vunpack.c.l.b16 %v3214
        %v3232 = vunpack.c.l.b16 %v3215
        %v3233 = vunpack.c.l.b16 %v3216
        %v3234 = vunpack.c.l.b16 %v3217
        %v3235 = vunpack.c.l.b16 %v3218
        %v3236 = vpack.c.b16 %v3229, %v3228
        %v3237 = vpack.c.b16 %v3231, %v3230
        %v3238 = vpack.c.b16 %v3233, %v3232
        %v3239 = vpack.c.b16 %v3235, %v3234
        %v3245 = vsel %vm850, %v3219, 0
        %3247 = vmatpush.bf16.msra.mxu0 0
        %3248 = vmatpush.bf16.msra.mxu0 0
        %3249 = vmatpush.bf16.msra.mxu0 0
        %3250 = vmatpush.bf16.msra.mxu0 0
        %3251 = vmatpush.bf16.msra.mxu0 %v3239
        %3252 = vmatpush.bf16.msra.mxu0 %v3238
        %3253 = vmatpush.bf16.msra.mxu0 %v3237
        %3254 = vmatpush.bf16.msra.mxu0 %v3236
        %3255 = vmatmul.bf16.gmra.mxu0 %v3245
        %v3256 = vpop.f32.mrf.mxu0
        %v3257 = vadd.f32 0.0, %v3256
        %v3258 = vpop.f32.mrf.mxu0
        %v3259 = vadd.f32 0.0, %v3258
        %3260 = vdwg.mxu0
        %v3261 = vadd.f32 %v3209, %v3257
        %v3262 = vadd.f32 %v3210, %v3259
        %v3263 = vld [vmem:[%s9] sm:$0x1]
        %v3265 = vperm.slane %v3263, 0
        %v3267 = vadd.f32 %v3261, %v3265
        %v3268 = vadd.f32 %v3262, %v3265
        %v3269 = vmax.f32 %v3267, 0.0
        %v3270 = vmax.f32 %v3268, 0.0
        %v3271 = vld [vmem:[%s10] sm:$0xf]
        %v3272 = vld [vmem:[%s10 + $0x4] sm:$0xf]
        %v3273 = vpack.c.bf16 %v3270, %v3269
        %v3276 = vunpack.c.l.b16 %v3271
        %v3277 = vunpack.c.l.b16 %v3272
        %v3278 = vpack.c.b16 %v3277, %v3276
        %v3280 = vsel %vm2702, %v3278, 0
        %v3283 = vand.u32 %v3273, %v2606
        %3285 = vmatpush.bf16.msra.mxu0 0
        %3286 = vmatpush.bf16.msra.mxu0 0
        %3287 = vmatpush.bf16.msra.mxu0 0
        %3288 = vmatpush.bf16.msra.mxu0 0
        %3289 = vmatpush.bf16.msra.mxu0 0
        %3290 = vmatpush.bf16.msra.mxu0 0
        %3291 = vmatpush.bf16.msra.mxu0 0
        %3292 = vmatpush.bf16.msra.mxu0 %v3283
        %3293 = vmatmul.bf16.gmra.mxu0 %v3280
        %v3294 = vpop.f32.mrf.mxu0
        %v3295 = vadd.f32 0.0, %v3294
        %v3296 = vpop.f32.mrf.mxu0
        %v3297 = vadd.f32 0.0, %v3296
        %3298 = vdwg.mxu0
        %v3300 = vrot.slane %v3295, 4
        %v3302 = vmax.f32 %v3295, %v3300
        %v3304 = vrot.slane %v3297, 4
        %v3306 = vmax.f32 %v3297, %v3304
        %v3307 = vmax.f32 %v3302, %v3306
        %v3308 = vld [vmem:[%s11] sm:$0xf]
        %v3309 = vld [vmem:[%s11 + $0x4] sm:$0xf]
        %v3310 = vld [vmem:[%s11 + $0x8] sm:$0xf]
        %v3311 = vld [vmem:[%s11 + $0xc] sm:$0xf]
        %v3312 = vld [vmem:[%s11 + $0x10] sm:$0xf]
        %v3313 = vld [vmem:[%s11 + $0x14] sm:$0xf]
        %v3314 = vld [vmem:[%s11 + $0x18] sm:$0xf]
        %v3315 = vld [vmem:[%s11 + $0x1c] sm:$0xf]
        %v3316 = vpack.c.bf16 %v3307, %v3307
        %v3317 = vld [vmem:[%s11 + $0x20] sm:$0xf]
        %v3318 = vld [vmem:[%s11 + $0x24] sm:$0xf]
        %v3319 = vld [vmem:[%s11 + $0x28] sm:$0xf]
        %v3320 = vld [vmem:[%s11 + $0x2c] sm:$0xf]
        %v3321 = vld [vmem:[%s11 + $0x30] sm:$0xf]
        %v3322 = vld [vmem:[%s11 + $0x34] sm:$0xf]
        %v3323 = vld [vmem:[%s11 + $0x38] sm:$0xf]
        %v3324 = vld [vmem:[%s11 + $0x3c] sm:$0xf]
        %v3326 = vshrl.u32 %v3316, 16
        %v3336 = vunpack.c.l.b16 %v3317
        %v3337 = vunpack.c.l.b16 %v3318
        %v3338 = vunpack.c.l.b16 %v3319
        %v3339 = vunpack.c.l.b16 %v3320
        %v3340 = vunpack.c.l.b16 %v3321
        %v3341 = vunpack.c.l.b16 %v3322
        %v3342 = vunpack.c.l.b16 %v3323
        %v3343 = vunpack.c.l.b16 %v3324
        %v3344 = vpack.c.b16 %v3337, %v3336
        %v3345 = vpack.c.b16 %v3339, %v3338
        %v3346 = vpack.c.b16 %v3341, %v3340
        %v3347 = vpack.c.b16 %v3343, %v3342
        %v3353 = vsel %vm850, %v3326, 0
        %3355 = vmatpush.bf16.msra.mxu0 0
        %3356 = vmatpush.bf16.msra.mxu0 0
        %3357 = vmatpush.bf16.msra.mxu0 0
        %3358 = vmatpush.bf16.msra.mxu0 0
        %3359 = vmatpush.bf16.msra.mxu0 %v3347
        %3360 = vmatpush.bf16.msra.mxu0 %v3346
        %3361 = vmatpush.bf16.msra.mxu0 %v3345
        %3362 = vmatpush.bf16.msra.mxu0 %v3344
        %3363 = vmatmul.bf16.gmra.mxu0 %v3353
        %v3364 = vpop.f32.mrf.mxu0
        %v3365 = vadd.f32 0.0, %v3364
        %v3366 = vpop.f32.mrf.mxu0
        %3367 = vdwg.mxu0
        %v3376 = vunpack.c.l.b16 %v3308
        %v3377 = vunpack.c.l.b16 %v3309
        %v3378 = vunpack.c.l.b16 %v3310
        %v3379 = vunpack.c.l.b16 %v3311
        %v3380 = vunpack.c.l.b16 %v3312
        %v3381 = vunpack.c.l.b16 %v3313
        %v3382 = vunpack.c.l.b16 %v3314
        %v3383 = vunpack.c.l.b16 %v3315
        %v3384 = vpack.c.b16 %v3377, %v3376
        %v3385 = vpack.c.b16 %v3379, %v3378
        %v3386 = vpack.c.b16 %v3381, %v3380
        %v3387 = vpack.c.b16 %v3383, %v3382
        %v3392 = vsel %vm850, %v3316, 0
        %3394 = vmatpush.bf16.msra.mxu0 0
        %3395 = vmatpush.bf16.msra.mxu0 0
        %3396 = vmatpush.bf16.msra.mxu0 0
        %3397 = vmatpush.bf16.msra.mxu0 0
        %3398 = vmatpush.bf16.msra.mxu0 %v3387
        %3399 = vmatpush.bf16.msra.mxu0 %v3386
        %3400 = vmatpush.bf16.msra.mxu0 %v3385
        %3401 = vmatpush.bf16.msra.mxu0 %v3384
        %3402 = vmatmul.bf16.gmra.mxu0 %v3392
        %v3403 = vpop.f32.mrf.mxu0
        %v3404 = vadd.f32 %v3365, %v3403
        %v3405 = vpop.f32.mrf.mxu0
        %3406 = vdwg.mxu0
        %v3407 = vld [vmem:[%s11 + $0x40] sm:$0xf]
        %v3408 = vld [vmem:[%s11 + $0x44] sm:$0xf]
        %v3409 = vld [vmem:[%s11 + $0x48] sm:$0xf]
        %v3410 = vld [vmem:[%s11 + $0x4c] sm:$0xf]
        %v3411 = vld [vmem:[%s11 + $0x50] sm:$0xf]
        %v3412 = vld [vmem:[%s11 + $0x54] sm:$0xf]
        %v3413 = vld [vmem:[%s11 + $0x58] sm:$0xf]
        %v3414 = vld [vmem:[%s11 + $0x5c] sm:$0xf]
        %v3416 = vrot.slane %v3316, 1
        %v3425 = vunpack.c.l.b16 %v3407
        %v3426 = vunpack.c.l.b16 %v3408
        %v3427 = vunpack.c.l.b16 %v3409
        %v3428 = vunpack.c.l.b16 %v3410
        %v3429 = vunpack.c.l.b16 %v3411
        %v3430 = vunpack.c.l.b16 %v3412
        %v3431 = vunpack.c.l.b16 %v3413
        %v3432 = vunpack.c.l.b16 %v3414
        %v3433 = vpack.c.b16 %v3426, %v3425
        %v3434 = vpack.c.b16 %v3428, %v3427
        %v3435 = vpack.c.b16 %v3430, %v3429
        %v3436 = vpack.c.b16 %v3432, %v3431
        %v3442 = vsel %vm850, %v3416, 0
        %3444 = vmatpush.bf16.msra.mxu0 0
        %3445 = vmatpush.bf16.msra.mxu0 0
        %3446 = vmatpush.bf16.msra.mxu0 0
        %3447 = vmatpush.bf16.msra.mxu0 0
        %3448 = vmatpush.bf16.msra.mxu0 %v3436
        %3449 = vmatpush.bf16.msra.mxu0 %v3435
        %3450 = vmatpush.bf16.msra.mxu0 %v3434
        %3451 = vmatpush.bf16.msra.mxu0 %v3433
        %3452 = vmatmul.bf16.gmra.mxu0 %v3442
        %v3453 = vpop.f32.mrf.mxu0
        %v3454 = vadd.f32 0.0, %v3453
        %v3455 = vpop.f32.mrf.mxu0
        %3456 = vdwg.mxu0
        %v3457 = vadd.f32 %v3404, %v3454
        %v3458 = vld [vmem:[%s11 + $0x60] sm:$0xf]
        %v3459 = vld [vmem:[%s11 + $0x64] sm:$0xf]
        %v3460 = vld [vmem:[%s11 + $0x68] sm:$0xf]
        %v3461 = vld [vmem:[%s11 + $0x6c] sm:$0xf]
        %v3462 = vld [vmem:[%s11 + $0x70] sm:$0xf]
        %v3463 = vld [vmem:[%s11 + $0x74] sm:$0xf]
        %v3464 = vld [vmem:[%s11 + $0x78] sm:$0xf]
        %v3465 = vld [vmem:[%s11 + $0x7c] sm:$0xf]
        %v3466 = vrot.slane %v3326, 1
        %v3475 = vunpack.c.l.b16 %v3458
        %v3476 = vunpack.c.l.b16 %v3459
        %v3477 = vunpack.c.l.b16 %v3460
        %v3478 = vunpack.c.l.b16 %v3461
        %v3479 = vunpack.c.l.b16 %v3462
        %v3480 = vunpack.c.l.b16 %v3463
        %v3481 = vunpack.c.l.b16 %v3464
        %v3482 = vunpack.c.l.b16 %v3465
        %v3483 = vpack.c.b16 %v3476, %v3475
        %v3484 = vpack.c.b16 %v3478, %v3477
        %v3485 = vpack.c.b16 %v3480, %v3479
        %v3486 = vpack.c.b16 %v3482, %v3481
        %v3492 = vsel %vm850, %v3466, 0
        %3494 = vmatpush.bf16.msra.mxu0 0
        %3495 = vmatpush.bf16.msra.mxu0 0
        %3496 = vmatpush.bf16.msra.mxu0 0
        %3497 = vmatpush.bf16.msra.mxu0 0
        %3498 = vmatpush.bf16.msra.mxu0 %v3486
        %3499 = vmatpush.bf16.msra.mxu0 %v3485
        %3500 = vmatpush.bf16.msra.mxu0 %v3484
        %3501 = vmatpush.bf16.msra.mxu0 %v3483
        %3502 = vmatmul.bf16.gmra.mxu0 %v3492
        %v3503 = vpop.f32.mrf.mxu0
        %v3504 = vadd.f32 0.0, %v3503
        %v3505 = vpop.f32.mrf.mxu0
        %3506 = vdwg.mxu0
        %v3507 = vadd.f32 %v3457, %v3504
        %v3508 = vld [vmem:[%s12] sm:$0x1]
        %v3509 = vadd.f32 %v3507, %v3508
        %v3510 = vlaneseq
        %v3511 = vand.u32 %v3510, 127
        %vm3512 = vcmp.lt.s32.totalorder %v3511, 64
        %v3513 = vtanh.pop %v3509
        %v3514 = vsel %vm3512, %v3513, %v3509
        %v3515 = vld [vmem:[%s13] sm:$0xf]
        %v3516 = vld [vmem:[%s13 + $0x4] sm:$0xf]
        %v3517 = vld [vmem:[%s13 + $0x8] sm:$0xf]
        %v3518 = vld [vmem:[%s13 + $0xc] sm:$0xf]
        %v3519 = vld [vmem:[%s13 + $0x10] sm:$0xf]
        %v3520 = vld [vmem:[%s13 + $0x14] sm:$0xf]
        %v3521 = vld [vmem:[%s13 + $0x18] sm:$0xf]
        %v3522 = vld [vmem:[%s13 + $0x1c] sm:$0xf]
        %v3523 = vld [vmem:[%s13 + $0x20] sm:$0xf]
        %v3524 = vld [vmem:[%s13 + $0x24] sm:$0xf]
        %v3525 = vld [vmem:[%s13 + $0x28] sm:$0xf]
        %v3526 = vld [vmem:[%s13 + $0x2c] sm:$0xf]
        %v3527 = vld [vmem:[%s13 + $0x30] sm:$0xf]
        %v3528 = vld [vmem:[%s13 + $0x34] sm:$0xf]
        %v3529 = vld [vmem:[%s13 + $0x38] sm:$0xf]
        %v3530 = vld [vmem:[%s13 + $0x3c] sm:$0xf]
        %v3531 = vpack.c.bf16 %v3514, %v3514
        %v3532 = vld [vmem:[%s14] sm:$0x1]
        %v3549 = vunpack.c.l.b16 %v3515
        %v3550 = vunpack.c.l.b16 %v3516
        %v3551 = vunpack.c.l.b16 %v3517
        %v3552 = vunpack.c.l.b16 %v3518
        %v3553 = vunpack.c.l.b16 %v3519
        %v3554 = vunpack.c.l.b16 %v3520
        %v3555 = vunpack.c.l.b16 %v3521
        %v3556 = vunpack.c.l.b16 %v3522
        %v3557 = vunpack.c.l.b16 %v3523
        %v3558 = vunpack.c.l.b16 %v3524
        %v3559 = vunpack.c.l.b16 %v3525
        %v3560 = vunpack.c.l.b16 %v3526
        %v3561 = vunpack.c.l.b16 %v3527
        %v3562 = vunpack.c.l.b16 %v3528
        %v3563 = vunpack.c.l.b16 %v3529
        %v3564 = vunpack.c.l.b16 %v3530
        %v3565 = vpack.c.b16 %v3550, %v3549
        %v3566 = vpack.c.b16 %v3552, %v3551
        %v3567 = vpack.c.b16 %v3554, %v3553
        %v3568 = vpack.c.b16 %v3556, %v3555
        %v3569 = vpack.c.b16 %v3558, %v3557
        %v3570 = vpack.c.b16 %v3560, %v3559
        %v3571 = vpack.c.b16 %v3562, %v3561
        %v3572 = vpack.c.b16 %v3564, %v3563
        %3581 = vmatpush.bf16.msra.mxu0 %v3572
        %3582 = vmatpush.bf16.msra.mxu0 %v3571
        %3583 = vmatpush.bf16.msra.mxu0 %v3570
        %3584 = vmatpush.bf16.msra.mxu0 %v3569
        %3585 = vmatpush.bf16.msra.mxu0 %v3568
        %3586 = vmatpush.bf16.msra.mxu0 %v3567
        %3587 = vmatpush.bf16.msra.mxu0 %v3566
        %3588 = vmatpush.bf16.msra.mxu0 %v3565
        %3589 = vmatmul.bf16.gmra.mxu0 %v3531
        %v3590 = vpop.f32.mrf.mxu0
        %v3591 = vadd.f32 %v3532, %v3590
        %v3592 = vpop.f32.mrf.mxu0
        %3593 = vdwg.mxu0
        %v3594 = vtanh.pop %v3591
        %v3595 = vld [vmem:[%s15] sm:$0xf]
        %v3596 = vld [vmem:[%s15 + $0x4] sm:$0xf]
        %v3597 = vld [vmem:[%s15 + $0x8] sm:$0xf]
        %v3598 = vld [vmem:[%s15 + $0xc] sm:$0xf]
        %v3599 = vld [vmem:[%s15 + $0x10] sm:$0xf]
        %v3600 = vld [vmem:[%s15 + $0x14] sm:$0xf]
        %v3601 = vld [vmem:[%s15 + $0x18] sm:$0xf]
        %v3602 = vld [vmem:[%s15 + $0x1c] sm:$0xf]
        %v3603 = vld [vmem:[%s15 + $0x20] sm:$0xf]
        %v3604 = vld [vmem:[%s15 + $0x24] sm:$0xf]
        %v3605 = vld [vmem:[%s15 + $0x28] sm:$0xf]
        %v3606 = vld [vmem:[%s15 + $0x2c] sm:$0xf]
        %v3607 = vld [vmem:[%s15 + $0x30] sm:$0xf]
        %v3608 = vld [vmem:[%s15 + $0x34] sm:$0xf]
        %v3609 = vld [vmem:[%s15 + $0x38] sm:$0xf]
        %v3610 = vld [vmem:[%s15 + $0x3c] sm:$0xf]
        %v3611 = vpack.c.bf16 %v3594, %v3594
        %v3612 = vld [vmem:[%s16] sm:$0x1]
        %v3629 = vunpack.c.l.b16 %v3595
        %v3630 = vunpack.c.l.b16 %v3596
        %v3631 = vunpack.c.l.b16 %v3597
        %v3632 = vunpack.c.l.b16 %v3598
        %v3633 = vunpack.c.l.b16 %v3599
        %v3634 = vunpack.c.l.b16 %v3600
        %v3635 = vunpack.c.l.b16 %v3601
        %v3636 = vunpack.c.l.b16 %v3602
        %v3637 = vunpack.c.l.b16 %v3603
        %v3638 = vunpack.c.l.b16 %v3604
        %v3639 = vunpack.c.l.b16 %v3605
        %v3640 = vunpack.c.l.b16 %v3606
        %v3641 = vunpack.c.l.b16 %v3607
        %v3642 = vunpack.c.l.b16 %v3608
        %v3643 = vunpack.c.l.b16 %v3609
        %v3644 = vunpack.c.l.b16 %v3610
        %v3645 = vpack.c.b16 %v3630, %v3629
        %v3646 = vpack.c.b16 %v3632, %v3631
        %v3647 = vpack.c.b16 %v3634, %v3633
        %v3648 = vpack.c.b16 %v3636, %v3635
        %v3649 = vpack.c.b16 %v3638, %v3637
        %v3650 = vpack.c.b16 %v3640, %v3639
        %v3651 = vpack.c.b16 %v3642, %v3641
        %v3652 = vpack.c.b16 %v3644, %v3643
        %3661 = vmatpush.bf16.msra.mxu0 %v3652
        %3662 = vmatpush.bf16.msra.mxu0 %v3651
        %3663 = vmatpush.bf16.msra.mxu0 %v3650
        %3664 = vmatpush.bf16.msra.mxu0 %v3649
        %3665 = vmatpush.bf16.msra.mxu0 %v3648
        %3666 = vmatpush.bf16.msra.mxu0 %v3647
        %3667 = vmatpush.bf16.msra.mxu0 %v3646
        %3668 = vmatpush.bf16.msra.mxu0 %v3645
        %3669 = vmatmul.bf16.gmra.mxu0 %v3611
        %v3670 = vpop.f32.mrf.mxu0
        %v3671 = vadd.f32 %v3612, %v3670
        %v3672 = vpop.f32.mrf.mxu0
        %3673 = vdwg.mxu0
        %vm3674 = vcmask 24576
        %3675 = vst.msk [vmem:[%s624] sm:$0x1] %vm3674, %v3671
        %v3676 = vtanh.pop %v3671
        %v3677 = vld [vmem:[%s17] sm:$0x1]
        %v3679 = vperm.slane %v3677, 0
        %3680 = vrot.lane.b32.xlu0 %v3679, 64
        %v3681 = vpop.permute.xlu0 %3680
        %v3683 = vmul.f32 %v3676, %v3681
        %3685 = vrot.lane.b32.xlu0 %v3683, 64
        %v3686 = vpop.permute.xlu0 %3685
        %vm3688 = vcmask 516096
        %v3689 = vsel %vm3688, %v3686, 0.0
        %3690 = vadd.xlane.f32.xlu0 %v3689
        %v3691 = vpop.xlane.xlu0 %3690
        %v3692 = vld [vmem:[#allocation2] sm:$0x1]
        %v3693 = vadd.f32 %v3691, %v3692
        %vm3694 = vcmask 0
        %3695 = vst.msk [vmem:[%s637] sm:$0x1] %vm3694, %v3693
        %s3696 = sand.u32 %s449, 1
        %s3697 = scalar_lea.sflag [#allocation4], %s3696
        %s3698 = sand.u32 %s449, 1
        %s3699 = scalar_lea.vmem [#allocation3], %s3698
        %p3700 = scmp.lt.s32.totalorder %s37, 1
        %s3701 = scalar_select %p3700, %s37, 1
        %s3702 = scalar_lea.vmem %s20, %s3701
        // Predicated region
        $region97: #{actor_critic_forward.1} parent=95 // pred_check
          %p3703 = pneg %p459
        $region98: #{actor_critic_forward.1} parent=95 // pred_check_branch
          %3705 = sbr.rel (%p3703) target = $region100
        $region99: #{actor_critic_forward.1} parent=95 // pred_region
          %3707 = vsyncadd %s3697, 0
          %s3708 = scalar_lea.hbm %s19, %s37
          %s3710 = sshll.u32 %s3699, 4
          %s3711 = int_to_ptr.vmem [resolvable:$true] %s3710
          %s3712 = sshll.u32 %s3708, 4
          %s3713 = int_to_ptr.hbm [resolvable:$true] %s3712
          %3715 = dma.vmem_to_hbm [thread:$0]  %s3711, 16, %s3713, %s3697
        $region100: #{actor_critic_forward.1} parent=95 // pred_fallthru
          _
        // Predicated region
        $region101: #{actor_critic_forward.1} parent=95 // pred_check
          %p3716 = pneg %p485
        $region102: #{actor_critic_forward.1} parent=95 // pred_check_branch
          %3718 = sbr.rel (%p3716) target = $region104
        $region103: #{actor_critic_forward.1} parent=95 // pred_region
          _
        $region104: #{actor_critic_forward.1} parent=95 // pred_fallthru
          _
      $region96: #{actor_critic_forward.1} parent=5 // pred_fallthru
        _
      %p3719 = scmp.le.s32.totalorder 2, %s32
      // Predicated region
      $region105: #{actor_critic_forward.1} parent=5 // pred_check
        %p3720 = pneg %p3719
      $region106: #{actor_critic_forward.1} parent=5 // pred_check_branch
        %3722 = sbr.rel (%p3720) target = $region108
      $region107: #{actor_critic_forward.1} parent=5 // pred_region
        %s3723 = ssub.s32 %s32, 2
        // Predicated region
        $region109: #{actor_critic_forward.1} parent=107 // pred_check
          %p3724 = pneg %p465
        $region110: #{actor_critic_forward.1} parent=107 // pred_check_branch
          %3726 = sbr.rel (%p3724) target = $region112
        $region111: #{actor_critic_forward.1} parent=107 // pred_region
          %s3727 = sand.u32 %s450, 1
          %s3728 = scalar_lea.sflag [#allocation4], %s3727
          %s3729 = sand.u32 %s450, 1
          %s3730 = scalar_lea.vmem [#allocation3], %s3729
          %3732 = dma.done %s3728, 16
        $region112: #{actor_critic_forward.1} parent=107 // pred_fallthru
          _
        // Predicated region
        $region113: #{actor_critic_forward.1} parent=107 // pred_check
          %p3733 = pneg %p491
        $region114: #{actor_critic_forward.1} parent=107 // pred_check_branch
          %3735 = sbr.rel (%p3733) target = $region116
        $region115: #{actor_critic_forward.1} parent=107 // pred_region
          %p3736 = scmp.lt.s32.totalorder %s38, 1
          %s3737 = scalar_select %p3736, %s38, 1
          %s3738 = scalar_lea.vmem %s20, %s3737
        $region116: #{actor_critic_forward.1} parent=107 // pred_fallthru
          _
      $region108: #{actor_critic_forward.1} parent=5 // pred_fallthru
        _
    $region6: #{actor_critic_forward.1} parent=1 // loop_footer
      %s36 = sadd.s32 1, %s32
    $region7: #{actor_critic_forward.1} parent=1 // loop_footer_branch
      %31 = sbr.rel target = $region3
    $region8: #{actor_critic_forward.1} parent=1 // loop_exit
      _
    %3739 = vsyncpa [#allocation4], 1
    %s3740 = scalar_lea.sflag [#allocation4], 1
    %3741 = vsyncpa %s3740, 1

</llo_original>
